<compile_context>
chip_gen: v5e
topology: v5e:2x2
jax: 0.10.0
libtpu: 0.0.40
codegen_flags: <defaults>
</compile_context>

<pallas_src>
import functools

import jax
import jax.numpy as jnp
from jax.experimental import pallas as pl
from jax.experimental.pallas import tpu as pltpu

LN_EPS = 1e-5  # torch.nn.LayerNorm default eps


# ------------------------------- fused kernel ------------------------------

def decoder_stack_kernel(
    # per-batch-group inputs (block index constant along the layer grid axis)
    x_ref, enc_ref, mask_ref,
    # encoder K/V projection weights (no bias), shared across the whole grid
    wk_enc_ref, wv_enc_ref,
    # per-layer stacked weights, streamed along the layer grid axis
    sa_wqkv_ref, sa_bqkv_ref, sa_wo_ref, sa_bo_ref, sa_g_ref, sa_b_ref,
    ca_wo_ref, ca_bo_ref, ca_g_ref, ca_b_ref,
    ff_w1_ref, ff_b1_ref, ff_w2_ref, ff_b2_ref, ff_g_ref, ff_b_ref,
    # output
    out_ref,
    # VMEM-resident state (persists across the layer axis)
    x_sc, k_sc, v_sc,
    *, num_heads, nb, compute_dtype, approx_recip, mask_has_batch):

    l = pl.program_id(1)
    cdt = compute_dtype
    f32 = jnp.float32
    _, t2, e = x_ref.shape
    t1 = enc_ref.shape[1]
    hd = e // num_heads

    def dot_c(a, b):  # MXU matmul in compute_dtype with f32 accumulation
        return jnp.dot(a.astype(cdt), b.astype(cdt), preferred_element_type=f32)

    def to_heads(a2d, t):
        # (nb*t, E) -> (nb*H, t, hd): one reshape + one transpose (no per-head
        # lane slice / stack), cast to the MXU compute dtype.
        return (a2d.reshape(nb, t, num_heads, hd)
                    .transpose(0, 2, 1, 3)
                    .reshape(nb * num_heads, t, hd)
                    .astype(cdt))

    def from_heads(a3d, t):
        # (nb*H, t, hd) f32 -> (nb*t, E): inverse single layout transform.
        return (a3d.reshape(nb, num_heads, t, hd)
                    .transpose(0, 2, 1, 3)
                    .reshape(nb * t, num_heads * hd))

    def softmax_last(s):
        s = s - jnp.max(s, axis=-1, keepdims=True)
        p = jnp.exp(s)
        denom = jnp.sum(p, axis=-1, keepdims=True)
        return p * pl.reciprocal(denom, approx=approx_recip)

    def mha(qh, kh, vh, mask_add):
        # batched over nb*H; no 1/sqrt(d) scaling (matches qkv_attention_value)
        s = jnp.einsum("btd,bsd->bts", qh, kh, preferred_element_type=f32)
        if mask_add is not None:
            s = s + mask_add
        p = softmax_last(s)
        return jnp.einsum("bts,bsd->btd", p.astype(cdt), vh,
                          preferred_element_type=f32)

    def layernorm(y, g, b):
        # two-pass variance: matches torch.nn.LayerNorm, no E[x^2]-mu^2 cancel
        mu = jnp.mean(y, axis=-1, keepdims=True)
        yc = y - mu
        var = jnp.mean(yc * yc, axis=-1, keepdims=True)
        return yc * jax.lax.rsqrt(var + LN_EPS) * g + b

    @pl.when(l == 0)
    def _init():
        # load decoder input (flattened for MXU-filling matmuls) and project the
        # encoder outputs once per batch group, cached head-split in cdt.
        x_sc[...] = x_ref[...].reshape(nb * t2, e)
        enc2d = enc_ref[...].reshape(nb * t1, e)
        k_sc[...] = to_heads(dot_c(enc2d, wk_enc_ref[...]), t1)
        v_sc[...] = to_heads(dot_c(enc2d, wv_enc_ref[...]), t1)

    x = x_sc[...]                       # (nb*T2, E) f32, resident across layers

    if mask_has_batch:                  # (nb, T2, T2) -> (nb*H, T2, T2)
        m = mask_ref[...]
        mask_add = jnp.broadcast_to(
            m[:, None], (nb, num_heads, t2, t2)).reshape(nb * num_heads, t2, t2)
    else:                               # shared (T2, T2), broadcast over nb*H
        mask_add = mask_ref[...][None, :, :]

    # ---- masked multi-head self-attention block ---------------------------
    qkv = dot_c(x, sa_wqkv_ref[0]) + sa_bqkv_ref[0]      # fused QKV projection
    q, k, v = qkv[:, :e], qkv[:, e:2 * e], qkv[:, 2 * e:]
    ctx = from_heads(mha(to_heads(q, t2), to_heads(k, t2), to_heads(v, t2),
                         mask_add), t2)
    z = jnp.maximum(dot_c(ctx, sa_wo_ref[0]) + sa_bo_ref[0], 0.0)
    x = layernorm(jnp.maximum(x + z, 0.0), sa_g_ref[0], sa_b_ref[0])

    # ---- encoder/decoder cross-attention (q = x, K/V cached in VMEM) ------
    ctx = from_heads(mha(to_heads(x, t2), k_sc[...], v_sc[...], None), t2)
    z = jnp.maximum(dot_c(ctx, ca_wo_ref[0]) + ca_bo_ref[0], 0.0)
    x = layernorm(jnp.maximum(x + z, 0.0), ca_g_ref[0], ca_b_ref[0])

    # ---- FFN ---------------------------------------------------------------
    h = jnp.maximum(dot_c(x, ff_w1_ref[0]) + ff_b1_ref[0], 0.0)
    z = dot_c(h, ff_w2_ref[0]) + ff_b2_ref[0]
    x = layernorm(jnp.maximum(x + z, 0.0), ff_g_ref[0], ff_b_ref[0])

    x_sc[...] = x                       # carry to the next layer (stays in VMEM)

    @pl.when(l == pl.num_programs(1) - 1)
    def _finalize():
        # single HBM writeback per batch group (output block index is constant
        # along the layer axis, so the block stays resident until then)
        out_ref[...] = x.reshape(nb, t2, e)


# ---------------------------- pallas_call glue ------------------------------

def _const_spec(shape):
    zeros = (0,) * len(shape)
    return pl.BlockSpec(tuple(shape), lambda n, l, _z=zeros: _z)


def _batch_spec(shape, nb):
    zeros = (0,) * len(shape)
    return pl.BlockSpec((nb,) + tuple(shape), lambda n, l, _z=zeros: (n,) + _z)


def _layer_spec(shape):
    zeros = (0,) * len(shape)
    return pl.BlockSpec((1,) + tuple(shape), lambda n, l, _z=zeros: (l,) + _z)


def _pick_batch_block(n, requested):
    """Largest divisor of n that is <= requested; keep >=2 parallel grid steps
    when possible so both v7x TensorCores get work."""
    requested = max(1, min(int(requested), n))
    divisors = [d for d in range(1, requested + 1) if n % d == 0]
    nb = divisors[-1]
    if n // nb < 2:
        ok = [d for d in divisors if n // d >= 2]
        if ok:
            nb = ok[-1]
    return nb


def _vmem_limit_bytes(default=48 * 1024 * 1024):
    """Generation-aware VMEM budget: ~80% of physical (102 MiB on 128 MiB
    parts, 51 MiB on v7x's 64 MiB)."""
    try:
        cap = int(pltpu.get_tpu_info().vmem_capacity_bytes)
    except Exception:
        return default
    return max(default, min(int(cap * 0.8), cap - 8 * 1024 * 1024))


def transformer_decoder_forward(params, x, encoder_outputs, attention_mask,
                                num_heads, compute_dtype=jnp.bfloat16,
                                batch_block=8):
    N, T2, E = x.shape
    T1 = encoder_outputs.shape[1]
    L = params["sa_wqkv"].shape[0]
    assert E % num_heads == 0, f"hidden {E} not divisible by heads {num_heads}"
    hd = E // num_heads
    nb = _pick_batch_block(N, batch_block)
    mask_has_batch = attention_mask.ndim == 3

    def cw(w):  # ship weights in the MXU compute dtype (halves weight DMA bytes)
        return w.astype(compute_dtype)

    inputs = [
        x, encoder_outputs, attention_mask,
        cw(params["wk_enc"]), cw(params["wv_enc"]),
        cw(params["sa_wqkv"]), params["sa_bqkv"], cw(params["sa_wo"]),
        params["sa_bo"], params["sa_ln_g"], params["sa_ln_b"],
        cw(params["ca_wo"]), params["ca_bo"], params["ca_ln_g"], params["ca_ln_b"],
        cw(params["ff_w1"]), params["ff_b1"], cw(params["ff_w2"]),
        params["ff_b2"], params["ff_ln_g"], params["ff_ln_b"],
    ]
    mask_spec = (_batch_spec((T2, T2), nb) if mask_has_batch
                 else _const_spec((T2, T2)))
    in_specs = [
        _batch_spec((T2, E), nb), _batch_spec((T1, E), nb), mask_spec,
        _const_spec((E, E)), _const_spec((E, E)),
        _layer_spec((E, 3 * E)), _layer_spec((1, 3 * E)), _layer_spec((E, E)),
        _layer_spec((1, E)), _layer_spec((1, E)), _layer_spec((1, E)),
        _layer_spec((E, E)), _layer_spec((1, E)), _layer_spec((1, E)),
        _layer_spec((1, E)),
        _layer_spec((E, 4 * E)), _layer_spec((1, 4 * E)), _layer_spec((4 * E, E)),
        _layer_spec((1, E)), _layer_spec((1, E)), _layer_spec((1, E)),
    ]

    kernel = functools.partial(
        decoder_stack_kernel, num_heads=num_heads, nb=nb,
        compute_dtype=compute_dtype,
        approx_recip=(compute_dtype != jnp.float32),
        mask_has_batch=mask_has_batch)

    return pl.pallas_call(
        kernel,
        out_shape=jax.ShapeDtypeStruct((N, T2, E), jnp.float32),
        grid=(N // nb, L),
        in_specs=in_specs,
        out_specs=_batch_spec((T2, E), nb),
        scratch_shapes=[
            pltpu.VMEM((nb * T2, E), jnp.float32),            # x across layers
            pltpu.VMEM((nb * num_heads, T1, hd), compute_dtype),  # encoder K
            pltpu.VMEM((nb * num_heads, T1, hd), compute_dtype),  # encoder V
        ],
        compiler_params=pltpu.CompilerParams(
            dimension_semantics=("parallel", "arbitrary"),
            vmem_limit_bytes=_vmem_limit_bytes()),
    )(*inputs)


# ------------------------------ params & ref --------------------------------

def init_params(key, hidden, decoder_layers):
    keys = iter(jax.random.split(key, 16))
    E, L = hidden, decoder_layers

    def w(shape, scale=0.08):
        return jax.random.normal(next(keys), shape, jnp.float32) * scale

    ones = jnp.ones((L, 1, E), jnp.float32)
    zeros = jnp.zeros((L, 1, E), jnp.float32)
    return {
        "wk_enc": w((E, E)), "wv_enc": w((E, E)),
        # self-attention (fused QKV projection) + output projection + LayerNorm
        "sa_wqkv": w((L, E, 3 * E)), "sa_bqkv": w((L, 1, 3 * E), 0.02),
        "sa_wo": w((L, E, E)), "sa_bo": w((L, 1, E), 0.02),
        "sa_ln_g": ones, "sa_ln_b": zeros,
        # cross-attention output projection + LayerNorm
        "ca_wo": w((L, E, E)), "ca_bo": w((L, 1, E), 0.02),
        "ca_ln_g": ones, "ca_ln_b": zeros,
        # FFN + LayerNorm
        "ff_w1": w((L, E, 4 * E)), "ff_b1": w((L, 1, 4 * E), 0.02),
        "ff_w2": w((L, 4 * E, E)), "ff_b2": w((L, 1, E), 0.02),
        "ff_ln_g": ones, "ff_ln_b": zeros,
    }


def ref_forward(params, x, enc, mask, num_heads, compute_dtype=jnp.float32):
    """Pure-JAX mirror of the PyTorch forward.  compute_dtype=float32 is exactly
    the PyTorch math; bfloat16 applies the same matmul casts as the kernel
    (f32 accumulation, f32 softmax / LayerNorm / residuals)."""
    cdt = compute_dtype
    f32 = jnp.float32
    E = x.shape[-1]

    def cdot(a, b):
        return jnp.dot(a.astype(cdt), b.astype(cdt), preferred_element_type=f32)

    def mha_ref(q, k, v, m):
        N, Tq, _ = q.shape
        hd = E // num_heads
        qs = q.reshape(N, Tq, num_heads, hd).transpose(0, 2, 1, 3).astype(cdt)
        ks = k.reshape(N, k.shape[1], num_heads, hd).transpose(0, 2, 1, 3).astype(cdt)
        vs = v.reshape(N, v.shape[1], num_heads, hd).transpose(0, 2, 1, 3).astype(cdt)
        s = jnp.einsum("nhtd,nhsd->nhts", qs, ks, preferred_element_type=f32)
        if m is not None:
            s = s + (m[:, None] if m.ndim == 3 else m[None, None])
        p = jax.nn.softmax(s, axis=-1)
        o = jnp.einsum("nhts,nhsd->nhtd", p.astype(cdt), vs,
                       preferred_element_type=f32)
        return o.transpose(0, 2, 1, 3).reshape(N, Tq, E)

    def ln(y, g, bb):
        mu = jnp.mean(y, -1, keepdims=True)
        var = jnp.mean((y - mu) ** 2, -1, keepdims=True)
        return (y - mu) / jnp.sqrt(var + LN_EPS) * g + bb

    k = cdot(enc, params["wk_enc"])
    v = cdot(enc, params["wv_enc"])
    L = params["sa_wqkv"].shape[0]
    for i in range(L):
        qkv = cdot(x, params["sa_wqkv"][i]) + params["sa_bqkv"][i]
        q_, k_, v_ = qkv[..., :E], qkv[..., E:2 * E], qkv[..., 2 * E:]
        z = mha_ref(q_, k_, v_, mask)
        z = jax.nn.relu(cdot(z, params["sa_wo"][i]) + params["sa_bo"][i])
        x = ln(jax.nn.relu(x + z), params["sa_ln_g"][i], params["sa_ln_b"][i])

        z = mha_ref(x, k, v, None)
        z = jax.nn.relu(cdot(z, params["ca_wo"][i]) + params["ca_bo"][i])
        x = ln(jax.nn.relu(x + z), params["ca_ln_g"][i], params["ca_ln_b"][i])

        h = jax.nn.relu(cdot(x, params["ff_w1"][i]) + params["ff_b1"][i])
        z = cdot(h, params["ff_w2"][i]) + params["ff_b2"][i]
        x = ln(jax.nn.relu(x + z), params["ff_ln_g"][i], params["ff_ln_b"][i])
    return x


# --------------------------------- main --------------------------------------

if __name__ == "__main__":
    # batch, enc seq, dec seq, hidden, heads, layers  (batch=4 so the batch-fold
    # of 2 still leaves 2 "parallel" grid steps for v7x's two TensorCores)
    N, T1, T2, E, NH, L = 4, 8, 8, 32, 4, 2

    key = jax.random.PRNGKey(0)
    kx, kenc, kp = jax.random.split(key, 3)
    x = jax.random.normal(kx, (N, T2, E), jnp.float32)
    encoder_outputs = jax.random.normal(kenc, (N, T1, E), jnp.float32)
    # causal-style additive mask (same construction as the reference)
    causal = jnp.triu(jnp.ones((T2, T2), jnp.float32), k=1) * -10000.0
    attention_mask = jnp.tile(causal[None], (N, 1, 1))   # module form [N,T2,T2]

    params = init_params(kp, E, L)

    # 1) f32 compute path with the per-batch mask: exact PyTorch math, strict
    #    parity check.
    out_f32 = transformer_decoder_forward(params, x, encoder_outputs,
                                          attention_mask, NH,
                                          compute_dtype=jnp.float32,
                                          batch_block=2)
    out_f32 = jax.block_until_ready(out_f32)
    assert out_f32.shape == (N, T2, E), out_f32.shape
    ref_f32 = ref_forward(params, x, encoder_outputs, attention_mask, NH,
                          compute_dtype=jnp.float32)
    err_f32 = float(jnp.max(jnp.abs(out_f32 - ref_f32)))
    assert err_f32 < 1e-3, f"f32 mismatch vs reference: {err_f32}"

    # 2) bf16 MXU path (performance config) with a shared (T2,T2) mask (no
    #    per-batch mask streaming); checked against a reference applying the
    #    identical casts (softmax/LN/residuals stay f32).
    out_bf16 = transformer_decoder_forward(params, x, encoder_outputs,
                                           causal, NH,
                                           compute_dtype=jnp.bfloat16,
                                           batch_block=2)
    out_bf16 = jax.block_until_ready(out_bf16)
    ref_bf16 = ref_forward(params, x, encoder_outputs, causal, NH,
                           compute_dtype=jnp.bfloat16)
    err_bf16 = float(jnp.max(jnp.abs(out_bf16 - ref_bf16)))
    assert err_bf16 < 2e-2, f"bf16 mismatch vs matched reference: {err_bf16}"

    print("KERNEL_OK")
</pallas_src>

<mosaic_0001>
module attributes {stable_mosaic.version = 11 : i64} {
  func.func @decoder_stack_kernel(%arg0: i32, %arg1: i32, %arg2: memref<2x8x32xf32, #tpu.memory_space<vmem>>, %arg3: memref<2x8x32xf32, #tpu.memory_space<vmem>>, %arg4: memref<2x8x8xf32, #tpu.memory_space<vmem>>, %arg5: memref<32x32xf32, #tpu.memory_space<vmem>>, %arg6: memref<32x32xf32, #tpu.memory_space<vmem>>, %arg7: memref<1x32x96xf32, #tpu.memory_space<vmem>>, %arg8: memref<1x1x96xf32, #tpu.memory_space<vmem>>, %arg9: memref<1x32x32xf32, #tpu.memory_space<vmem>>, %arg10: memref<1x1x32xf32, #tpu.memory_space<vmem>>, %arg11: memref<1x1x32xf32, #tpu.memory_space<vmem>>, %arg12: memref<1x1x32xf32, #tpu.memory_space<vmem>>, %arg13: memref<1x32x32xf32, #tpu.memory_space<vmem>>, %arg14: memref<1x1x32xf32, #tpu.memory_space<vmem>>, %arg15: memref<1x1x32xf32, #tpu.memory_space<vmem>>, %arg16: memref<1x1x32xf32, #tpu.memory_space<vmem>>, %arg17: memref<1x32x128xf32, #tpu.memory_space<vmem>>, %arg18: memref<1x1x128xf32, #tpu.memory_space<vmem>>, %arg19: memref<1x128x32xf32, #tpu.memory_space<vmem>>, %arg20: memref<1x1x32xf32, #tpu.memory_space<vmem>>, %arg21: memref<1x1x32xf32, #tpu.memory_space<vmem>>, %arg22: memref<1x1x32xf32, #tpu.memory_space<vmem>>, %arg23: memref<2x8x32xf32, #tpu.memory_space<vmem>>, %arg24: memref<16x32xf32, #tpu.memory_space<vmem>>, %arg25: memref<8x8x8xf32, #tpu.memory_space<vmem>>, %arg26: memref<8x8x8xf32, #tpu.memory_space<vmem>>) attributes {dimension_semantics = [#tpu.dimension_semantics<parallel>, #tpu.dimension_semantics<arbitrary>], iteration_bounds = array<i64: 2, 2>, scalar_prefetch = 0 : i64, scratch_operands = 3 : i64, tpu.core_type = #tpu.core_type<tc>, window_params = [{transform_indices = @transform_0, window_bounds = array<i64: 2, 8, 32>}, {transform_indices = @transform_1, window_bounds = array<i64: 2, 8, 32>}, {transform_indices = @transform_2, window_bounds = array<i64: 2, 8, 8>}, {pipeline_mode = #tpu.pipeline_mode<synchronous>, transform_indices = @transform_3, window_bounds = array<i64: 32, 32>}, {pipeline_mode = #tpu.pipeline_mode<synchronous>, transform_indices = @transform_4, window_bounds = array<i64: 32, 32>}, {transform_indices = @transform_5, window_bounds = array<i64: 1, 32, 96>}, {transform_indices = @transform_6, window_bounds = array<i64: 1, 1, 96>}, {transform_indices = @transform_7, window_bounds = array<i64: 1, 32, 32>}, {transform_indices = @transform_8, window_bounds = array<i64: 1, 1, 32>}, {transform_indices = @transform_9, window_bounds = array<i64: 1, 1, 32>}, {transform_indices = @transform_10, window_bounds = array<i64: 1, 1, 32>}, {transform_indices = @transform_11, window_bounds = array<i64: 1, 32, 32>}, {transform_indices = @transform_12, window_bounds = array<i64: 1, 1, 32>}, {transform_indices = @transform_13, window_bounds = array<i64: 1, 1, 32>}, {transform_indices = @transform_14, window_bounds = array<i64: 1, 1, 32>}, {transform_indices = @transform_15, window_bounds = array<i64: 1, 32, 128>}, {transform_indices = @transform_16, window_bounds = array<i64: 1, 1, 128>}, {transform_indices = @transform_17, window_bounds = array<i64: 1, 128, 32>}, {transform_indices = @transform_18, window_bounds = array<i64: 1, 1, 32>}, {transform_indices = @transform_19, window_bounds = array<i64: 1, 1, 32>}, {transform_indices = @transform_20, window_bounds = array<i64: 1, 1, 32>}, {transform_indices = @transform_21, window_bounds = array<i64: 2, 8, 32>}]} {
    %c0_i32 = arith.constant 0 : i32
    %0 = arith.cmpi eq, %arg1, %c0_i32 : i32
    %1 = arith.extui %0 : i1 to i32
    %c0_i32_0 = arith.constant 0 : i32
    %2 = arith.cmpi ne, %1, %c0_i32_0 : i32
    scf.if %2 {
      %c0_95 = arith.constant 0 : index
      %c0_96 = arith.constant 0 : index
      %c0_97 = arith.constant 0 : index
      %183 = vector.load %arg2[%c0_95, %c0_96, %c0_97] : memref<2x8x32xf32, #tpu.memory_space<vmem>>, vector<2x8x32xf32>
      %184 = vector.shape_cast %183 : vector<2x8x32xf32> to vector<16x32xf32>
      %c0_98 = arith.constant 0 : index
      %c0_99 = arith.constant 0 : index
      %185 = vector.load %arg24[%c0_98, %c0_99] : memref<16x32xf32, #tpu.memory_space<vmem>>, vector<16x32xf32>
      tpu.vector_store %arg24[%c0_98, %c0_99], %184 {strides = array<i32>} : memref<16x32xf32, #tpu.memory_space<vmem>>, vector<16x32xf32>,
      %c0_100 = arith.constant 0 : index
      %c0_101 = arith.constant 0 : index
      %c0_102 = arith.constant 0 : index
      %186 = vector.load %arg3[%c0_100, %c0_101, %c0_102] : memref<2x8x32xf32, #tpu.memory_space<vmem>>, vector<2x8x32xf32>
      %187 = vector.shape_cast %186 : vector<2x8x32xf32> to vector<16x32xf32>
      %c0_103 = arith.constant 0 : index
      %c0_104 = arith.constant 0 : index
      %188 = vector.load %arg5[%c0_103, %c0_104] : memref<32x32xf32, #tpu.memory_space<vmem>>, vector<32x32xf32>
      %cst_105 = arith.constant dense<0.000000e+00> : vector<16x32xf32>
      %189 = tpu.matmul %187, %188, %cst_105 {dimension_numbers = #tpu.dot_dimension_numbers<[1], [0], [0], [1], [0, 0, 1, 1], [], []>} : vector<16x32xf32>, vector<32x32xf32>, vector<16x32xf32> -> vector<16x32xf32>
      %190 = vector.shape_cast %189 : vector<16x32xf32> to vector<2x8x4x8xf32>
      %191 = tpu.transpose %190, [0, 2, 1, 3] : vector<2x8x4x8xf32> -> vector<2x4x8x8xf32>
      %192 = vector.shape_cast %191 : vector<2x4x8x8xf32> to vector<8x8x8xf32>
      %c0_106 = arith.constant 0 : index
      %c0_107 = arith.constant 0 : index
      %c0_108 = arith.constant 0 : index
      %193 = vector.load %arg25[%c0_106, %c0_107, %c0_108] : memref<8x8x8xf32, #tpu.memory_space<vmem>>, vector<8x8x8xf32>
      tpu.vector_store %arg25[%c0_106, %c0_107, %c0_108], %192 {strides = array<i32>} : memref<8x8x8xf32, #tpu.memory_space<vmem>>, vector<8x8x8xf32>,
      %c0_109 = arith.constant 0 : index
      %c0_110 = arith.constant 0 : index
      %194 = vector.load %arg6[%c0_109, %c0_110] : memref<32x32xf32, #tpu.memory_space<vmem>>, vector<32x32xf32>
      %cst_111 = arith.constant dense<0.000000e+00> : vector<16x32xf32>
      %195 = tpu.matmul %187, %194, %cst_111 {dimension_numbers = #tpu.dot_dimension_numbers<[1], [0], [0], [1], [0, 0, 1, 1], [], []>} : vector<16x32xf32>, vector<32x32xf32>, vector<16x32xf32> -> vector<16x32xf32>
      %196 = vector.shape_cast %195 : vector<16x32xf32> to vector<2x8x4x8xf32>
      %197 = tpu.transpose %196, [0, 2, 1, 3] : vector<2x8x4x8xf32> -> vector<2x4x8x8xf32>
      %198 = vector.shape_cast %197 : vector<2x4x8x8xf32> to vector<8x8x8xf32>
      %c0_112 = arith.constant 0 : index
      %c0_113 = arith.constant 0 : index
      %c0_114 = arith.constant 0 : index
      %199 = vector.load %arg26[%c0_112, %c0_113, %c0_114] : memref<8x8x8xf32, #tpu.memory_space<vmem>>, vector<8x8x8xf32>
      tpu.vector_store %arg26[%c0_112, %c0_113, %c0_114], %198 {strides = array<i32>} : memref<8x8x8xf32, #tpu.memory_space<vmem>>, vector<8x8x8xf32>,
    } else {
    }
    %c0 = arith.constant 0 : index
    %c0_1 = arith.constant 0 : index
    %3 = vector.load %arg24[%c0, %c0_1] : memref<16x32xf32, #tpu.memory_space<vmem>>, vector<16x32xf32>
    %c0_2 = arith.constant 0 : index
    %c0_3 = arith.constant 0 : index
    %c0_4 = arith.constant 0 : index
    %4 = vector.load %arg4[%c0_2, %c0_3, %c0_4] : memref<2x8x8xf32, #tpu.memory_space<vmem>>, vector<2x8x8xf32>
    %5 = vector.shape_cast %4 : vector<2x8x8xf32> to vector<2x1x8x8xf32>
    %6 = vector.shape_cast %5 : vector<2x1x8x8xf32> to vector<2x1x8x8xf32>
    %7 = vector.broadcast %6 : vector<2x1x8x8xf32> to vector<2x4x8x8xf32>
    %8 = vector.shape_cast %7 : vector<2x4x8x8xf32> to vector<8x8x8xf32>
    %c0_5 = arith.constant 0 : index
    %c0_6 = arith.constant 0 : index
    %c0_7 = arith.constant 0 : index
    %9 = vector.load %arg7[%c0_5, %c0_6, %c0_7] : memref<1x32x96xf32, #tpu.memory_space<vmem>>, vector<1x32x96xf32>
    %10 = vector.shape_cast %9 : vector<1x32x96xf32> to vector<32x96xf32>
    %cst = arith.constant dense<0.000000e+00> : vector<16x96xf32>
    %11 = tpu.matmul %3, %10, %cst {dimension_numbers = #tpu.dot_dimension_numbers<[1], [0], [0], [1], [0, 0, 1, 1], [], []>} : vector<16x32xf32>, vector<32x96xf32>, vector<16x96xf32> -> vector<16x96xf32>
    %c0_8 = arith.constant 0 : index
    %c0_9 = arith.constant 0 : index
    %c0_10 = arith.constant 0 : index
    %12 = vector.load %arg8[%c0_8, %c0_9, %c0_10] : memref<1x1x96xf32, #tpu.memory_space<vmem>>, vector<1x1x96xf32>
    %13 = vector.shape_cast %12 : vector<1x1x96xf32> to vector<1x96xf32>
    %14 = vector.broadcast %13 : vector<1x96xf32> to vector<16x96xf32>
    %15 = arith.addf %11, %14 : vector<16x96xf32>
    %16 = vector.extract_strided_slice %15 {offsets = [0, 0], sizes = [16, 32], strides = [1, 1]} : vector<16x96xf32> to vector<16x32xf32>
    %17 = vector.extract_strided_slice %15 {offsets = [0, 32], sizes = [16, 32], strides = [1, 1]} : vector<16x96xf32> to vector<16x32xf32>
    %18 = vector.extract_strided_slice %15 {offsets = [0, 64], sizes = [16, 32], strides = [1, 1]} : vector<16x96xf32> to vector<16x32xf32>
    %19 = vector.shape_cast %16 : vector<16x32xf32> to vector<2x8x4x8xf32>
    %20 = tpu.transpose %19, [0, 2, 1, 3] : vector<2x8x4x8xf32> -> vector<2x4x8x8xf32>
    %21 = vector.shape_cast %20 : vector<2x4x8x8xf32> to vector<8x8x8xf32>
    %22 = vector.shape_cast %17 : vector<16x32xf32> to vector<2x8x4x8xf32>
    %23 = tpu.transpose %22, [0, 2, 1, 3] : vector<2x8x4x8xf32> -> vector<2x4x8x8xf32>
    %24 = vector.shape_cast %23 : vector<2x4x8x8xf32> to vector<8x8x8xf32>
    %25 = vector.shape_cast %18 : vector<16x32xf32> to vector<2x8x4x8xf32>
    %26 = tpu.transpose %25, [0, 2, 1, 3] : vector<2x8x4x8xf32> -> vector<2x4x8x8xf32>
    %27 = vector.shape_cast %26 : vector<2x4x8x8xf32> to vector<8x8x8xf32>
    "tpu.trace_start"() <{level = 10 : i32, message = "btd,bsd->bts"}> : () -> ()
    %cst_11 = arith.constant dense<0.000000e+00> : vector<8x8x8xf32>
    %28 = tpu.matmul %21, %24, %cst_11 {dimension_numbers = #tpu.dot_dimension_numbers<[2], [2], [1], [1], [0, 0, 0, 1, 1, 1], [0], [0]>} : vector<8x8x8xf32>, vector<8x8x8xf32>, vector<8x8x8xf32> -> vector<8x8x8xf32>
    "tpu.trace_stop"() : () -> ()
    %29 = arith.addf %28, %8 : vector<8x8x8xf32>
    %cst_12 = arith.constant dense<0xFF800000> : vector<8x8xf32>
    %30 = vector.multi_reduction <maximumf>, %29, %cst_12 [2] : vector<8x8x8xf32> to vector<8x8xf32>
    %31 = vector.shape_cast %30 : vector<8x8xf32> to vector<8x8x1xf32>
    %32 = vector.broadcast %31 : vector<8x8x1xf32> to vector<8x8x8xf32>
    %33 = arith.subf %29, %32 : vector<8x8x8xf32>
    %34 = math.exp %33 : vector<8x8x8xf32>
    %cst_13 = arith.constant dense<0.000000e+00> : vector<8x8xf32>
    %35 = vector.multi_reduction <add>, %34, %cst_13 [2] : vector<8x8x8xf32> to vector<8x8xf32>
    %36 = vector.shape_cast %35 : vector<8x8xf32> to vector<8x8x1xf32>
    %37 = tpu.reciprocal %36 : vector<8x8x1xf32> -> vector<8x8x1xf32>
    %38 = vector.broadcast %37 : vector<8x8x1xf32> to vector<8x8x8xf32>
    %39 = arith.mulf %34, %38 : vector<8x8x8xf32>
    "tpu.trace_start"() <{level = 10 : i32, message = "bts,bsd->btd"}> : () -> ()
    %cst_14 = arith.constant dense<0.000000e+00> : vector<8x8x8xf32>
    %40 = tpu.matmul %39, %27, %cst_14 {dimension_numbers = #tpu.dot_dimension_numbers<[2], [1], [1], [2], [0, 0, 0, 1, 1, 2], [0], [0]>} : vector<8x8x8xf32>, vector<8x8x8xf32>, vector<8x8x8xf32> -> vector<8x8x8xf32>
    "tpu.trace_stop"() : () -> ()
    %41 = vector.shape_cast %40 : vector<8x8x8xf32> to vector<2x4x8x8xf32>
    %42 = tpu.transpose %41, [0, 2, 1, 3] : vector<2x4x8x8xf32> -> vector<2x8x4x8xf32>
    %43 = vector.shape_cast %42 : vector<2x8x4x8xf32> to vector<16x32xf32>
    %c0_15 = arith.constant 0 : index
    %c0_16 = arith.constant 0 : index
    %c0_17 = arith.constant 0 : index
    %44 = vector.load %arg9[%c0_15, %c0_16, %c0_17] : memref<1x32x32xf32, #tpu.memory_space<vmem>>, vector<1x32x32xf32>
    %45 = vector.shape_cast %44 : vector<1x32x32xf32> to vector<32x32xf32>
    %cst_18 = arith.constant dense<0.000000e+00> : vector<16x32xf32>
    %46 = tpu.matmul %43, %45, %cst_18 {dimension_numbers = #tpu.dot_dimension_numbers<[1], [0], [0], [1], [0, 0, 1, 1], [], []>} : vector<16x32xf32>, vector<32x32xf32>, vector<16x32xf32> -> vector<16x32xf32>
    %c0_19 = arith.constant 0 : index
    %c0_20 = arith.constant 0 : index
    %c0_21 = arith.constant 0 : index
    %47 = vector.load %arg10[%c0_19, %c0_20, %c0_21] : memref<1x1x32xf32, #tpu.memory_space<vmem>>, vector<1x1x32xf32>
    %48 = vector.shape_cast %47 : vector<1x1x32xf32> to vector<1x32xf32>
    %49 = vector.broadcast %48 : vector<1x32xf32> to vector<16x32xf32>
    %50 = arith.addf %46, %49 : vector<16x32xf32>
    %cst_22 = arith.constant 0.000000e+00 : f32
    %51 = vector.broadcast %cst_22 : f32 to vector<16x32xf32>
    %52 = arith.maximumf %50, %51 : vector<16x32xf32>
    %53 = arith.addf %3, %52 : vector<16x32xf32>
    %cst_23 = arith.constant 0.000000e+00 : f32
    %54 = vector.broadcast %cst_23 : f32 to vector<16x32xf32>
    %55 = arith.maximumf %53, %54 : vector<16x32xf32>
    %c0_24 = arith.constant 0 : index
    %c0_25 = arith.constant 0 : index
    %c0_26 = arith.constant 0 : index
    %56 = vector.load %arg11[%c0_24, %c0_25, %c0_26] : memref<1x1x32xf32, #tpu.memory_space<vmem>>, vector<1x1x32xf32>
    %57 = vector.shape_cast %56 : vector<1x1x32xf32> to vector<1x32xf32>
    %c0_27 = arith.constant 0 : index
    %c0_28 = arith.constant 0 : index
    %c0_29 = arith.constant 0 : index
    %58 = vector.load %arg12[%c0_27, %c0_28, %c0_29] : memref<1x1x32xf32, #tpu.memory_space<vmem>>, vector<1x1x32xf32>
    %59 = vector.shape_cast %58 : vector<1x1x32xf32> to vector<1x32xf32>
    %cst_30 = arith.constant dense<0.000000e+00> : vector<16xf32>
    %60 = vector.multi_reduction <add>, %55, %cst_30 [1] : vector<16x32xf32> to vector<16xf32>
    %61 = vector.shape_cast %60 : vector<16xf32> to vector<16x1xf32>
    %cst_31 = arith.constant 3.200000e+01 : f32
    %62 = vector.broadcast %cst_31 : f32 to vector<16x1xf32>
    %63 = arith.divf %61, %62 : vector<16x1xf32>
    %64 = vector.broadcast %63 : vector<16x1xf32> to vector<16x32xf32>
    %65 = arith.subf %55, %64 : vector<16x32xf32>
    %66 = arith.mulf %65, %65 : vector<16x32xf32>
    %cst_32 = arith.constant dense<0.000000e+00> : vector<16xf32>
    %67 = vector.multi_reduction <add>, %66, %cst_32 [1] : vector<16x32xf32> to vector<16xf32>
    %68 = vector.shape_cast %67 : vector<16xf32> to vector<16x1xf32>
    %cst_33 = arith.constant 3.200000e+01 : f32
    %69 = vector.broadcast %cst_33 : f32 to vector<16x1xf32>
    %70 = arith.divf %68, %69 : vector<16x1xf32>
    %cst_34 = arith.constant 9.99999974E-6 : f32
    %71 = vector.broadcast %cst_34 : f32 to vector<16x1xf32>
    %72 = arith.addf %70, %71 : vector<16x1xf32>
    %73 = math.rsqrt %72 : vector<16x1xf32>
    %74 = vector.broadcast %73 : vector<16x1xf32> to vector<16x32xf32>
    %75 = arith.mulf %65, %74 : vector<16x32xf32>
    %76 = vector.broadcast %57 : vector<1x32xf32> to vector<16x32xf32>
    %77 = arith.mulf %75, %76 : vector<16x32xf32>
    %78 = vector.broadcast %59 : vector<1x32xf32> to vector<16x32xf32>
    %79 = arith.addf %77, %78 : vector<16x32xf32>
    %80 = vector.shape_cast %79 : vector<16x32xf32> to vector<2x8x4x8xf32>
    %81 = tpu.transpose %80, [0, 2, 1, 3] : vector<2x8x4x8xf32> -> vector<2x4x8x8xf32>
    %82 = vector.shape_cast %81 : vector<2x4x8x8xf32> to vector<8x8x8xf32>
    %c0_35 = arith.constant 0 : index
    %c0_36 = arith.constant 0 : index
    %c0_37 = arith.constant 0 : index
    %83 = vector.load %arg25[%c0_35, %c0_36, %c0_37] : memref<8x8x8xf32, #tpu.memory_space<vmem>>, vector<8x8x8xf32>
    %c0_38 = arith.constant 0 : index
    %c0_39 = arith.constant 0 : index
    %c0_40 = arith.constant 0 : index
    %84 = vector.load %arg26[%c0_38, %c0_39, %c0_40] : memref<8x8x8xf32, #tpu.memory_space<vmem>>, vector<8x8x8xf32>
    "tpu.trace_start"() <{level = 10 : i32, message = "btd,bsd->bts"}> : () -> ()
    %cst_41 = arith.constant dense<0.000000e+00> : vector<8x8x8xf32>
    %85 = tpu.matmul %82, %83, %cst_41 {dimension_numbers = #tpu.dot_dimension_numbers<[2], [2], [1], [1], [0, 0, 0, 1, 1, 1], [0], [0]>} : vector<8x8x8xf32>, vector<8x8x8xf32>, vector<8x8x8xf32> -> vector<8x8x8xf32>
    "tpu.trace_stop"() : () -> ()
    %cst_42 = arith.constant dense<0xFF800000> : vector<8x8xf32>
    %86 = vector.multi_reduction <maximumf>, %85, %cst_42 [2] : vector<8x8x8xf32> to vector<8x8xf32>
    %87 = vector.shape_cast %86 : vector<8x8xf32> to vector<8x8x1xf32>
    %88 = vector.broadcast %87 : vector<8x8x1xf32> to vector<8x8x8xf32>
    %89 = arith.subf %85, %88 : vector<8x8x8xf32>
    %90 = math.exp %89 : vector<8x8x8xf32>
    %cst_43 = arith.constant dense<0.000000e+00> : vector<8x8xf32>
    %91 = vector.multi_reduction <add>, %90, %cst_43 [2] : vector<8x8x8xf32> to vector<8x8xf32>
    %92 = vector.shape_cast %91 : vector<8x8xf32> to vector<8x8x1xf32>
    %93 = tpu.reciprocal %92 : vector<8x8x1xf32> -> vector<8x8x1xf32>
    %94 = vector.broadcast %93 : vector<8x8x1xf32> to vector<8x8x8xf32>
    %95 = arith.mulf %90, %94 : vector<8x8x8xf32>
    "tpu.trace_start"() <{level = 10 : i32, message = "bts,bsd->btd"}> : () -> ()
    %cst_44 = arith.constant dense<0.000000e+00> : vector<8x8x8xf32>
    %96 = tpu.matmul %95, %84, %cst_44 {dimension_numbers = #tpu.dot_dimension_numbers<[2], [1], [1], [2], [0, 0, 0, 1, 1, 2], [0], [0]>} : vector<8x8x8xf32>, vector<8x8x8xf32>, vector<8x8x8xf32> -> vector<8x8x8xf32>
    "tpu.trace_stop"() : () -> ()
    %97 = vector.shape_cast %96 : vector<8x8x8xf32> to vector<2x4x8x8xf32>
    %98 = tpu.transpose %97, [0, 2, 1, 3] : vector<2x4x8x8xf32> -> vector<2x8x4x8xf32>
    %99 = vector.shape_cast %98 : vector<2x8x4x8xf32> to vector<16x32xf32>
    %c0_45 = arith.constant 0 : index
    %c0_46 = arith.constant 0 : index
    %c0_47 = arith.constant 0 : index
    %100 = vector.load %arg13[%c0_45, %c0_46, %c0_47] : memref<1x32x32xf32, #tpu.memory_space<vmem>>, vector<1x32x32xf32>
    %101 = vector.shape_cast %100 : vector<1x32x32xf32> to vector<32x32xf32>
    %cst_48 = arith.constant dense<0.000000e+00> : vector<16x32xf32>
    %102 = tpu.matmul %99, %101, %cst_48 {dimension_numbers = #tpu.dot_dimension_numbers<[1], [0], [0], [1], [0, 0, 1, 1], [], []>} : vector<16x32xf32>, vector<32x32xf32>, vector<16x32xf32> -> vector<16x32xf32>
    %c0_49 = arith.constant 0 : index
    %c0_50 = arith.constant 0 : index
    %c0_51 = arith.constant 0 : index
    %103 = vector.load %arg14[%c0_49, %c0_50, %c0_51] : memref<1x1x32xf32, #tpu.memory_space<vmem>>, vector<1x1x32xf32>
    %104 = vector.shape_cast %103 : vector<1x1x32xf32> to vector<1x32xf32>
    %105 = vector.broadcast %104 : vector<1x32xf32> to vector<16x32xf32>
    %106 = arith.addf %102, %105 : vector<16x32xf32>
    %cst_52 = arith.constant 0.000000e+00 : f32
    %107 = vector.broadcast %cst_52 : f32 to vector<16x32xf32>
    %108 = arith.maximumf %106, %107 : vector<16x32xf32>
    %109 = arith.addf %79, %108 : vector<16x32xf32>
    %cst_53 = arith.constant 0.000000e+00 : f32
    %110 = vector.broadcast %cst_53 : f32 to vector<16x32xf32>
    %111 = arith.maximumf %109, %110 : vector<16x32xf32>
    %c0_54 = arith.constant 0 : index
    %c0_55 = arith.constant 0 : index
    %c0_56 = arith.constant 0 : index
    %112 = vector.load %arg15[%c0_54, %c0_55, %c0_56] : memref<1x1x32xf32, #tpu.memory_space<vmem>>, vector<1x1x32xf32>
    %113 = vector.shape_cast %112 : vector<1x1x32xf32> to vector<1x32xf32>
    %c0_57 = arith.constant 0 : index
    %c0_58 = arith.constant 0 : index
    %c0_59 = arith.constant 0 : index
    %114 = vector.load %arg16[%c0_57, %c0_58, %c0_59] : memref<1x1x32xf32, #tpu.memory_space<vmem>>, vector<1x1x32xf32>
    %115 = vector.shape_cast %114 : vector<1x1x32xf32> to vector<1x32xf32>
    %cst_60 = arith.constant dense<0.000000e+00> : vector<16xf32>
    %116 = vector.multi_reduction <add>, %111, %cst_60 [1] : vector<16x32xf32> to vector<16xf32>
    %117 = vector.shape_cast %116 : vector<16xf32> to vector<16x1xf32>
    %cst_61 = arith.constant 3.200000e+01 : f32
    %118 = vector.broadcast %cst_61 : f32 to vector<16x1xf32>
    %119 = arith.divf %117, %118 : vector<16x1xf32>
    %120 = vector.broadcast %119 : vector<16x1xf32> to vector<16x32xf32>
    %121 = arith.subf %111, %120 : vector<16x32xf32>
    %122 = arith.mulf %121, %121 : vector<16x32xf32>
    %cst_62 = arith.constant dense<0.000000e+00> : vector<16xf32>
    %123 = vector.multi_reduction <add>, %122, %cst_62 [1] : vector<16x32xf32> to vector<16xf32>
    %124 = vector.shape_cast %123 : vector<16xf32> to vector<16x1xf32>
    %cst_63 = arith.constant 3.200000e+01 : f32
    %125 = vector.broadcast %cst_63 : f32 to vector<16x1xf32>
    %126 = arith.divf %124, %125 : vector<16x1xf32>
    %cst_64 = arith.constant 9.99999974E-6 : f32
    %127 = vector.broadcast %cst_64 : f32 to vector<16x1xf32>
    %128 = arith.addf %126, %127 : vector<16x1xf32>
    %129 = math.rsqrt %128 : vector<16x1xf32>
    %130 = vector.broadcast %129 : vector<16x1xf32> to vector<16x32xf32>
    %131 = arith.mulf %121, %130 : vector<16x32xf32>
    %132 = vector.broadcast %113 : vector<1x32xf32> to vector<16x32xf32>
    %133 = arith.mulf %131, %132 : vector<16x32xf32>
    %134 = vector.broadcast %115 : vector<1x32xf32> to vector<16x32xf32>
    %135 = arith.addf %133, %134 : vector<16x32xf32>
    %c0_65 = arith.constant 0 : index
    %c0_66 = arith.constant 0 : index
    %c0_67 = arith.constant 0 : index
    %136 = vector.load %arg17[%c0_65, %c0_66, %c0_67] : memref<1x32x128xf32, #tpu.memory_space<vmem>>, vector<1x32x128xf32>
    %137 = vector.shape_cast %136 : vector<1x32x128xf32> to vector<32x128xf32>
    %cst_68 = arith.constant dense<0.000000e+00> : vector<16x128xf32>
    %138 = tpu.matmul %135, %137, %cst_68 {dimension_numbers = #tpu.dot_dimension_numbers<[1], [0], [0], [1], [0, 0, 1, 1], [], []>} : vector<16x32xf32>, vector<32x128xf32>, vector<16x128xf32> -> vector<16x128xf32>
    %c0_69 = arith.constant 0 : index
    %c0_70 = arith.constant 0 : index
    %c0_71 = arith.constant 0 : index
    %139 = vector.load %arg18[%c0_69, %c0_70, %c0_71] : memref<1x1x128xf32, #tpu.memory_space<vmem>>, vector<1x1x128xf32>
    %140 = vector.shape_cast %139 : vector<1x1x128xf32> to vector<1x128xf32>
    %141 = vector.broadcast %140 : vector<1x128xf32> to vector<16x128xf32>
    %142 = arith.addf %138, %141 : vector<16x128xf32>
    %cst_72 = arith.constant 0.000000e+00 : f32
    %143 = vector.broadcast %cst_72 : f32 to vector<16x128xf32>
    %144 = arith.maximumf %142, %143 : vector<16x128xf32>
    %c0_73 = arith.constant 0 : index
    %c0_74 = arith.constant 0 : index
    %c0_75 = arith.constant 0 : index
    %145 = vector.load %arg19[%c0_73, %c0_74, %c0_75] : memref<1x128x32xf32, #tpu.memory_space<vmem>>, vector<1x128x32xf32>
    %146 = vector.shape_cast %145 : vector<1x128x32xf32> to vector<128x32xf32>
    %cst_76 = arith.constant dense<0.000000e+00> : vector<16x32xf32>
    %147 = tpu.matmul %144, %146, %cst_76 {dimension_numbers = #tpu.dot_dimension_numbers<[1], [0], [0], [1], [0, 0, 1, 1], [], []>} : vector<16x128xf32>, vector<128x32xf32>, vector<16x32xf32> -> vector<16x32xf32>
    %c0_77 = arith.constant 0 : index
    %c0_78 = arith.constant 0 : index
    %c0_79 = arith.constant 0 : index
    %148 = vector.load %arg20[%c0_77, %c0_78, %c0_79] : memref<1x1x32xf32, #tpu.memory_space<vmem>>, vector<1x1x32xf32>
    %149 = vector.shape_cast %148 : vector<1x1x32xf32> to vector<1x32xf32>
    %150 = vector.broadcast %149 : vector<1x32xf32> to vector<16x32xf32>
    %151 = arith.addf %147, %150 : vector<16x32xf32>
    %152 = arith.addf %135, %151 : vector<16x32xf32>
    %cst_80 = arith.constant 0.000000e+00 : f32
    %153 = vector.broadcast %cst_80 : f32 to vector<16x32xf32>
    %154 = arith.maximumf %152, %153 : vector<16x32xf32>
    %c0_81 = arith.constant 0 : index
    %c0_82 = arith.constant 0 : index
    %c0_83 = arith.constant 0 : index
    %155 = vector.load %arg21[%c0_81, %c0_82, %c0_83] : memref<1x1x32xf32, #tpu.memory_space<vmem>>, vector<1x1x32xf32>
    %156 = vector.shape_cast %155 : vector<1x1x32xf32> to vector<1x32xf32>
    %c0_84 = arith.constant 0 : index
    %c0_85 = arith.constant 0 : index
    %c0_86 = arith.constant 0 : index
    %157 = vector.load %arg22[%c0_84, %c0_85, %c0_86] : memref<1x1x32xf32, #tpu.memory_space<vmem>>, vector<1x1x32xf32>
    %158 = vector.shape_cast %157 : vector<1x1x32xf32> to vector<1x32xf32>
    %cst_87 = arith.constant dense<0.000000e+00> : vector<16xf32>
    %159 = vector.multi_reduction <add>, %154, %cst_87 [1] : vector<16x32xf32> to vector<16xf32>
    %160 = vector.shape_cast %159 : vector<16xf32> to vector<16x1xf32>
    %cst_88 = arith.constant 3.200000e+01 : f32
    %161 = vector.broadcast %cst_88 : f32 to vector<16x1xf32>
    %162 = arith.divf %160, %161 : vector<16x1xf32>
    %163 = vector.broadcast %162 : vector<16x1xf32> to vector<16x32xf32>
    %164 = arith.subf %154, %163 : vector<16x32xf32>
    %165 = arith.mulf %164, %164 : vector<16x32xf32>
    %cst_89 = arith.constant dense<0.000000e+00> : vector<16xf32>
    %166 = vector.multi_reduction <add>, %165, %cst_89 [1] : vector<16x32xf32> to vector<16xf32>
    %167 = vector.shape_cast %166 : vector<16xf32> to vector<16x1xf32>
    %cst_90 = arith.constant 3.200000e+01 : f32
    %168 = vector.broadcast %cst_90 : f32 to vector<16x1xf32>
    %169 = arith.divf %167, %168 : vector<16x1xf32>
    %cst_91 = arith.constant 9.99999974E-6 : f32
    %170 = vector.broadcast %cst_91 : f32 to vector<16x1xf32>
    %171 = arith.addf %169, %170 : vector<16x1xf32>
    %172 = math.rsqrt %171 : vector<16x1xf32>
    %173 = vector.broadcast %172 : vector<16x1xf32> to vector<16x32xf32>
    %174 = arith.mulf %164, %173 : vector<16x32xf32>
    %175 = vector.broadcast %156 : vector<1x32xf32> to vector<16x32xf32>
    %176 = arith.mulf %174, %175 : vector<16x32xf32>
    %177 = vector.broadcast %158 : vector<1x32xf32> to vector<16x32xf32>
    %178 = arith.addf %176, %177 : vector<16x32xf32>
    %c0_92 = arith.constant 0 : index
    %c0_93 = arith.constant 0 : index
    %179 = vector.load %arg24[%c0_92, %c0_93] : memref<16x32xf32, #tpu.memory_space<vmem>>, vector<16x32xf32>
    tpu.vector_store %arg24[%c0_92, %c0_93], %178 {strides = array<i32>} : memref<16x32xf32, #tpu.memory_space<vmem>>, vector<16x32xf32>,
    %c1_i32 = arith.constant 1 : i32
    %180 = arith.cmpi eq, %arg1, %c1_i32 : i32
    %181 = arith.extui %180 : i1 to i32
    %c0_i32_94 = arith.constant 0 : i32
    %182 = arith.cmpi ne, %181, %c0_i32_94 : i32
    scf.if %182 {
      %183 = vector.shape_cast %178 : vector<16x32xf32> to vector<2x8x32xf32>
      %c0_95 = arith.constant 0 : index
      %c0_96 = arith.constant 0 : index
      %c0_97 = arith.constant 0 : index
      %184 = vector.load %arg23[%c0_95, %c0_96, %c0_97] : memref<2x8x32xf32, #tpu.memory_space<vmem>>, vector<2x8x32xf32>
      tpu.vector_store %arg23[%c0_95, %c0_96, %c0_97], %183 {strides = array<i32>} : memref<2x8x32xf32, #tpu.memory_space<vmem>>, vector<2x8x32xf32>,
    } else {
    }
    return
  }
  func.func @transform_0(%arg0: i32, %arg1: i32) -> (i32, i32, i32) {
    %c0_i32 = arith.constant 0 : i32
    %c0_i32_0 = arith.constant 0 : i32
    %c0_i32_1 = arith.constant 0 : i32
    return %arg0, %c0_i32, %c0_i32_0 : i32, i32, i32
  }
  func.func @transform_1(%arg0: i32, %arg1: i32) -> (i32, i32, i32) {
    %c0_i32 = arith.constant 0 : i32
    %c0_i32_0 = arith.constant 0 : i32
    %c0_i32_1 = arith.constant 0 : i32
    return %arg0, %c0_i32, %c0_i32_0 : i32, i32, i32
  }
  func.func @transform_2(%arg0: i32, %arg1: i32) -> (i32, i32, i32) {
    %c0_i32 = arith.constant 0 : i32
    %c0_i32_0 = arith.constant 0 : i32
    %c0_i32_1 = arith.constant 0 : i32
    return %arg0, %c0_i32, %c0_i32_0 : i32, i32, i32
  }
  func.func @transform_3(%arg0: i32, %arg1: i32) -> (i32, i32) {
    %c0_i32 = arith.constant 0 : i32
    %c0_i32_0 = arith.constant 0 : i32
    %c0_i32_1 = arith.constant 0 : i32
    return %c0_i32, %c0_i32_0 : i32, i32
  }
  func.func @transform_4(%arg0: i32, %arg1: i32) -> (i32, i32) {
    %c0_i32 = arith.constant 0 : i32
    %c0_i32_0 = arith.constant 0 : i32
    %c0_i32_1 = arith.constant 0 : i32
    return %c0_i32, %c0_i32_0 : i32, i32
  }
  func.func @transform_5(%arg0: i32, %arg1: i32) -> (i32, i32, i32) {
    %c0_i32 = arith.constant 0 : i32
    %c0_i32_0 = arith.constant 0 : i32
    %c0_i32_1 = arith.constant 0 : i32
    return %arg1, %c0_i32, %c0_i32_0 : i32, i32, i32
  }
  func.func @transform_6(%arg0: i32, %arg1: i32) -> (i32, i32, i32) {
    %c0_i32 = arith.constant 0 : i32
    %c0_i32_0 = arith.constant 0 : i32
    %c0_i32_1 = arith.constant 0 : i32
    return %arg1, %c0_i32, %c0_i32_0 : i32, i32, i32
  }
  func.func @transform_7(%arg0: i32, %arg1: i32) -> (i32, i32, i32) {
    %c0_i32 = arith.constant 0 : i32
    %c0_i32_0 = arith.constant 0 : i32
    %c0_i32_1 = arith.constant 0 : i32
    return %arg1, %c0_i32, %c0_i32_0 : i32, i32, i32
  }
  func.func @transform_8(%arg0: i32, %arg1: i32) -> (i32, i32, i32) {
    %c0_i32 = arith.constant 0 : i32
    %c0_i32_0 = arith.constant 0 : i32
    %c0_i32_1 = arith.constant 0 : i32
    return %arg1, %c0_i32, %c0_i32_0 : i32, i32, i32
  }
  func.func @transform_9(%arg0: i32, %arg1: i32) -> (i32, i32, i32) {
    %c0_i32 = arith.constant 0 : i32
    %c0_i32_0 = arith.constant 0 : i32
    %c0_i32_1 = arith.constant 0 : i32
    return %arg1, %c0_i32, %c0_i32_0 : i32, i32, i32
  }
  func.func @transform_10(%arg0: i32, %arg1: i32) -> (i32, i32, i32) {
    %c0_i32 = arith.constant 0 : i32
    %c0_i32_0 = arith.constant 0 : i32
    %c0_i32_1 = arith.constant 0 : i32
    return %arg1, %c0_i32, %c0_i32_0 : i32, i32, i32
  }
  func.func @transform_11(%arg0: i32, %arg1: i32) -> (i32, i32, i32) {
    %c0_i32 = arith.constant 0 : i32
    %c0_i32_0 = arith.constant 0 : i32
    %c0_i32_1 = arith.constant 0 : i32
    return %arg1, %c0_i32, %c0_i32_0 : i32, i32, i32
  }
  func.func @transform_12(%arg0: i32, %arg1: i32) -> (i32, i32, i32) {
    %c0_i32 = arith.constant 0 : i32
    %c0_i32_0 = arith.constant 0 : i32
    %c0_i32_1 = arith.constant 0 : i32
    return %arg1, %c0_i32, %c0_i32_0 : i32, i32, i32
  }
  func.func @transform_13(%arg0: i32, %arg1: i32) -> (i32, i32, i32) {
    %c0_i32 = arith.constant 0 : i32
    %c0_i32_0 = arith.constant 0 : i32
    %c0_i32_1 = arith.constant 0 : i32
    return %arg1, %c0_i32, %c0_i32_0 : i32, i32, i32
  }
  func.func @transform_14(%arg0: i32, %arg1: i32) -> (i32, i32, i32) {
    %c0_i32 = arith.constant 0 : i32
    %c0_i32_0 = arith.constant 0 : i32
    %c0_i32_1 = arith.constant 0 : i32
    return %arg1, %c0_i32, %c0_i32_0 : i32, i32, i32
  }
  func.func @transform_15(%arg0: i32, %arg1: i32) -> (i32, i32, i32) {
    %c0_i32 = arith.constant 0 : i32
    %c0_i32_0 = arith.constant 0 : i32
    %c0_i32_1 = arith.constant 0 : i32
    return %arg1, %c0_i32, %c0_i32_0 : i32, i32, i32
  }
  func.func @transform_16(%arg0: i32, %arg1: i32) -> (i32, i32, i32) {
    %c0_i32 = arith.constant 0 : i32
    %c0_i32_0 = arith.constant 0 : i32
    %c0_i32_1 = arith.constant 0 : i32
    return %arg1, %c0_i32, %c0_i32_0 : i32, i32, i32
  }
  func.func @transform_17(%arg0: i32, %arg1: i32) -> (i32, i32, i32) {
    %c0_i32 = arith.constant 0 : i32
    %c0_i32_0 = arith.constant 0 : i32
    %c0_i32_1 = arith.constant 0 : i32
    return %arg1, %c0_i32, %c0_i32_0 : i32, i32, i32
  }
  func.func @transform_18(%arg0: i32, %arg1: i32) -> (i32, i32, i32) {
    %c0_i32 = arith.constant 0 : i32
    %c0_i32_0 = arith.constant 0 : i32
    %c0_i32_1 = arith.constant 0 : i32
    return %arg1, %c0_i32, %c0_i32_0 : i32, i32, i32
  }
  func.func @transform_19(%arg0: i32, %arg1: i32) -> (i32, i32, i32) {
    %c0_i32 = arith.constant 0 : i32
    %c0_i32_0 = arith.constant 0 : i32
    %c0_i32_1 = arith.constant 0 : i32
    return %arg1, %c0_i32, %c0_i32_0 : i32, i32, i32
  }
  func.func @transform_20(%arg0: i32, %arg1: i32) -> (i32, i32, i32) {
    %c0_i32 = arith.constant 0 : i32
    %c0_i32_0 = arith.constant 0 : i32
    %c0_i32_1 = arith.constant 0 : i32
    return %arg1, %c0_i32, %c0_i32_0 : i32, i32, i32
  }
  func.func @transform_21(%arg0: i32, %arg1: i32) -> (i32, i32, i32) {
    %c0_i32 = arith.constant 0 : i32
    %c0_i32_0 = arith.constant 0 : i32
    %c0_i32_1 = arith.constant 0 : i32
    return %arg0, %c0_i32, %c0_i32_0 : i32, i32, i32
  }
}

</mosaic_0001>

<llo_original>
// kernel: tpu_custom_call.1
$region0: #{tpu_custom_call.1}
  #allocation0 [shape = 'u32[]', space=smem, size = 0x4, offset = 0x4, fixed_abs, tag = 'smem constant byte address 0x4 - core index']
  #allocation1 [shape = 'u32[72,128]{1,0:T(1,128)}', space=vmem, size = 0x9000, scoped, tag = 'internal scratch']
  #allocation2 [shape = 'f32[16,32]{1,0:T(8,128)}', space=vmem, size = 0x2000, scoped, tag = 'scratch operand']
  #allocation3 [shape = 'f32[8,8,8]{2,1,0:T(8,128)}', space=vmem, size = 0x8000, scoped, tag = 'scratch operand']
  #allocation4 [shape = 'f32[8,8,8]{2,1,0:T(8,128)}', space=vmem, size = 0x8000, scoped, tag = 'scratch operand']
  %s0 = inlined_call_operand.vmem [shape: f32[4,8,32], index: 0, kind: input, shape index: {}]
  %s1 = inlined_call_operand.vmem [shape: f32[4,8,32], index: 1, kind: input, shape index: {}]
  %s2 = inlined_call_operand.hbm [shape: f32[4,8,8], index: 2, kind: input, shape index: {}]
  %s3 = inlined_call_operand.hbm [shape: f32[32,32], index: 3, kind: input, shape index: {}]
  %s4 = inlined_call_operand.hbm [shape: f32[32,32], index: 4, kind: input, shape index: {}]
  %s5 = inlined_call_operand.vmem [shape: f32[2,32,96], index: 5, kind: input, shape index: {}]
  %s6 = inlined_call_operand.vmem [shape: f32[2,1,96], index: 6, kind: input, shape index: {}]
  %s7 = inlined_call_operand.vmem [shape: f32[2,32,32], index: 7, kind: input, shape index: {}]
  %s8 = inlined_call_operand.vmem [shape: f32[2,1,32], index: 8, kind: input, shape index: {}]
  %s9 = inlined_call_operand.vmem [shape: f32[2,1,32], index: 9, kind: input, shape index: {}]
  %s10 = inlined_call_operand.hbm [shape: f32[2,1,32], index: 10, kind: input, shape index: {}]
  %s11 = inlined_call_operand.vmem [shape: f32[2,32,32], index: 11, kind: input, shape index: {}]
  %s12 = inlined_call_operand.vmem [shape: f32[2,1,32], index: 12, kind: input, shape index: {}]
  %s13 = inlined_call_operand.vmem [shape: f32[2,1,32], index: 13, kind: input, shape index: {}]
  %s14 = inlined_call_operand.hbm [shape: f32[2,1,32], index: 14, kind: input, shape index: {}]
  %s15 = inlined_call_operand.vmem [shape: f32[2,32,128], index: 15, kind: input, shape index: {}]
  %s16 = inlined_call_operand.vmem [shape: f32[2,1,128], index: 16, kind: input, shape index: {}]
  %s17 = inlined_call_operand.vmem [shape: f32[2,128,32], index: 17, kind: input, shape index: {}]
  %s18 = inlined_call_operand.vmem [shape: f32[2,1,32], index: 18, kind: input, shape index: {}]
  %s19 = inlined_call_operand.hbm [shape: f32[2,1,32], index: 19, kind: input, shape index: {}]
  %s20 = inlined_call_operand.vmem [shape: f32[2,1,32], index: 20, kind: input, shape index: {}]
  %s21 = inlined_call_operand.hbm [shape: f32[4,8,32], index: 21, kind: output, shape index: {}]
  %s22 = sld [smem:[#allocation0]]
  $region149: #{tpu_custom_call.1} parent=0
    _
  %s24 = ssub.s32 1, %s22
  %s25 = scalar_select 0, %s24, %s22
  $region1: #{tpu_custom_call.1} parent=0
    #allocation5 [shape = 'u8[16384]{0}', space=vmem, size = 0x4000, scoped, tag = 'input window, operand 2']
    #allocation6 [shape = 's32[2]{0}', space=sflag, size = 0x8, scoped, tag = 'scoped memory for tpu_custom_call.1']
    #allocation7 [shape = 's32[2]{0}', space=sflag, size = 0x8, scoped, tag = 'scoped memory for tpu_custom_call.1']
    #allocation8 [shape = 'u8[16384]{0}', space=vmem, size = 0x4000, scoped, tag = 'input window, operand 3, single buffered']
    #allocation9 [shape = 's32[1]{0}', space=sflag, size = 0x4, scoped, tag = 'scoped memory for tpu_custom_call.1']
    #allocation10 [shape = 'u8[16384]{0}', space=vmem, size = 0x4000, scoped, tag = 'input window, operand 4, single buffered']
    #allocation11 [shape = 'u8[1024]{0}', space=vmem, size = 0x400, scoped, tag = 'input window, operand 10']
    #allocation12 [shape = 's32[2]{0}', space=sflag, size = 0x8, scoped, tag = 'scoped memory for tpu_custom_call.1']
    #allocation13 [shape = 'u8[1024]{0}', space=vmem, size = 0x400, scoped, tag = 'input window, operand 14']
    #allocation14 [shape = 'u8[1024]{0}', space=vmem, size = 0x400, scoped, tag = 'input window, operand 19']
    #allocation15 [shape = 's32[2]{0}', space=sflag, size = 0x8, scoped, tag = 'scoped memory for tpu_custom_call.1']
    #allocation16 [shape = 'u8[16384]{0}', space=vmem, size = 0x4000, scoped, tag = 'output window, operand 0']
    %26 = vsyncpa [#allocation6], 0
    %s27 = scalar_lea.sflag [#allocation6], 1
    %28 = vsyncpa %s27, 0
    %29 = vsyncpa [#allocation9], 0
    %30 = vsyncpa [#allocation12], 0
    %s31 = scalar_lea.sflag [#allocation12], 1
    %32 = vsyncpa %s31, 0
    %33 = vsyncpa [#allocation15], 0
    %s34 = scalar_lea.sflag [#allocation15], 1
    %35 = vsyncpa %s34, 0
    %36 = vsyncpa [#allocation7], 0
    %s37 = scalar_lea.sflag [#allocation7], 1
    %38 = vsyncpa %s37, 0
    loop: start=0, step=1, limit=6
    $region2: #{tpu_custom_call.1} parent=1 // loop_pre_header
      _
    $region3: #{tpu_custom_call.1} parent=1 // loop_header
      %s40 = sphi 0, %s44
      %p41 = scmp.ge.s32.totalorder %s40, 6
      %s47 = sphi 0, %s59
      %s48 = sphi 0, %s55
      %s49 = sphi 0, %s47
      %s50 = sphi 0, %s48
      %s51 = sphi 0, %s49
      %s52 = sphi 0, %s50
      %s62 = sphi 0, %s64
      %s65 = sphi 0, %s62
      %s66 = sphi 0, %s65
      %s82 = sphi 0, %s66
      %s88 = sphi 0, %s90
      %s91 = sphi 0, %s88
      %s92 = sphi 0, %s91
      %s108 = sphi 0, %s92
      %s114 = sphi 0, %s116
      %s117 = sphi 0, %s114
      %s118 = sphi 0, %s117
      %s134 = sphi 0, %s118
      %s138 = sphi 0, %s138
      %s140 = sphi 0, %s138
      %s141 = sphi 0, %s140
      %s155 = sphi 0, %s141
      %s159 = sphi 0, %s159
      %s161 = sphi 0, %s159
      %s162 = sphi 0, %s161
      %s176 = sphi 0, %s162
      %s182 = sphi 0, %s184
      %s185 = sphi 0, %s182
      %s186 = sphi 0, %s185
      %s202 = sphi 0, %s186
      %s208 = sphi 0, %s210
      %s211 = sphi 0, %s208
      %s212 = sphi 0, %s211
      %s228 = sphi 0, %s212
      %s234 = sphi 0, %s236
      %s237 = sphi 0, %s234
      %s238 = sphi 0, %s237
      %s254 = sphi 0, %s238
      %s260 = sphi 0, %s262
      %s263 = sphi 0, %s260
      %s264 = sphi 0, %s263
      %s280 = sphi 0, %s264
      %s286 = sphi 0, %s288
      %s289 = sphi 0, %s286
      %s290 = sphi 0, %s289
      %s306 = sphi 0, %s290
      %s312 = sphi 0, %s314
      %s315 = sphi 0, %s312
      %s316 = sphi 0, %s315
      %s332 = sphi 0, %s316
      %s338 = sphi 0, %s340
      %s341 = sphi 0, %s338
      %s342 = sphi 0, %s341
      %s358 = sphi 0, %s342
      %s364 = sphi 0, %s366
      %s367 = sphi 0, %s364
      %s368 = sphi 0, %s367
      %s384 = sphi 0, %s368
      %s390 = sphi 0, %s392
      %s393 = sphi 0, %s390
      %s394 = sphi 0, %s393
      %s410 = sphi 0, %s394
      %s416 = sphi 0, %s418
      %s419 = sphi 0, %s416
      %s420 = sphi 0, %s419
      %s436 = sphi 0, %s420
      %s442 = sphi 0, %s444
      %s445 = sphi 0, %s442
      %s446 = sphi 0, %s445
      %s462 = sphi 0, %s446
      %s468 = sphi 0, %s470
      %s471 = sphi 0, %s468
      %s472 = sphi 0, %s471
      %s488 = sphi 0, %s472
      %s494 = sphi 0, %s496
      %s497 = sphi 0, %s494
      %s498 = sphi 0, %s497
      %s514 = sphi 0, %s498
      %s520 = sphi 0, %s522
      %s523 = sphi 0, %s520
      %s524 = sphi 0, %s523
      %s540 = sphi 0, %s524
      %s546 = sphi 0, %s548
      %s549 = sphi 0, %s546
      %s550 = sphi 0, %s549
      %s566 = sphi 0, %s550
      %s572 = sphi 0, %s574
      %s575 = sphi 0, %s572
      %s576 = sphi 0, %s575
      %s592 = sphi 0, %s576
      %s598 = sphi 0, %s600
      %s601 = sphi 0, %s598
      %s602 = sphi 0, %s601
      %s618 = sphi 0, %s602
    $region4: #{tpu_custom_call.1} parent=1 // loop_header_branch
      %43 = sbr.rel (%p41) target = $region8
    $region5: #{tpu_custom_call.1} parent=1 // loop_body
      %s45 = ssub.s32 %s40, 1
      %s46 = ssub.s32 %s40, 2
      %s53 = sadd.s32 1, %s48
      %p54 = scmp.ge.s32.totalorder %s53, 2
      %s55 = scalar_select %p54, 0, %s53
      %s56 = sadd.s32 1, %s47
      %s57 = scalar_select %p54, %s56, %s47
      %p58 = scmp.ge.s32.totalorder %s57, 2
      %s59 = scalar_select %p58, 0, %s57
      %s60 = ssub.s32 %s47, %s59
      %p61 = scmp.eq.s32.totalorder %s60, 0
      %s63 = sadd.s32 %s62, 1
      %s64 = scalar_select %p61, %s62, %s63
      %p67 = pneg %p61
      %p68 = scmp.eq.s32.totalorder %s40, 3
      %p69 = por %p67, %p68
      %p70 = scmp.ne.s32.totalorder %s62, %s65
      %p71 = scmp.eq.s32.totalorder %s40, 0
      %p72 = por %p70, %p71
      %p73 = scmp.ne.s32.totalorder %s62, %s65
      %p74 = scmp.eq.s32.totalorder %s45, 3
      %p75 = por %p73, %p74
      %p76 = scmp.ne.s32.totalorder %s65, %s66
      %p77 = scmp.eq.s32.totalorder %s45, 0
      %p78 = por %p76, %p77
      %p79 = scmp.ne.s32.totalorder %s65, %s66
      %p80 = scmp.eq.s32.totalorder %s46, 3
      %p81 = por %p79, %p80
      %p83 = scmp.ne.s32.totalorder %s66, %s82
      %p84 = scmp.eq.s32.totalorder %s46, 0
      %p85 = por %p83, %p84
      %s86 = ssub.s32 %s47, %s59
      %p87 = scmp.eq.s32.totalorder %s86, 0
      %s89 = sadd.s32 %s88, 1
      %s90 = scalar_select %p87, %s88, %s89
      %p93 = pneg %p87
      %p94 = scmp.eq.s32.totalorder %s40, 3
      %p95 = por %p93, %p94
      %p96 = scmp.ne.s32.totalorder %s88, %s91
      %p97 = scmp.eq.s32.totalorder %s40, 0
      %p98 = por %p96, %p97
      %p99 = scmp.ne.s32.totalorder %s88, %s91
      %p100 = scmp.eq.s32.totalorder %s45, 3
      %p101 = por %p99, %p100
      %p102 = scmp.ne.s32.totalorder %s91, %s92
      %p103 = scmp.eq.s32.totalorder %s45, 0
      %p104 = por %p102, %p103
      %p105 = scmp.ne.s32.totalorder %s91, %s92
      %p106 = scmp.eq.s32.totalorder %s46, 3
      %p107 = por %p105, %p106
      %p109 = scmp.ne.s32.totalorder %s92, %s108
      %p110 = scmp.eq.s32.totalorder %s46, 0
      %p111 = por %p109, %p110
      %s112 = ssub.s32 %s47, %s59
      %p113 = scmp.eq.s32.totalorder %s112, 0
      %s115 = sadd.s32 %s114, 1
      %s116 = scalar_select %p113, %s114, %s115
      %p119 = pneg %p113
      %p120 = scmp.eq.s32.totalorder %s40, 3
      %p121 = por %p119, %p120
      %p122 = scmp.ne.s32.totalorder %s114, %s117
      %p123 = scmp.eq.s32.totalorder %s40, 0
      %p124 = por %p122, %p123
      %p125 = scmp.ne.s32.totalorder %s114, %s117
      %p126 = scmp.eq.s32.totalorder %s45, 3
      %p127 = por %p125, %p126
      %p128 = scmp.ne.s32.totalorder %s117, %s118
      %p129 = scmp.eq.s32.totalorder %s45, 0
      %p130 = por %p128, %p129
      %p131 = scmp.ne.s32.totalorder %s117, %s118
      %p132 = scmp.eq.s32.totalorder %s46, 3
      %p133 = por %p131, %p132
      %p135 = scmp.ne.s32.totalorder %s118, %s134
      %p136 = scmp.eq.s32.totalorder %s46, 0
      %p137 = por %p135, %p136
      %s139 = sadd.s32 %s138, 1
      %p142 = scmp.eq.s32.totalorder %s40, 3
      %p143 = scmp.ne.s32.totalorder %s138, %s140
      %p144 = scmp.eq.s32.totalorder %s40, 0
      %p145 = por %p143, %p144
      %p146 = scmp.ne.s32.totalorder %s138, %s140
      %p147 = scmp.eq.s32.totalorder %s45, 3
      %p148 = por %p146, %p147
      %p149 = scmp.ne.s32.totalorder %s140, %s141
      %p150 = scmp.eq.s32.totalorder %s45, 0
      %p151 = por %p149, %p150
      %p152 = scmp.ne.s32.totalorder %s140, %s141
      %p153 = scmp.eq.s32.totalorder %s46, 3
      %p154 = por %p152, %p153
      %p156 = scmp.ne.s32.totalorder %s141, %s155
      %p157 = scmp.eq.s32.totalorder %s46, 0
      %p158 = por %p156, %p157
      %s160 = sadd.s32 %s159, 1
      %p163 = scmp.eq.s32.totalorder %s40, 3
      %p164 = scmp.ne.s32.totalorder %s159, %s161
      %p165 = scmp.eq.s32.totalorder %s40, 0
      %p166 = por %p164, %p165
      %p167 = scmp.ne.s32.totalorder %s159, %s161
      %p168 = scmp.eq.s32.totalorder %s45, 3
      %p169 = por %p167, %p168
      %p170 = scmp.ne.s32.totalorder %s161, %s162
      %p171 = scmp.eq.s32.totalorder %s45, 0
      %p172 = por %p170, %p171
      %p173 = scmp.ne.s32.totalorder %s161, %s162
      %p174 = scmp.eq.s32.totalorder %s46, 3
      %p175 = por %p173, %p174
      %p177 = scmp.ne.s32.totalorder %s162, %s176
      %p178 = scmp.eq.s32.totalorder %s46, 0
      %p179 = por %p177, %p178
      %s180 = ssub.s32 %s48, %s55
      %p181 = scmp.eq.s32.totalorder %s180, 0
      %s183 = sadd.s32 %s182, 1
      %s184 = scalar_select %p181, %s182, %s183
      %p187 = pneg %p181
      %p188 = scmp.eq.s32.totalorder %s40, 3
      %p189 = por %p187, %p188
      %p190 = scmp.ne.s32.totalorder %s182, %s185
      %p191 = scmp.eq.s32.totalorder %s40, 0
      %p192 = por %p190, %p191
      %p193 = scmp.ne.s32.totalorder %s182, %s185
      %p194 = scmp.eq.s32.totalorder %s45, 3
      %p195 = por %p193, %p194
      %p196 = scmp.ne.s32.totalorder %s185, %s186
      %p197 = scmp.eq.s32.totalorder %s45, 0
      %p198 = por %p196, %p197
      %p199 = scmp.ne.s32.totalorder %s185, %s186
      %p200 = scmp.eq.s32.totalorder %s46, 3
      %p201 = por %p199, %p200
      %p203 = scmp.ne.s32.totalorder %s186, %s202
      %p204 = scmp.eq.s32.totalorder %s46, 0
      %p205 = por %p203, %p204
      %s206 = ssub.s32 %s48, %s55
      %p207 = scmp.eq.s32.totalorder %s206, 0
      %s209 = sadd.s32 %s208, 1
      %s210 = scalar_select %p207, %s208, %s209
      %p213 = pneg %p207
      %p214 = scmp.eq.s32.totalorder %s40, 3
      %p215 = por %p213, %p214
      %p216 = scmp.ne.s32.totalorder %s208, %s211
      %p217 = scmp.eq.s32.totalorder %s40, 0
      %p218 = por %p216, %p217
      %p219 = scmp.ne.s32.totalorder %s208, %s211
      %p220 = scmp.eq.s32.totalorder %s45, 3
      %p221 = por %p219, %p220
      %p222 = scmp.ne.s32.totalorder %s211, %s212
      %p223 = scmp.eq.s32.totalorder %s45, 0
      %p224 = por %p222, %p223
      %p225 = scmp.ne.s32.totalorder %s211, %s212
      %p226 = scmp.eq.s32.totalorder %s46, 3
      %p227 = por %p225, %p226
      %p229 = scmp.ne.s32.totalorder %s212, %s228
      %p230 = scmp.eq.s32.totalorder %s46, 0
      %p231 = por %p229, %p230
      %s232 = ssub.s32 %s48, %s55
      %p233 = scmp.eq.s32.totalorder %s232, 0
      %s235 = sadd.s32 %s234, 1
      %s236 = scalar_select %p233, %s234, %s235
      %p239 = pneg %p233
      %p240 = scmp.eq.s32.totalorder %s40, 3
      %p241 = por %p239, %p240
      %p242 = scmp.ne.s32.totalorder %s234, %s237
      %p243 = scmp.eq.s32.totalorder %s40, 0
      %p244 = por %p242, %p243
      %p245 = scmp.ne.s32.totalorder %s234, %s237
      %p246 = scmp.eq.s32.totalorder %s45, 3
      %p247 = por %p245, %p246
      %p248 = scmp.ne.s32.totalorder %s237, %s238
      %p249 = scmp.eq.s32.totalorder %s45, 0
      %p250 = por %p248, %p249
      %p251 = scmp.ne.s32.totalorder %s237, %s238
      %p252 = scmp.eq.s32.totalorder %s46, 3
      %p253 = por %p251, %p252
      %p255 = scmp.ne.s32.totalorder %s238, %s254
      %p256 = scmp.eq.s32.totalorder %s46, 0
      %p257 = por %p255, %p256
      %s258 = ssub.s32 %s48, %s55
      %p259 = scmp.eq.s32.totalorder %s258, 0
      %s261 = sadd.s32 %s260, 1
      %s262 = scalar_select %p259, %s260, %s261
      %p265 = pneg %p259
      %p266 = scmp.eq.s32.totalorder %s40, 3
      %p267 = por %p265, %p266
      %p268 = scmp.ne.s32.totalorder %s260, %s263
      %p269 = scmp.eq.s32.totalorder %s40, 0
      %p270 = por %p268, %p269
      %p271 = scmp.ne.s32.totalorder %s260, %s263
      %p272 = scmp.eq.s32.totalorder %s45, 3
      %p273 = por %p271, %p272
      %p274 = scmp.ne.s32.totalorder %s263, %s264
      %p275 = scmp.eq.s32.totalorder %s45, 0
      %p276 = por %p274, %p275
      %p277 = scmp.ne.s32.totalorder %s263, %s264
      %p278 = scmp.eq.s32.totalorder %s46, 3
      %p279 = por %p277, %p278
      %p281 = scmp.ne.s32.totalorder %s264, %s280
      %p282 = scmp.eq.s32.totalorder %s46, 0
      %p283 = por %p281, %p282
      %s284 = ssub.s32 %s48, %s55
      %p285 = scmp.eq.s32.totalorder %s284, 0
      %s287 = sadd.s32 %s286, 1
      %s288 = scalar_select %p285, %s286, %s287
      %p291 = pneg %p285
      %p292 = scmp.eq.s32.totalorder %s40, 3
      %p293 = por %p291, %p292
      %p294 = scmp.ne.s32.totalorder %s286, %s289
      %p295 = scmp.eq.s32.totalorder %s40, 0
      %p296 = por %p294, %p295
      %p297 = scmp.ne.s32.totalorder %s286, %s289
      %p298 = scmp.eq.s32.totalorder %s45, 3
      %p299 = por %p297, %p298
      %p300 = scmp.ne.s32.totalorder %s289, %s290
      %p301 = scmp.eq.s32.totalorder %s45, 0
      %p302 = por %p300, %p301
      %p303 = scmp.ne.s32.totalorder %s289, %s290
      %p304 = scmp.eq.s32.totalorder %s46, 3
      %p305 = por %p303, %p304
      %p307 = scmp.ne.s32.totalorder %s290, %s306
      %p308 = scmp.eq.s32.totalorder %s46, 0
      %p309 = por %p307, %p308
      %s310 = ssub.s32 %s48, %s55
      %p311 = scmp.eq.s32.totalorder %s310, 0
      %s313 = sadd.s32 %s312, 1
      %s314 = scalar_select %p311, %s312, %s313
      %p317 = pneg %p311
      %p318 = scmp.eq.s32.totalorder %s40, 3
      %p319 = por %p317, %p318
      %p320 = scmp.ne.s32.totalorder %s312, %s315
      %p321 = scmp.eq.s32.totalorder %s40, 0
      %p322 = por %p320, %p321
      %p323 = scmp.ne.s32.totalorder %s312, %s315
      %p324 = scmp.eq.s32.totalorder %s45, 3
      %p325 = por %p323, %p324
      %p326 = scmp.ne.s32.totalorder %s315, %s316
      %p327 = scmp.eq.s32.totalorder %s45, 0
      %p328 = por %p326, %p327
      %p329 = scmp.ne.s32.totalorder %s315, %s316
      %p330 = scmp.eq.s32.totalorder %s46, 3
      %p331 = por %p329, %p330
      %p333 = scmp.ne.s32.totalorder %s316, %s332
      %p334 = scmp.eq.s32.totalorder %s46, 0
      %p335 = por %p333, %p334
      %s336 = ssub.s32 %s48, %s55
      %p337 = scmp.eq.s32.totalorder %s336, 0
      %s339 = sadd.s32 %s338, 1
      %s340 = scalar_select %p337, %s338, %s339
      %p343 = pneg %p337
      %p344 = scmp.eq.s32.totalorder %s40, 3
      %p345 = por %p343, %p344
      %p346 = scmp.ne.s32.totalorder %s338, %s341
      %p347 = scmp.eq.s32.totalorder %s40, 0
      %p348 = por %p346, %p347
      %p349 = scmp.ne.s32.totalorder %s338, %s341
      %p350 = scmp.eq.s32.totalorder %s45, 3
      %p351 = por %p349, %p350
      %p352 = scmp.ne.s32.totalorder %s341, %s342
      %p353 = scmp.eq.s32.totalorder %s45, 0
      %p354 = por %p352, %p353
      %p355 = scmp.ne.s32.totalorder %s341, %s342
      %p356 = scmp.eq.s32.totalorder %s46, 3
      %p357 = por %p355, %p356
      %p359 = scmp.ne.s32.totalorder %s342, %s358
      %p360 = scmp.eq.s32.totalorder %s46, 0
      %p361 = por %p359, %p360
      %s362 = ssub.s32 %s48, %s55
      %p363 = scmp.eq.s32.totalorder %s362, 0
      %s365 = sadd.s32 %s364, 1
      %s366 = scalar_select %p363, %s364, %s365
      %p369 = pneg %p363
      %p370 = scmp.eq.s32.totalorder %s40, 3
      %p371 = por %p369, %p370
      %p372 = scmp.ne.s32.totalorder %s364, %s367
      %p373 = scmp.eq.s32.totalorder %s40, 0
      %p374 = por %p372, %p373
      %p375 = scmp.ne.s32.totalorder %s364, %s367
      %p376 = scmp.eq.s32.totalorder %s45, 3
      %p377 = por %p375, %p376
      %p378 = scmp.ne.s32.totalorder %s367, %s368
      %p379 = scmp.eq.s32.totalorder %s45, 0
      %p380 = por %p378, %p379
      %p381 = scmp.ne.s32.totalorder %s367, %s368
      %p382 = scmp.eq.s32.totalorder %s46, 3
      %p383 = por %p381, %p382
      %p385 = scmp.ne.s32.totalorder %s368, %s384
      %p386 = scmp.eq.s32.totalorder %s46, 0
      %p387 = por %p385, %p386
      %s388 = ssub.s32 %s48, %s55
      %p389 = scmp.eq.s32.totalorder %s388, 0
      %s391 = sadd.s32 %s390, 1
      %s392 = scalar_select %p389, %s390, %s391
      %p395 = pneg %p389
      %p396 = scmp.eq.s32.totalorder %s40, 3
      %p397 = por %p395, %p396
      %p398 = scmp.ne.s32.totalorder %s390, %s393
      %p399 = scmp.eq.s32.totalorder %s40, 0
      %p400 = por %p398, %p399
      %p401 = scmp.ne.s32.totalorder %s390, %s393
      %p402 = scmp.eq.s32.totalorder %s45, 3
      %p403 = por %p401, %p402
      %p404 = scmp.ne.s32.totalorder %s393, %s394
      %p405 = scmp.eq.s32.totalorder %s45, 0
      %p406 = por %p404, %p405
      %p407 = scmp.ne.s32.totalorder %s393, %s394
      %p408 = scmp.eq.s32.totalorder %s46, 3
      %p409 = por %p407, %p408
      %p411 = scmp.ne.s32.totalorder %s394, %s410
      %p412 = scmp.eq.s32.totalorder %s46, 0
      %p413 = por %p411, %p412
      %s414 = ssub.s32 %s48, %s55
      %p415 = scmp.eq.s32.totalorder %s414, 0
      %s417 = sadd.s32 %s416, 1
      %s418 = scalar_select %p415, %s416, %s417
      %p421 = pneg %p415
      %p422 = scmp.eq.s32.totalorder %s40, 3
      %p423 = por %p421, %p422
      %p424 = scmp.ne.s32.totalorder %s416, %s419
      %p425 = scmp.eq.s32.totalorder %s40, 0
      %p426 = por %p424, %p425
      %p427 = scmp.ne.s32.totalorder %s416, %s419
      %p428 = scmp.eq.s32.totalorder %s45, 3
      %p429 = por %p427, %p428
      %p430 = scmp.ne.s32.totalorder %s419, %s420
      %p431 = scmp.eq.s32.totalorder %s45, 0
      %p432 = por %p430, %p431
      %p433 = scmp.ne.s32.totalorder %s419, %s420
      %p434 = scmp.eq.s32.totalorder %s46, 3
      %p435 = por %p433, %p434
      %p437 = scmp.ne.s32.totalorder %s420, %s436
      %p438 = scmp.eq.s32.totalorder %s46, 0
      %p439 = por %p437, %p438
      %s440 = ssub.s32 %s48, %s55
      %p441 = scmp.eq.s32.totalorder %s440, 0
      %s443 = sadd.s32 %s442, 1
      %s444 = scalar_select %p441, %s442, %s443
      %p447 = pneg %p441
      %p448 = scmp.eq.s32.totalorder %s40, 3
      %p449 = por %p447, %p448
      %p450 = scmp.ne.s32.totalorder %s442, %s445
      %p451 = scmp.eq.s32.totalorder %s40, 0
      %p452 = por %p450, %p451
      %p453 = scmp.ne.s32.totalorder %s442, %s445
      %p454 = scmp.eq.s32.totalorder %s45, 3
      %p455 = por %p453, %p454
      %p456 = scmp.ne.s32.totalorder %s445, %s446
      %p457 = scmp.eq.s32.totalorder %s45, 0
      %p458 = por %p456, %p457
      %p459 = scmp.ne.s32.totalorder %s445, %s446
      %p460 = scmp.eq.s32.totalorder %s46, 3
      %p461 = por %p459, %p460
      %p463 = scmp.ne.s32.totalorder %s446, %s462
      %p464 = scmp.eq.s32.totalorder %s46, 0
      %p465 = por %p463, %p464
      %s466 = ssub.s32 %s48, %s55
      %p467 = scmp.eq.s32.totalorder %s466, 0
      %s469 = sadd.s32 %s468, 1
      %s470 = scalar_select %p467, %s468, %s469
      %p473 = pneg %p467
      %p474 = scmp.eq.s32.totalorder %s40, 3
      %p475 = por %p473, %p474
      %p476 = scmp.ne.s32.totalorder %s468, %s471
      %p477 = scmp.eq.s32.totalorder %s40, 0
      %p478 = por %p476, %p477
      %p479 = scmp.ne.s32.totalorder %s468, %s471
      %p480 = scmp.eq.s32.totalorder %s45, 3
      %p481 = por %p479, %p480
      %p482 = scmp.ne.s32.totalorder %s471, %s472
      %p483 = scmp.eq.s32.totalorder %s45, 0
      %p484 = por %p482, %p483
      %p485 = scmp.ne.s32.totalorder %s471, %s472
      %p486 = scmp.eq.s32.totalorder %s46, 3
      %p487 = por %p485, %p486
      %p489 = scmp.ne.s32.totalorder %s472, %s488
      %p490 = scmp.eq.s32.totalorder %s46, 0
      %p491 = por %p489, %p490
      %s492 = ssub.s32 %s48, %s55
      %p493 = scmp.eq.s32.totalorder %s492, 0
      %s495 = sadd.s32 %s494, 1
      %s496 = scalar_select %p493, %s494, %s495
      %p499 = pneg %p493
      %p500 = scmp.eq.s32.totalorder %s40, 3
      %p501 = por %p499, %p500
      %p502 = scmp.ne.s32.totalorder %s494, %s497
      %p503 = scmp.eq.s32.totalorder %s40, 0
      %p504 = por %p502, %p503
      %p505 = scmp.ne.s32.totalorder %s494, %s497
      %p506 = scmp.eq.s32.totalorder %s45, 3
      %p507 = por %p505, %p506
      %p508 = scmp.ne.s32.totalorder %s497, %s498
      %p509 = scmp.eq.s32.totalorder %s45, 0
      %p510 = por %p508, %p509
      %p511 = scmp.ne.s32.totalorder %s497, %s498
      %p512 = scmp.eq.s32.totalorder %s46, 3
      %p513 = por %p511, %p512
      %p515 = scmp.ne.s32.totalorder %s498, %s514
      %p516 = scmp.eq.s32.totalorder %s46, 0
      %p517 = por %p515, %p516
      %s518 = ssub.s32 %s48, %s55
      %p519 = scmp.eq.s32.totalorder %s518, 0
      %s521 = sadd.s32 %s520, 1
      %s522 = scalar_select %p519, %s520, %s521
      %p525 = pneg %p519
      %p526 = scmp.eq.s32.totalorder %s40, 3
      %p527 = por %p525, %p526
      %p528 = scmp.ne.s32.totalorder %s520, %s523
      %p529 = scmp.eq.s32.totalorder %s40, 0
      %p530 = por %p528, %p529
      %p531 = scmp.ne.s32.totalorder %s520, %s523
      %p532 = scmp.eq.s32.totalorder %s45, 3
      %p533 = por %p531, %p532
      %p534 = scmp.ne.s32.totalorder %s523, %s524
      %p535 = scmp.eq.s32.totalorder %s45, 0
      %p536 = por %p534, %p535
      %p537 = scmp.ne.s32.totalorder %s523, %s524
      %p538 = scmp.eq.s32.totalorder %s46, 3
      %p539 = por %p537, %p538
      %p541 = scmp.ne.s32.totalorder %s524, %s540
      %p542 = scmp.eq.s32.totalorder %s46, 0
      %p543 = por %p541, %p542
      %s544 = ssub.s32 %s48, %s55
      %p545 = scmp.eq.s32.totalorder %s544, 0
      %s547 = sadd.s32 %s546, 1
      %s548 = scalar_select %p545, %s546, %s547
      %p551 = pneg %p545
      %p552 = scmp.eq.s32.totalorder %s40, 3
      %p553 = por %p551, %p552
      %p554 = scmp.ne.s32.totalorder %s546, %s549
      %p555 = scmp.eq.s32.totalorder %s40, 0
      %p556 = por %p554, %p555
      %p557 = scmp.ne.s32.totalorder %s546, %s549
      %p558 = scmp.eq.s32.totalorder %s45, 3
      %p559 = por %p557, %p558
      %p560 = scmp.ne.s32.totalorder %s549, %s550
      %p561 = scmp.eq.s32.totalorder %s45, 0
      %p562 = por %p560, %p561
      %p563 = scmp.ne.s32.totalorder %s549, %s550
      %p564 = scmp.eq.s32.totalorder %s46, 3
      %p565 = por %p563, %p564
      %p567 = scmp.ne.s32.totalorder %s550, %s566
      %p568 = scmp.eq.s32.totalorder %s46, 0
      %p569 = por %p567, %p568
      %s570 = ssub.s32 %s48, %s55
      %p571 = scmp.eq.s32.totalorder %s570, 0
      %s573 = sadd.s32 %s572, 1
      %s574 = scalar_select %p571, %s572, %s573
      %p577 = pneg %p571
      %p578 = scmp.eq.s32.totalorder %s40, 3
      %p579 = por %p577, %p578
      %p580 = scmp.ne.s32.totalorder %s572, %s575
      %p581 = scmp.eq.s32.totalorder %s40, 0
      %p582 = por %p580, %p581
      %p583 = scmp.ne.s32.totalorder %s572, %s575
      %p584 = scmp.eq.s32.totalorder %s45, 3
      %p585 = por %p583, %p584
      %p586 = scmp.ne.s32.totalorder %s575, %s576
      %p587 = scmp.eq.s32.totalorder %s45, 0
      %p588 = por %p586, %p587
      %p589 = scmp.ne.s32.totalorder %s575, %s576
      %p590 = scmp.eq.s32.totalorder %s46, 3
      %p591 = por %p589, %p590
      %p593 = scmp.ne.s32.totalorder %s576, %s592
      %p594 = scmp.eq.s32.totalorder %s46, 0
      %p595 = por %p593, %p594
      %s596 = ssub.s32 %s47, %s59
      %p597 = scmp.eq.s32.totalorder %s596, 0
      %s599 = sadd.s32 %s598, 1
      %s600 = scalar_select %p597, %s598, %s599
      %p603 = pneg %p597
      %p604 = scmp.eq.s32.totalorder %s40, 3
      %p605 = por %p603, %p604
      %p606 = scmp.ne.s32.totalorder %s598, %s601
      %p607 = scmp.eq.s32.totalorder %s40, 0
      %p608 = por %p606, %p607
      %p609 = scmp.ne.s32.totalorder %s598, %s601
      %p610 = scmp.eq.s32.totalorder %s45, 3
      %p611 = por %p609, %p610
      %p612 = scmp.ne.s32.totalorder %s601, %s602
      %p613 = scmp.eq.s32.totalorder %s45, 0
      %p614 = por %p612, %p613
      %p615 = scmp.ne.s32.totalorder %s601, %s602
      %p616 = scmp.eq.s32.totalorder %s46, 3
      %p617 = por %p615, %p616
      %p619 = scmp.ne.s32.totalorder %s602, %s618
      %p620 = scmp.eq.s32.totalorder %s46, 0
      %p621 = por %p619, %p620
      %p622 = scmp.le.s32.totalorder 1, %s40
      %p623 = scmp.lt.s32.totalorder %s40, 5
      %p624 = pnand %p622, %p623
      %p625 = pneg %p624
      // Predicated region
      $region9: #{tpu_custom_call.1} parent=5 // pred_check
        _
      $region10: #{tpu_custom_call.1} parent=5 // pred_check_branch
        %627 = sbr.rel (%p624) target = $region12
      $region11: #{tpu_custom_call.1} parent=5 // pred_region
        %s628 = ssub.s32 %s40, 1
        // Predicated region
        $region13: #{tpu_custom_call.1} parent=11 // pred_check
          %p629 = pneg %p151
        $region14: #{tpu_custom_call.1} parent=11 // pred_check_branch
          %631 = sbr.rel (%p629) target = $region16
        $region15: #{tpu_custom_call.1} parent=11 // pred_region
          %633 = vsyncadd [#allocation9], 0
          %s634 = sshll.u32 %s3, 4
          %s635 = int_to_ptr.hbm [resolvable:$true] %s634
          %s636 = sshll.u32 [#allocation8], 4
          %s637 = int_to_ptr.vmem [resolvable:$true] %s636
          %642 = dma.hbm_to_vmem [thread:$0]  %s635, 512, %s637, [#allocation9], 128, 128, 8
        $region16: #{tpu_custom_call.1} parent=11 // pred_fallthru
          _
        // Predicated region
        $region17: #{tpu_custom_call.1} parent=11 // pred_check
          %p643 = pneg %p172
        $region18: #{tpu_custom_call.1} parent=11 // pred_check_branch
          %645 = sbr.rel (%p643) target = $region20
        $region19: #{tpu_custom_call.1} parent=11 // pred_region
          %647 = vsyncadd [#allocation9], 0
          %s648 = sshll.u32 %s4, 4
          %s649 = int_to_ptr.hbm [resolvable:$true] %s648
          %s650 = sshll.u32 [#allocation10], 4
          %s651 = int_to_ptr.vmem [resolvable:$true] %s650
          %656 = dma.hbm_to_vmem [thread:$0]  %s649, 512, %s651, [#allocation9], 128, 128, 8
        $region20: #{tpu_custom_call.1} parent=11 // pred_fallthru
          _
      $region12: #{tpu_custom_call.1} parent=5 // pred_fallthru
        _
      %p657 = scmp.lt.s32.totalorder %s40, 4
      // Predicated region
      $region21: #{tpu_custom_call.1} parent=5 // pred_check
        %p658 = pneg %p657
      $region22: #{tpu_custom_call.1} parent=5 // pred_check_branch
        %660 = sbr.rel (%p658) target = $region24
      $region23: #{tpu_custom_call.1} parent=5 // pred_region
        // Predicated region
        $region25: #{tpu_custom_call.1} parent=23 // pred_check
          %p661 = pneg %p72
        $region26: #{tpu_custom_call.1} parent=23 // pred_check_branch
          %663 = sbr.rel (%p661) target = $region28
        $region27: #{tpu_custom_call.1} parent=23 // pred_region
          %s664 = smul.u32 2, %s47
          %p665 = scmp.lt.s32.totalorder %s664, 3
          %s666 = scalar_select %p665, %s664, 3
          %s667 = smul.addr %s666, 8
          %s668 = scalar_lea.vmem %s0, %s667
          %s669 = smul.u32 2, %s47
        $region28: #{tpu_custom_call.1} parent=23 // pred_fallthru
          _
        // Predicated region
        $region29: #{tpu_custom_call.1} parent=23 // pred_check
          %p670 = pneg %p98
        $region30: #{tpu_custom_call.1} parent=23 // pred_check_branch
          %672 = sbr.rel (%p670) target = $region32
        $region31: #{tpu_custom_call.1} parent=23 // pred_region
          %s673 = smul.u32 2, %s47
          %p674 = scmp.lt.s32.totalorder %s673, 3
          %s675 = scalar_select %p674, %s673, 3
          %s676 = smul.addr %s675, 8
          %s677 = scalar_lea.vmem %s1, %s676
          %s678 = smul.u32 2, %s47
        $region32: #{tpu_custom_call.1} parent=23 // pred_fallthru
          _
        // Predicated region
        $region33: #{tpu_custom_call.1} parent=23 // pred_check
          %p679 = pneg %p124
        $region34: #{tpu_custom_call.1} parent=23 // pred_check_branch
          %681 = sbr.rel (%p679) target = $region36
        $region35: #{tpu_custom_call.1} parent=23 // pred_region
          %s682 = sand.u32 %s114, 1
          %s683 = scalar_lea.sflag [#allocation6], %s682
          %s684 = sand.u32 %s114, 1
          %s685 = smul.addr %s684, 16
          %s686 = scalar_lea.vmem [#allocation5], %s685
          %s687 = smul.u32 2, %s47
          %689 = vsyncadd %s683, 0
          %s690 = smul.addr %s687, 8
          %s691 = scalar_lea.hbm %s2, %s690
          %s692 = sshll.u32 %s691, 4
          %s693 = int_to_ptr.hbm [resolvable:$true] %s692
          %s694 = sshll.u32 %s686, 4
          %s695 = int_to_ptr.vmem [resolvable:$true] %s694
          %700 = dma.hbm_to_vmem [thread:$0]  %s693, 256, %s695, %s683, 128, 128, 8
        $region36: #{tpu_custom_call.1} parent=23 // pred_fallthru
          _
        // Predicated region
        $region37: #{tpu_custom_call.1} parent=23 // pred_check
          %p701 = pneg %p192
        $region38: #{tpu_custom_call.1} parent=23 // pred_check_branch
          %703 = sbr.rel (%p701) target = $region40
        $region39: #{tpu_custom_call.1} parent=23 // pred_region
          %p704 = scmp.lt.s32.totalorder %s48, 1
          %s705 = scalar_select %p704, %s48, 1
          %s706 = smul.addr %s705, 4
          %s707 = smul.addr %s706, 8
          %s708 = scalar_lea.vmem %s5, %s707
        $region40: #{tpu_custom_call.1} parent=23 // pred_fallthru
          _
        // Predicated region
        $region41: #{tpu_custom_call.1} parent=23 // pred_check
          %p709 = pneg %p218
        $region42: #{tpu_custom_call.1} parent=23 // pred_check_branch
          %711 = sbr.rel (%p709) target = $region44
        $region43: #{tpu_custom_call.1} parent=23 // pred_region
          %p712 = scmp.lt.s32.totalorder %s48, 1
          %s713 = scalar_select %p712, %s48, 1
          %s714 = scalar_lea.vmem %s6, %s713
        $region44: #{tpu_custom_call.1} parent=23 // pred_fallthru
          _
        // Predicated region
        $region45: #{tpu_custom_call.1} parent=23 // pred_check
          %p715 = pneg %p244
        $region46: #{tpu_custom_call.1} parent=23 // pred_check_branch
          %717 = sbr.rel (%p715) target = $region48
        $region47: #{tpu_custom_call.1} parent=23 // pred_region
          %p718 = scmp.lt.s32.totalorder %s48, 1
          %s719 = scalar_select %p718, %s48, 1
          %s720 = smul.addr %s719, 4
          %s721 = smul.addr %s720, 8
          %s722 = scalar_lea.vmem %s7, %s721
        $region48: #{tpu_custom_call.1} parent=23 // pred_fallthru
          _
        // Predicated region
        $region49: #{tpu_custom_call.1} parent=23 // pred_check
          %p723 = pneg %p270
        $region50: #{tpu_custom_call.1} parent=23 // pred_check_branch
          %725 = sbr.rel (%p723) target = $region52
        $region51: #{tpu_custom_call.1} parent=23 // pred_region
          %p726 = scmp.lt.s32.totalorder %s48, 1
          %s727 = scalar_select %p726, %s48, 1
          %s728 = scalar_lea.vmem %s8, %s727
        $region52: #{tpu_custom_call.1} parent=23 // pred_fallthru
          _
        // Predicated region
        $region53: #{tpu_custom_call.1} parent=23 // pred_check
          %p729 = pneg %p296
        $region54: #{tpu_custom_call.1} parent=23 // pred_check_branch
          %731 = sbr.rel (%p729) target = $region56
        $region55: #{tpu_custom_call.1} parent=23 // pred_region
          %p732 = scmp.lt.s32.totalorder %s48, 1
          %s733 = scalar_select %p732, %s48, 1
          %s734 = scalar_lea.vmem %s9, %s733
        $region56: #{tpu_custom_call.1} parent=23 // pred_fallthru
          _
        // Predicated region
        $region57: #{tpu_custom_call.1} parent=23 // pred_check
          %p735 = pneg %p322
        $region58: #{tpu_custom_call.1} parent=23 // pred_check_branch
          %737 = sbr.rel (%p735) target = $region60
        $region59: #{tpu_custom_call.1} parent=23 // pred_region
          %s738 = sand.u32 %s40, 1
          %s739 = scalar_lea.sflag [#allocation12], %s738
          %s740 = sand.u32 %s312, 1
          %s741 = scalar_lea.vmem [#allocation11], %s740
          %743 = vsyncadd %s739, 0
          %s744 = scalar_lea.hbm %s10, %s48
          %s746 = sshll.u32 %s744, 4
          %s747 = int_to_ptr.hbm [resolvable:$true] %s746
          %s748 = sshll.u32 %s741, 4
          %s749 = int_to_ptr.vmem [resolvable:$true] %s748
          %751 = dma.hbm_to_vmem [thread:$0]  %s747, 16, %s749, %s739
        $region60: #{tpu_custom_call.1} parent=23 // pred_fallthru
          _
        // Predicated region
        $region61: #{tpu_custom_call.1} parent=23 // pred_check
          %p752 = pneg %p348
        $region62: #{tpu_custom_call.1} parent=23 // pred_check_branch
          %754 = sbr.rel (%p752) target = $region64
        $region63: #{tpu_custom_call.1} parent=23 // pred_region
          %p755 = scmp.lt.s32.totalorder %s48, 1
          %s756 = scalar_select %p755, %s48, 1
          %s757 = smul.addr %s756, 4
          %s758 = smul.addr %s757, 8
          %s759 = scalar_lea.vmem %s11, %s758
        $region64: #{tpu_custom_call.1} parent=23 // pred_fallthru
          _
        // Predicated region
        $region65: #{tpu_custom_call.1} parent=23 // pred_check
          %p760 = pneg %p374
        $region66: #{tpu_custom_call.1} parent=23 // pred_check_branch
          %762 = sbr.rel (%p760) target = $region68
        $region67: #{tpu_custom_call.1} parent=23 // pred_region
          %p763 = scmp.lt.s32.totalorder %s48, 1
          %s764 = scalar_select %p763, %s48, 1
          %s765 = scalar_lea.vmem %s12, %s764
        $region68: #{tpu_custom_call.1} parent=23 // pred_fallthru
          _
        // Predicated region
        $region69: #{tpu_custom_call.1} parent=23 // pred_check
          %p766 = pneg %p400
        $region70: #{tpu_custom_call.1} parent=23 // pred_check_branch
          %768 = sbr.rel (%p766) target = $region72
        $region71: #{tpu_custom_call.1} parent=23 // pred_region
          %p769 = scmp.lt.s32.totalorder %s48, 1
          %s770 = scalar_select %p769, %s48, 1
          %s771 = scalar_lea.vmem %s13, %s770
        $region72: #{tpu_custom_call.1} parent=23 // pred_fallthru
          _
        // Predicated region
        $region73: #{tpu_custom_call.1} parent=23 // pred_check
          %p772 = pneg %p426
        $region74: #{tpu_custom_call.1} parent=23 // pred_check_branch
          %774 = sbr.rel (%p772) target = $region76
        $region75: #{tpu_custom_call.1} parent=23 // pred_region
          %s775 = sand.u32 %s40, 1
          %s776 = scalar_lea.sflag [#allocation12], %s775
          %s777 = sand.u32 %s416, 1
          %s778 = scalar_lea.vmem [#allocation13], %s777
          %780 = vsyncadd %s776, 0
          %s781 = scalar_lea.hbm %s14, %s48
          %s783 = sshll.u32 %s781, 4
          %s784 = int_to_ptr.hbm [resolvable:$true] %s783
          %s785 = sshll.u32 %s778, 4
          %s786 = int_to_ptr.vmem [resolvable:$true] %s785
          %788 = dma.hbm_to_vmem [thread:$0]  %s784, 16, %s786, %s776
        $region76: #{tpu_custom_call.1} parent=23 // pred_fallthru
          _
        // Predicated region
        $region77: #{tpu_custom_call.1} parent=23 // pred_check
          %p789 = pneg %p452
        $region78: #{tpu_custom_call.1} parent=23 // pred_check_branch
          %791 = sbr.rel (%p789) target = $region80
        $region79: #{tpu_custom_call.1} parent=23 // pred_region
          %p792 = scmp.lt.s32.totalorder %s48, 1
          %s793 = scalar_select %p792, %s48, 1
          %s794 = smul.addr %s793, 4
          %s795 = smul.addr %s794, 8
          %s796 = scalar_lea.vmem %s15, %s795
        $region80: #{tpu_custom_call.1} parent=23 // pred_fallthru
          _
        // Predicated region
        $region81: #{tpu_custom_call.1} parent=23 // pred_check
          %p797 = pneg %p478
        $region82: #{tpu_custom_call.1} parent=23 // pred_check_branch
          %799 = sbr.rel (%p797) target = $region84
        $region83: #{tpu_custom_call.1} parent=23 // pred_region
          %p800 = scmp.lt.s32.totalorder %s48, 1
          %s801 = scalar_select %p800, %s48, 1
          %s802 = scalar_lea.vmem %s16, %s801
        $region84: #{tpu_custom_call.1} parent=23 // pred_fallthru
          _
        // Predicated region
        $region85: #{tpu_custom_call.1} parent=23 // pred_check
          %p803 = pneg %p504
        $region86: #{tpu_custom_call.1} parent=23 // pred_check_branch
          %805 = sbr.rel (%p803) target = $region88
        $region87: #{tpu_custom_call.1} parent=23 // pred_region
          %p806 = scmp.lt.s32.totalorder %s48, 1
          %s807 = scalar_select %p806, %s48, 1
          %s808 = smul.addr %s807, 16
          %s809 = smul.addr %s808, 8
          %s810 = scalar_lea.vmem %s17, %s809
        $region88: #{tpu_custom_call.1} parent=23 // pred_fallthru
          _
        // Predicated region
        $region89: #{tpu_custom_call.1} parent=23 // pred_check
          %p811 = pneg %p530
        $region90: #{tpu_custom_call.1} parent=23 // pred_check_branch
          %813 = sbr.rel (%p811) target = $region92
        $region91: #{tpu_custom_call.1} parent=23 // pred_region
          %p814 = scmp.lt.s32.totalorder %s48, 1
          %s815 = scalar_select %p814, %s48, 1
          %s816 = scalar_lea.vmem %s18, %s815
        $region92: #{tpu_custom_call.1} parent=23 // pred_fallthru
          _
        // Predicated region
        $region93: #{tpu_custom_call.1} parent=23 // pred_check
          %p817 = pneg %p556
        $region94: #{tpu_custom_call.1} parent=23 // pred_check_branch
          %819 = sbr.rel (%p817) target = $region96
        $region95: #{tpu_custom_call.1} parent=23 // pred_region
          %s820 = sand.u32 %s546, 1
          %s821 = scalar_lea.sflag [#allocation15], %s820
          %s822 = sand.u32 %s546, 1
          %s823 = scalar_lea.vmem [#allocation14], %s822
          %825 = vsyncadd %s821, 0
          %s826 = scalar_lea.hbm %s19, %s48
          %s828 = sshll.u32 %s826, 4
          %s829 = int_to_ptr.hbm [resolvable:$true] %s828
          %s830 = sshll.u32 %s823, 4
          %s831 = int_to_ptr.vmem [resolvable:$true] %s830
          %833 = dma.hbm_to_vmem [thread:$0]  %s829, 16, %s831, %s821
        $region96: #{tpu_custom_call.1} parent=23 // pred_fallthru
          _
        // Predicated region
        $region97: #{tpu_custom_call.1} parent=23 // pred_check
          %p834 = pneg %p582
        $region98: #{tpu_custom_call.1} parent=23 // pred_check_branch
          %836 = sbr.rel (%p834) target = $region100
        $region99: #{tpu_custom_call.1} parent=23 // pred_region
          %p837 = scmp.lt.s32.totalorder %s48, 1
          %s838 = scalar_select %p837, %s48, 1
          %s839 = scalar_lea.vmem %s20, %s838
        $region100: #{tpu_custom_call.1} parent=23 // pred_fallthru
          _
      $region24: #{tpu_custom_call.1} parent=5 // pred_fallthru
        _
      %p840 = scmp.le.s32.totalorder 1, %s40
      %p841 = scmp.lt.s32.totalorder %s40, 5
      %p842 = pnand %p840, %p841
      %p843 = pneg %p842
      // Predicated region
      $region101: #{tpu_custom_call.1} parent=5 // pred_check
        _
      $region102: #{tpu_custom_call.1} parent=5 // pred_check_branch
        %845 = sbr.rel (%p842) target = $region104
      $region103: #{tpu_custom_call.1} parent=5 // pred_region
        %s846 = ssub.s32 %s40, 1
        %s847 = sand.u32 %s117, 1
        %s848 = scalar_lea.sflag [#allocation6], %s847
        %s849 = sand.u32 %s117, 1
        %s850 = smul.addr %s849, 16
        %s851 = scalar_lea.vmem [#allocation5], %s850
        // Predicated region
        $region105: #{tpu_custom_call.1} parent=103 // pred_check
          %p852 = pneg %p130
        $region106: #{tpu_custom_call.1} parent=103 // pred_check_branch
          %854 = sbr.rel (%p852) target = $region108
        $region107: #{tpu_custom_call.1} parent=103 // pred_region
          %856 = dma.done %s848, 256
        $region108: #{tpu_custom_call.1} parent=103 // pred_fallthru
          _
        // Predicated region
        $region109: #{tpu_custom_call.1} parent=103 // pred_check
          %p857 = pneg %p151
        $region110: #{tpu_custom_call.1} parent=103 // pred_check_branch
          %859 = sbr.rel (%p857) target = $region112
        $region111: #{tpu_custom_call.1} parent=103 // pred_region
          %861 = dma.done [#allocation9], 512
        $region112: #{tpu_custom_call.1} parent=103 // pred_fallthru
          _
        // Predicated region
        $region113: #{tpu_custom_call.1} parent=103 // pred_check
          %p862 = pneg %p172
        $region114: #{tpu_custom_call.1} parent=103 // pred_check_branch
          %864 = sbr.rel (%p862) target = $region116
        $region115: #{tpu_custom_call.1} parent=103 // pred_region
          %866 = dma.done [#allocation9], 512
        $region116: #{tpu_custom_call.1} parent=103 // pred_fallthru
          _
        %s867 = sand.u32 %s45, 1
        %s868 = scalar_lea.sflag [#allocation12], %s867
        %s869 = sand.u32 %s315, 1
        %s870 = scalar_lea.vmem [#allocation11], %s869
        // Predicated region
        $region117: #{tpu_custom_call.1} parent=103 // pred_check
          %p871 = pneg %p328
        $region118: #{tpu_custom_call.1} parent=103 // pred_check_branch
          %873 = sbr.rel (%p871) target = $region120
        $region119: #{tpu_custom_call.1} parent=103 // pred_region
          %875 = dma.done %s868, 16
        $region120: #{tpu_custom_call.1} parent=103 // pred_fallthru
          _
        %s876 = sand.u32 %s45, 1
        %s877 = scalar_lea.sflag [#allocation12], %s876
        %s878 = sand.u32 %s419, 1
        %s879 = scalar_lea.vmem [#allocation13], %s878
        // Predicated region
        $region121: #{tpu_custom_call.1} parent=103 // pred_check
          %p880 = pneg %p432
        $region122: #{tpu_custom_call.1} parent=103 // pred_check_branch
          %882 = sbr.rel (%p880) target = $region124
        $region123: #{tpu_custom_call.1} parent=103 // pred_region
          %884 = dma.done %s877, 16
        $region124: #{tpu_custom_call.1} parent=103 // pred_fallthru
          _
        %s885 = sand.u32 %s549, 1
        %s886 = scalar_lea.sflag [#allocation15], %s885
        %s887 = sand.u32 %s549, 1
        %s888 = scalar_lea.vmem [#allocation14], %s887
        // Predicated region
        $region125: #{tpu_custom_call.1} parent=103 // pred_check
          %p889 = pneg %p562
        $region126: #{tpu_custom_call.1} parent=103 // pred_check_branch
          %891 = sbr.rel (%p889) target = $region128
        $region127: #{tpu_custom_call.1} parent=103 // pred_region
          %893 = dma.done %s886, 16
        $region128: #{tpu_custom_call.1} parent=103 // pred_fallthru
          _
        %s894 = smul.u32 2, %s49
        %p895 = scmp.lt.s32.totalorder %s894, 3
        %s896 = scalar_select %p895, %s894, 3
        %s897 = smul.addr %s896, 8
        %s898 = scalar_lea.vmem %s0, %s897
        %p899 = pneg %p78
        %p900 = pneg %p75
        %s901 = smul.u32 2, %s49
        %p902 = scmp.lt.s32.totalorder %s901, 3
        %s903 = scalar_select %p902, %s901, 3
        %s904 = smul.addr %s903, 8
        %s905 = scalar_lea.vmem %s1, %s904
        %p906 = pneg %p104
        %p907 = pneg %p101
        %s908 = sand.u32 %s117, 1
        %s909 = scalar_lea.sflag [#allocation6], %s908
        %s910 = sand.u32 %s117, 1
        %s911 = smul.addr %s910, 16
        %s912 = scalar_lea.vmem [#allocation5], %s911
        %p913 = pneg %p130
        %p914 = pneg %p127
        %p915 = pneg %p151
        %p916 = pneg %p148
        %p917 = pneg %p172
        %p918 = pneg %p169
        %p919 = scmp.lt.s32.totalorder %s50, 1
        %s920 = scalar_select %p919, %s50, 1
        %s921 = smul.addr %s920, 4
        %s922 = smul.addr %s921, 8
        %s923 = scalar_lea.vmem %s5, %s922
        %p924 = pneg %p198
        %p925 = pneg %p195
        %p926 = scmp.lt.s32.totalorder %s50, 1
        %s927 = scalar_select %p926, %s50, 1
        %s928 = scalar_lea.vmem %s6, %s927
        %p929 = pneg %p224
        %p930 = pneg %p221
        %p931 = scmp.lt.s32.totalorder %s50, 1
        %s932 = scalar_select %p931, %s50, 1
        %s933 = smul.addr %s932, 4
        %s934 = smul.addr %s933, 8
        %s935 = scalar_lea.vmem %s7, %s934
        %p936 = pneg %p250
        %p937 = pneg %p247
        %p938 = scmp.lt.s32.totalorder %s50, 1
        %s939 = scalar_select %p938, %s50, 1
        %s940 = scalar_lea.vmem %s8, %s939
        %p941 = pneg %p276
        %p942 = pneg %p273
        %p943 = scmp.lt.s32.totalorder %s50, 1
        %s944 = scalar_select %p943, %s50, 1
        %s945 = scalar_lea.vmem %s9, %s944
        %p946 = pneg %p302
        %p947 = pneg %p299
        %s948 = sand.u32 %s45, 1
        %s949 = scalar_lea.sflag [#allocation12], %s948
        %s950 = sand.u32 %s315, 1
        %s951 = scalar_lea.vmem [#allocation11], %s950
        %p952 = pneg %p328
        %p953 = pneg %p325
        %p954 = scmp.lt.s32.totalorder %s50, 1
        %s955 = scalar_select %p954, %s50, 1
        %s956 = smul.addr %s955, 4
        %s957 = smul.addr %s956, 8
        %s958 = scalar_lea.vmem %s11, %s957
        %p959 = pneg %p354
        %p960 = pneg %p351
        %p961 = scmp.lt.s32.totalorder %s50, 1
        %s962 = scalar_select %p961, %s50, 1
        %s963 = scalar_lea.vmem %s12, %s962
        %p964 = pneg %p380
        %p965 = pneg %p377
        %p966 = scmp.lt.s32.totalorder %s50, 1
        %s967 = scalar_select %p966, %s50, 1
        %s968 = scalar_lea.vmem %s13, %s967
        %p969 = pneg %p406
        %p970 = pneg %p403
        %s971 = sand.u32 %s45, 1
        %s972 = scalar_lea.sflag [#allocation12], %s971
        %s973 = sand.u32 %s419, 1
        %s974 = scalar_lea.vmem [#allocation13], %s973
        %p975 = pneg %p432
        %p976 = pneg %p429
        %p977 = scmp.lt.s32.totalorder %s50, 1
        %s978 = scalar_select %p977, %s50, 1
        %s979 = smul.addr %s978, 4
        %s980 = smul.addr %s979, 8
        %s981 = scalar_lea.vmem %s15, %s980
        %p982 = pneg %p458
        %p983 = pneg %p455
        %p984 = scmp.lt.s32.totalorder %s50, 1
        %s985 = scalar_select %p984, %s50, 1
        %s986 = scalar_lea.vmem %s16, %s985
        %p987 = pneg %p484
        %p988 = pneg %p481
        %p989 = scmp.lt.s32.totalorder %s50, 1
        %s990 = scalar_select %p989, %s50, 1
        %s991 = smul.addr %s990, 16
        %s992 = smul.addr %s991, 8
        %s993 = scalar_lea.vmem %s17, %s992
        %p994 = pneg %p510
        %p995 = pneg %p507
        %p996 = scmp.lt.s32.totalorder %s50, 1
        %s997 = scalar_select %p996, %s50, 1
        %s998 = scalar_lea.vmem %s18, %s997
        %p999 = pneg %p536
        %p1000 = pneg %p533
        %s1001 = sand.u32 %s549, 1
        %s1002 = scalar_lea.sflag [#allocation15], %s1001
        %s1003 = sand.u32 %s549, 1
        %s1004 = scalar_lea.vmem [#allocation14], %s1003
        %p1005 = pneg %p562
        %p1006 = pneg %p559
        %p1007 = scmp.lt.s32.totalorder %s50, 1
        %s1008 = scalar_select %p1007, %s50, 1
        %s1009 = scalar_lea.vmem %s20, %s1008
        %p1010 = pneg %p588
        %p1011 = pneg %p585
        %p1012 = pneg %p614
        %p1013 = pneg %p611
        %s1014 = sand.u32 %s601, 1
        %s1015 = scalar_lea.sflag [#allocation7], %s1014
        %s1016 = sand.u32 %s601, 1
        %s1017 = smul.addr %s1016, 16
        %s1018 = scalar_lea.vmem [#allocation16], %s1017
        %s1019 = smul.u32 2, %s49
        %p1020 = scmp.lt.s32.totalorder %s1019, 3
        %s1021 = scalar_select %p1020, %s1019, 3
        %s1022 = smul.addr %s1021, 8
        %s1023 = scalar_lea.vmem %s0, %s1022
        %s1024 = smul.u32 2, %s49
        %s1025 = smul.u32 2, %s49
        %p1026 = scmp.lt.s32.totalorder %s1025, 3
        %s1027 = scalar_select %p1026, %s1025, 3
        %s1028 = smul.addr %s1027, 8
        %s1029 = scalar_lea.vmem %s1, %s1028
        %s1030 = smul.u32 2, %s49
        %s1031 = smul.u32 2, %s49
        %p1032 = scmp.lt.s32.totalorder %s50, 1
        %s1033 = scalar_select %p1032, %s50, 1
        %s1034 = smul.addr %s1033, 4
        %s1035 = smul.addr %s1034, 8
        %s1036 = scalar_lea.vmem %s5, %s1035
        %p1037 = scmp.lt.s32.totalorder %s50, 1
        %s1038 = scalar_select %p1037, %s50, 1
        %s1039 = scalar_lea.vmem %s6, %s1038
        %p1040 = scmp.lt.s32.totalorder %s50, 1
        %s1041 = scalar_select %p1040, %s50, 1
        %s1042 = smul.addr %s1041, 4
        %s1043 = smul.addr %s1042, 8
        %s1044 = scalar_lea.vmem %s7, %s1043
        %p1045 = scmp.lt.s32.totalorder %s50, 1
        %s1046 = scalar_select %p1045, %s50, 1
        %s1047 = scalar_lea.vmem %s8, %s1046
        %p1048 = scmp.lt.s32.totalorder %s50, 1
        %s1049 = scalar_select %p1048, %s50, 1
        %s1050 = scalar_lea.vmem %s9, %s1049
        %p1051 = scmp.lt.s32.totalorder %s50, 1
        %s1052 = scalar_select %p1051, %s50, 1
        %s1053 = smul.addr %s1052, 4
        %s1054 = smul.addr %s1053, 8
        %s1055 = scalar_lea.vmem %s11, %s1054
        %p1056 = scmp.lt.s32.totalorder %s50, 1
        %s1057 = scalar_select %p1056, %s50, 1
        %s1058 = scalar_lea.vmem %s12, %s1057
        %p1059 = scmp.lt.s32.totalorder %s50, 1
        %s1060 = scalar_select %p1059, %s50, 1
        %s1061 = scalar_lea.vmem %s13, %s1060
        %p1062 = scmp.lt.s32.totalorder %s50, 1
        %s1063 = scalar_select %p1062, %s50, 1
        %s1064 = smul.addr %s1063, 4
        %s1065 = smul.addr %s1064, 8
        %s1066 = scalar_lea.vmem %s15, %s1065
        %p1067 = scmp.lt.s32.totalorder %s50, 1
        %s1068 = scalar_select %p1067, %s50, 1
        %s1069 = scalar_lea.vmem %s16, %s1068
        %p1070 = scmp.lt.s32.totalorder %s50, 1
        %s1071 = scalar_select %p1070, %s50, 1
        %s1072 = smul.addr %s1071, 16
        %s1073 = smul.addr %s1072, 8
        %s1074 = scalar_lea.vmem %s17, %s1073
        %p1075 = scmp.lt.s32.totalorder %s50, 1
        %s1076 = scalar_select %p1075, %s50, 1
        %s1077 = scalar_lea.vmem %s18, %s1076
        %p1078 = scmp.lt.s32.totalorder %s50, 1
        %s1079 = scalar_select %p1078, %s50, 1
        %s1080 = scalar_lea.vmem %s20, %s1079
        %s1081 = smul.u32 2, %s49
        %p1082 = scmp.eq.s32.totalorder %s50, 0
        // Predicated region
        $region129: #{tpu_custom_call.1} parent=103 // pred_check
          %p1083 = pneg %p1082
        $region130: #{tpu_custom_call.1} parent=103 // pred_check_branch
          %1085 = sbr.rel (%p1083) target = $region132
        $region131: #{tpu_custom_call.1} parent=103 // pred_region
          %v1086 = vld [vmem:[%s1023] sm:$0xff]
          %v1087 = vld [vmem:[%s1023 + $0x8] sm:$0xff]
          %vm1088 = vcmask 261120
          %1089 = vst.msk [vmem:[#allocation2] sm:$0xff] %vm1088, %v1086
          %1090 = vst.msk [vmem:[#allocation2 + $0x8] sm:$0xff] %vm1088, %v1087
          %v1091 = vld [vmem:[%s1029] sm:$0xff]
          %v1092 = vld [vmem:[%s1029 + $0x8] sm:$0xff]
          %v1093 = vld [vmem:[#allocation8] sm:$0xff]
          %v1094 = vld [vmem:[#allocation8 + $0x8] sm:$0xff]
          %v1095 = vld [vmem:[#allocation8 + $0x10] sm:$0xff]
          %v1096 = vld [vmem:[#allocation8 + $0x18] sm:$0xff]
          %v1098 = vsel %vm1088, %v1091, 0
          %v1101 = vsel %vm1088, %v1092, 0
          %1103 = vmatpush.msra.mxu0 0.0
          %1104 = vmatpush.msra.mxu0 0.0
          %1105 = vmatpush.msra.mxu0 0.0
          %1106 = vmatpush.msra.mxu0 0.0
          %1107 = vmatpush.msra.mxu0 0.0
          %1108 = vmatpush.msra.mxu0 0.0
          %1109 = vmatpush.msra.mxu0 0.0
          %1110 = vmatpush.msra.mxu0 0.0
          %1111 = vmatpush.msra.mxu0 0.0
          %1112 = vmatpush.msra.mxu0 0.0
          %1113 = vmatpush.msra.mxu0 0.0
          %1114 = vmatpush.msra.mxu0 0.0
          %1115 = vmatpush.msra.mxu0 %v1096
          %1116 = vmatpush.msra.mxu0 %v1095
          %1117 = vmatpush.msra.mxu0 %v1094
          %1118 = vmatpush.msra.mxu0 %v1093
          %1119 = vmatmul.f32.gmra.mxu0 %v1098
          %v1120 = vpop.f32.mrf.mxu0
          %v1121 = vadd.f32 0.0, %v1120
          %1122 = vmatmul.f32.gmra.mxu0 %v1101
          %v1123 = vpop.f32.mrf.mxu0
          %v1124 = vadd.f32 0.0, %v1123
          %1125 = vdwg.mxu0
          %1128 = vrot.lane.b32.xlu0 %v1121, 120
          %v1129 = vpop.permute.xlu0 %1128
          %1130 = vrot.lane.b32.xlu0 %v1124, 120
          %v1131 = vpop.permute.xlu0 %1130
          %1134 = vrot.lane.b32.xlu0 %v1121, 112
          %v1135 = vpop.permute.xlu0 %1134
          %1136 = vrot.lane.b32.xlu0 %v1124, 112
          %v1137 = vpop.permute.xlu0 %1136
          %1140 = vrot.lane.b32.xlu0 %v1121, 104
          %v1141 = vpop.permute.xlu0 %1140
          %1142 = vrot.lane.b32.xlu0 %v1124, 104
          %v1143 = vpop.permute.xlu0 %1142
          %v1146 = vrot.slane %v1135, 4
          %vm1147 = vcmask 1047556
          %v1148 = vsel %vm1147, %v1146, %v1121
          %v1149 = vrot.slane %v1121, 4
          %v1150 = vsel %vm1147, %v1135, %v1149
          %v1152 = vunpack.c.l.s4 1983009808
          %v1153 = vunpack.c.0.s8 %v1152
          %v1154 = vperm.slane %v1148, %v1153
          %v1156 = vunpack.c.l.s4 1983009808
          %v1157 = vunpack.c.0.s8 %v1156
          %v1158 = vperm.slane %v1150, %v1157
          %v1159 = vrot.slane %v1141, 4
          %v1160 = vsel %vm1147, %v1159, %v1129
          %v1161 = vrot.slane %v1129, 4
          %v1162 = vsel %vm1147, %v1141, %v1161
          %v1164 = vunpack.c.l.s4 1983009808
          %v1165 = vunpack.c.0.s8 %v1164
          %v1166 = vperm.slane %v1160, %v1165
          %v1168 = vunpack.c.l.s4 1983009808
          %v1169 = vunpack.c.0.s8 %v1168
          %v1170 = vperm.slane %v1162, %v1169
          %v1171 = vrot.slane %v1166, 4
          %v1172 = vsel %vm1147, %v1171, %v1154
          %v1173 = vrot.slane %v1154, 4
          %v1174 = vsel %vm1147, %v1166, %v1173
          %v1176 = vunpack.c.l.s4 1934713408
          %v1177 = vunpack.c.0.s8 %v1176
          %v1178 = vperm.slane %v1172, %v1177
          %v1180 = vunpack.c.l.s4 1934713408
          %v1181 = vunpack.c.0.s8 %v1180
          %v1182 = vperm.slane %v1174, %v1181
          %v1183 = vrot.slane %v1170, 4
          %v1184 = vsel %vm1147, %v1183, %v1158
          %v1185 = vrot.slane %v1158, 4
          %v1186 = vsel %vm1147, %v1170, %v1185
          %v1188 = vunpack.c.l.s4 1934713408
          %v1189 = vunpack.c.0.s8 %v1188
          %v1190 = vperm.slane %v1184, %v1189
          %v1192 = vunpack.c.l.s4 1934713408
          %v1193 = vunpack.c.0.s8 %v1192
          %v1194 = vperm.slane %v1186, %v1193
          %v1195 = vrot.slane %v1178, 4
          %v1196 = vsel %vm1147, 0.0, %v1195
          %v1197 = vrot.slane %v1182, 4
          %v1198 = vsel %vm1147, 0.0, %v1197
          %v1199 = vrot.slane %v1190, 4
          %v1200 = vsel %vm1147, 0.0, %v1199
          %v1201 = vrot.slane %v1194, 4
          %v1202 = vsel %vm1147, 0.0, %v1201
          %v1203 = vrot.slane %v1137, 4
          %v1204 = vsel %vm1147, %v1203, %v1124
          %v1205 = vrot.slane %v1124, 4
          %v1206 = vsel %vm1147, %v1137, %v1205
          %v1208 = vunpack.c.l.s4 1983009808
          %v1209 = vunpack.c.0.s8 %v1208
          %v1210 = vperm.slane %v1204, %v1209
          %v1212 = vunpack.c.l.s4 1983009808
          %v1213 = vunpack.c.0.s8 %v1212
          %v1214 = vperm.slane %v1206, %v1213
          %v1215 = vrot.slane %v1143, 4
          %v1216 = vsel %vm1147, %v1215, %v1131
          %v1217 = vrot.slane %v1131, 4
          %v1218 = vsel %vm1147, %v1143, %v1217
          %v1220 = vunpack.c.l.s4 1983009808
          %v1221 = vunpack.c.0.s8 %v1220
          %v1222 = vperm.slane %v1216, %v1221
          %v1224 = vunpack.c.l.s4 1983009808
          %v1225 = vunpack.c.0.s8 %v1224
          %v1226 = vperm.slane %v1218, %v1225
          %v1227 = vrot.slane %v1222, 4
          %v1228 = vsel %vm1147, %v1227, %v1210
          %v1229 = vrot.slane %v1210, 4
          %v1230 = vsel %vm1147, %v1222, %v1229
          %v1232 = vunpack.c.l.s4 1934713408
          %v1233 = vunpack.c.0.s8 %v1232
          %v1234 = vperm.slane %v1228, %v1233
          %v1236 = vunpack.c.l.s4 1934713408
          %v1237 = vunpack.c.0.s8 %v1236
          %v1238 = vperm.slane %v1230, %v1237
          %v1239 = vrot.slane %v1226, 4
          %v1240 = vsel %vm1147, %v1239, %v1214
          %v1241 = vrot.slane %v1214, 4
          %v1242 = vsel %vm1147, %v1226, %v1241
          %v1244 = vunpack.c.l.s4 1934713408
          %v1245 = vunpack.c.0.s8 %v1244
          %v1246 = vperm.slane %v1240, %v1245
          %v1248 = vunpack.c.l.s4 1934713408
          %v1249 = vunpack.c.0.s8 %v1248
          %v1250 = vperm.slane %v1242, %v1249
          %v1251 = vrot.slane %v1234, 4
          %v1252 = vsel %vm1147, 0.0, %v1251
          %v1253 = vrot.slane %v1238, 4
          %v1254 = vsel %vm1147, 0.0, %v1253
          %v1255 = vrot.slane %v1246, 4
          %v1256 = vsel %vm1147, 0.0, %v1255
          %v1257 = vrot.slane %v1250, 4
          %v1258 = vsel %vm1147, 0.0, %v1257
          %v1259 = vsel %vm1147, %v1197, %v1178
          %v1261 = vunpack.c.l.s4 1983009808
          %v1262 = vunpack.c.0.s8 %v1261
          %v1263 = vperm.slane %v1259, %v1262
          %v1264 = vrot.slane %v1198, 4
          %v1265 = vsel %vm1147, %v1264, %v1196
          %v1267 = vunpack.c.l.s4 1983009808
          %v1268 = vunpack.c.0.s8 %v1267
          %v1269 = vperm.slane %v1265, %v1268
          %v1270 = vsel %vm1147, %v1201, %v1190
          %v1272 = vunpack.c.l.s4 1983009808
          %v1273 = vunpack.c.0.s8 %v1272
          %v1274 = vperm.slane %v1270, %v1273
          %v1275 = vrot.slane %v1202, 4
          %v1276 = vsel %vm1147, %v1275, %v1200
          %v1278 = vunpack.c.l.s4 1983009808
          %v1279 = vunpack.c.0.s8 %v1278
          %v1280 = vperm.slane %v1276, %v1279
          %v1281 = vrot.slane %v1269, 4
          %v1282 = vsel %vm1147, %v1281, %v1263
          %v1283 = vrot.slane %v1263, 4
          %v1284 = vsel %vm1147, %v1269, %v1283
          %v1286 = vunpack.c.l.s4 1934713408
          %v1287 = vunpack.c.0.s8 %v1286
          %v1288 = vperm.slane %v1282, %v1287
          %v1290 = vunpack.c.l.s4 1934713408
          %v1291 = vunpack.c.0.s8 %v1290
          %v1292 = vperm.slane %v1284, %v1291
          %v1293 = vrot.slane %v1280, 4
          %v1294 = vsel %vm1147, %v1293, %v1274
          %v1295 = vrot.slane %v1274, 4
          %v1296 = vsel %vm1147, %v1280, %v1295
          %v1298 = vunpack.c.l.s4 1934713408
          %v1299 = vunpack.c.0.s8 %v1298
          %v1300 = vperm.slane %v1294, %v1299
          %v1302 = vunpack.c.l.s4 1934713408
          %v1303 = vunpack.c.0.s8 %v1302
          %v1304 = vperm.slane %v1296, %v1303
          %v1305 = vrot.slane %v1300, 4
          %v1306 = vsel %vm1147, %v1305, %v1288
          %v1307 = vrot.slane %v1288, 4
          %v1308 = vsel %vm1147, %v1300, %v1307
          %v1309 = vrot.slane %v1304, 4
          %v1310 = vsel %vm1147, %v1309, %v1292
          %v1311 = vrot.slane %v1292, 4
          %v1312 = vsel %vm1147, %v1304, %v1311
          %v1313 = vsel %vm1147, %v1253, %v1234
          %v1315 = vunpack.c.l.s4 1983009808
          %v1316 = vunpack.c.0.s8 %v1315
          %v1317 = vperm.slane %v1313, %v1316
          %v1318 = vrot.slane %v1254, 4
          %v1319 = vsel %vm1147, %v1318, %v1252
          %v1321 = vunpack.c.l.s4 1983009808
          %v1322 = vunpack.c.0.s8 %v1321
          %v1323 = vperm.slane %v1319, %v1322
          %v1324 = vsel %vm1147, %v1257, %v1246
          %v1326 = vunpack.c.l.s4 1983009808
          %v1327 = vunpack.c.0.s8 %v1326
          %v1328 = vperm.slane %v1324, %v1327
          %v1329 = vrot.slane %v1258, 4
          %v1330 = vsel %vm1147, %v1329, %v1256
          %v1332 = vunpack.c.l.s4 1983009808
          %v1333 = vunpack.c.0.s8 %v1332
          %v1334 = vperm.slane %v1330, %v1333
          %v1335 = vrot.slane %v1323, 4
          %v1336 = vsel %vm1147, %v1335, %v1317
          %v1337 = vrot.slane %v1317, 4
          %v1338 = vsel %vm1147, %v1323, %v1337
          %v1340 = vunpack.c.l.s4 1934713408
          %v1341 = vunpack.c.0.s8 %v1340
          %v1342 = vperm.slane %v1336, %v1341
          %v1344 = vunpack.c.l.s4 1934713408
          %v1345 = vunpack.c.0.s8 %v1344
          %v1346 = vperm.slane %v1338, %v1345
          %v1347 = vrot.slane %v1334, 4
          %v1348 = vsel %vm1147, %v1347, %v1328
          %v1349 = vrot.slane %v1328, 4
          %v1350 = vsel %vm1147, %v1334, %v1349
          %v1352 = vunpack.c.l.s4 1934713408
          %v1353 = vunpack.c.0.s8 %v1352
          %v1354 = vperm.slane %v1348, %v1353
          %v1356 = vunpack.c.l.s4 1934713408
          %v1357 = vunpack.c.0.s8 %v1356
          %v1358 = vperm.slane %v1350, %v1357
          %v1359 = vrot.slane %v1354, 4
          %v1360 = vsel %vm1147, %v1359, %v1342
          %v1361 = vrot.slane %v1342, 4
          %v1362 = vsel %vm1147, %v1354, %v1361
          %v1363 = vrot.slane %v1358, 4
          %v1364 = vsel %vm1147, %v1363, %v1346
          %v1365 = vrot.slane %v1346, 4
          %v1366 = vsel %vm1147, %v1358, %v1365
          %vm1367 = vcmask 64512
          %1368 = vst.msk [vmem:[#allocation3] sm:$0xff] %vm1367, %v1306
          %1369 = vst.msk [vmem:[#allocation3 + $0x8] sm:$0xff] %vm1367, %v1308
          %1370 = vst.msk [vmem:[#allocation3 + $0x10] sm:$0xff] %vm1367, %v1310
          %1371 = vst.msk [vmem:[#allocation3 + $0x18] sm:$0xff] %vm1367, %v1312
          %1372 = vst.msk [vmem:[#allocation3 + $0x20] sm:$0xff] %vm1367, %v1360
          %1373 = vst.msk [vmem:[#allocation3 + $0x28] sm:$0xff] %vm1367, %v1362
          %1374 = vst.msk [vmem:[#allocation3 + $0x30] sm:$0xff] %vm1367, %v1364
          %1375 = vst.msk [vmem:[#allocation3 + $0x38] sm:$0xff] %vm1367, %v1366
          %v1376 = vld [vmem:[#allocation10] sm:$0xff]
          %v1377 = vld [vmem:[#allocation10 + $0x8] sm:$0xff]
          %v1378 = vld [vmem:[#allocation10 + $0x10] sm:$0xff]
          %v1379 = vld [vmem:[#allocation10 + $0x18] sm:$0xff]
          %1380 = vmatpush.msra.mxu0 0.0
          %1381 = vmatpush.msra.mxu0 0.0
          %1382 = vmatpush.msra.mxu0 0.0
          %1383 = vmatpush.msra.mxu0 0.0
          %1384 = vmatpush.msra.mxu0 0.0
          %1385 = vmatpush.msra.mxu0 0.0
          %1386 = vmatpush.msra.mxu0 0.0
          %1387 = vmatpush.msra.mxu0 0.0
          %1388 = vmatpush.msra.mxu0 0.0
          %1389 = vmatpush.msra.mxu0 0.0
          %1390 = vmatpush.msra.mxu0 0.0
          %1391 = vmatpush.msra.mxu0 0.0
          %1392 = vmatpush.msra.mxu0 %v1379
          %1393 = vmatpush.msra.mxu0 %v1378
          %1394 = vmatpush.msra.mxu0 %v1377
          %1395 = vmatpush.msra.mxu0 %v1376
          %1396 = vmatmul.f32.gmra.mxu0 %v1098
          %v1397 = vpop.f32.mrf.mxu0
          %v1398 = vadd.f32 0.0, %v1397
          %1399 = vmatmul.f32.gmra.mxu0 %v1101
          %v1400 = vpop.f32.mrf.mxu0
          %v1401 = vadd.f32 0.0, %v1400
          %1402 = vdwg.mxu0
          %1405 = vrot.lane.b32.xlu0 %v1398, 120
          %v1406 = vpop.permute.xlu0 %1405
          %1407 = vrot.lane.b32.xlu0 %v1401, 120
          %v1408 = vpop.permute.xlu0 %1407
          %1411 = vrot.lane.b32.xlu0 %v1398, 112
          %v1412 = vpop.permute.xlu0 %1411
          %1413 = vrot.lane.b32.xlu0 %v1401, 112
          %v1414 = vpop.permute.xlu0 %1413
          %1417 = vrot.lane.b32.xlu0 %v1398, 104
          %v1418 = vpop.permute.xlu0 %1417
          %1419 = vrot.lane.b32.xlu0 %v1401, 104
          %v1420 = vpop.permute.xlu0 %1419
          %v1423 = vrot.slane %v1412, 4
          %v1424 = vsel %vm1147, %v1423, %v1398
          %v1425 = vrot.slane %v1398, 4
          %v1426 = vsel %vm1147, %v1412, %v1425
          %v1428 = vunpack.c.l.s4 1983009808
          %v1429 = vunpack.c.0.s8 %v1428
          %v1430 = vperm.slane %v1424, %v1429
          %v1432 = vunpack.c.l.s4 1983009808
          %v1433 = vunpack.c.0.s8 %v1432
          %v1434 = vperm.slane %v1426, %v1433
          %v1435 = vrot.slane %v1418, 4
          %v1436 = vsel %vm1147, %v1435, %v1406
          %v1437 = vrot.slane %v1406, 4
          %v1438 = vsel %vm1147, %v1418, %v1437
          %v1440 = vunpack.c.l.s4 1983009808
          %v1441 = vunpack.c.0.s8 %v1440
          %v1442 = vperm.slane %v1436, %v1441
          %v1444 = vunpack.c.l.s4 1983009808
          %v1445 = vunpack.c.0.s8 %v1444
          %v1446 = vperm.slane %v1438, %v1445
          %v1447 = vrot.slane %v1442, 4
          %v1448 = vsel %vm1147, %v1447, %v1430
          %v1449 = vrot.slane %v1430, 4
          %v1450 = vsel %vm1147, %v1442, %v1449
          %v1452 = vunpack.c.l.s4 1934713408
          %v1453 = vunpack.c.0.s8 %v1452
          %v1454 = vperm.slane %v1448, %v1453
          %v1456 = vunpack.c.l.s4 1934713408
          %v1457 = vunpack.c.0.s8 %v1456
          %v1458 = vperm.slane %v1450, %v1457
          %v1459 = vrot.slane %v1446, 4
          %v1460 = vsel %vm1147, %v1459, %v1434
          %v1461 = vrot.slane %v1434, 4
          %v1462 = vsel %vm1147, %v1446, %v1461
          %v1464 = vunpack.c.l.s4 1934713408
          %v1465 = vunpack.c.0.s8 %v1464
          %v1466 = vperm.slane %v1460, %v1465
          %v1468 = vunpack.c.l.s4 1934713408
          %v1469 = vunpack.c.0.s8 %v1468
          %v1470 = vperm.slane %v1462, %v1469
          %v1471 = vrot.slane %v1454, 4
          %v1472 = vsel %vm1147, 0.0, %v1471
          %v1473 = vrot.slane %v1458, 4
          %v1474 = vsel %vm1147, 0.0, %v1473
          %v1475 = vrot.slane %v1466, 4
          %v1476 = vsel %vm1147, 0.0, %v1475
          %v1477 = vrot.slane %v1470, 4
          %v1478 = vsel %vm1147, 0.0, %v1477
          %v1479 = vrot.slane %v1414, 4
          %v1480 = vsel %vm1147, %v1479, %v1401
          %v1481 = vrot.slane %v1401, 4
          %v1482 = vsel %vm1147, %v1414, %v1481
          %v1484 = vunpack.c.l.s4 1983009808
          %v1485 = vunpack.c.0.s8 %v1484
          %v1486 = vperm.slane %v1480, %v1485
          %v1488 = vunpack.c.l.s4 1983009808
          %v1489 = vunpack.c.0.s8 %v1488
          %v1490 = vperm.slane %v1482, %v1489
          %v1491 = vrot.slane %v1420, 4
          %v1492 = vsel %vm1147, %v1491, %v1408
          %v1493 = vrot.slane %v1408, 4
          %v1494 = vsel %vm1147, %v1420, %v1493
          %v1496 = vunpack.c.l.s4 1983009808
          %v1497 = vunpack.c.0.s8 %v1496
          %v1498 = vperm.slane %v1492, %v1497
          %v1500 = vunpack.c.l.s4 1983009808
          %v1501 = vunpack.c.0.s8 %v1500
          %v1502 = vperm.slane %v1494, %v1501
          %v1503 = vrot.slane %v1498, 4
          %v1504 = vsel %vm1147, %v1503, %v1486
          %v1505 = vrot.slane %v1486, 4
          %v1506 = vsel %vm1147, %v1498, %v1505
          %v1508 = vunpack.c.l.s4 1934713408
          %v1509 = vunpack.c.0.s8 %v1508
          %v1510 = vperm.slane %v1504, %v1509
          %v1512 = vunpack.c.l.s4 1934713408
          %v1513 = vunpack.c.0.s8 %v1512
          %v1514 = vperm.slane %v1506, %v1513
          %v1515 = vrot.slane %v1502, 4
          %v1516 = vsel %vm1147, %v1515, %v1490
          %v1517 = vrot.slane %v1490, 4
          %v1518 = vsel %vm1147, %v1502, %v1517
          %v1520 = vunpack.c.l.s4 1934713408
          %v1521 = vunpack.c.0.s8 %v1520
          %v1522 = vperm.slane %v1516, %v1521
          %v1524 = vunpack.c.l.s4 1934713408
          %v1525 = vunpack.c.0.s8 %v1524
          %v1526 = vperm.slane %v1518, %v1525
          %v1527 = vrot.slane %v1510, 4
          %v1528 = vsel %vm1147, 0.0, %v1527
          %v1529 = vrot.slane %v1514, 4
          %v1530 = vsel %vm1147, 0.0, %v1529
          %v1531 = vrot.slane %v1522, 4
          %v1532 = vsel %vm1147, 0.0, %v1531
          %v1533 = vrot.slane %v1526, 4
          %v1534 = vsel %vm1147, 0.0, %v1533
          %v1535 = vsel %vm1147, %v1473, %v1454
          %v1537 = vunpack.c.l.s4 1983009808
          %v1538 = vunpack.c.0.s8 %v1537
          %v1539 = vperm.slane %v1535, %v1538
          %v1540 = vrot.slane %v1474, 4
          %v1541 = vsel %vm1147, %v1540, %v1472
          %v1543 = vunpack.c.l.s4 1983009808
          %v1544 = vunpack.c.0.s8 %v1543
          %v1545 = vperm.slane %v1541, %v1544
          %v1546 = vsel %vm1147, %v1477, %v1466
          %v1548 = vunpack.c.l.s4 1983009808
          %v1549 = vunpack.c.0.s8 %v1548
          %v1550 = vperm.slane %v1546, %v1549
          %v1551 = vrot.slane %v1478, 4
          %v1552 = vsel %vm1147, %v1551, %v1476
          %v1554 = vunpack.c.l.s4 1983009808
          %v1555 = vunpack.c.0.s8 %v1554
          %v1556 = vperm.slane %v1552, %v1555
          %v1557 = vrot.slane %v1545, 4
          %v1558 = vsel %vm1147, %v1557, %v1539
          %v1559 = vrot.slane %v1539, 4
          %v1560 = vsel %vm1147, %v1545, %v1559
          %v1562 = vunpack.c.l.s4 1934713408
          %v1563 = vunpack.c.0.s8 %v1562
          %v1564 = vperm.slane %v1558, %v1563
          %v1566 = vunpack.c.l.s4 1934713408
          %v1567 = vunpack.c.0.s8 %v1566
          %v1568 = vperm.slane %v1560, %v1567
          %v1569 = vrot.slane %v1556, 4
          %v1570 = vsel %vm1147, %v1569, %v1550
          %v1571 = vrot.slane %v1550, 4
          %v1572 = vsel %vm1147, %v1556, %v1571
          %v1574 = vunpack.c.l.s4 1934713408
          %v1575 = vunpack.c.0.s8 %v1574
          %v1576 = vperm.slane %v1570, %v1575
          %v1578 = vunpack.c.l.s4 1934713408
          %v1579 = vunpack.c.0.s8 %v1578
          %v1580 = vperm.slane %v1572, %v1579
          %v1581 = vrot.slane %v1576, 4
          %v1582 = vsel %vm1147, %v1581, %v1564
          %v1583 = vrot.slane %v1564, 4
          %v1584 = vsel %vm1147, %v1576, %v1583
          %v1585 = vrot.slane %v1580, 4
          %v1586 = vsel %vm1147, %v1585, %v1568
          %v1587 = vrot.slane %v1568, 4
          %v1588 = vsel %vm1147, %v1580, %v1587
          %v1589 = vsel %vm1147, %v1529, %v1510
          %v1591 = vunpack.c.l.s4 1983009808
          %v1592 = vunpack.c.0.s8 %v1591
          %v1593 = vperm.slane %v1589, %v1592
          %v1594 = vrot.slane %v1530, 4
          %v1595 = vsel %vm1147, %v1594, %v1528
          %v1597 = vunpack.c.l.s4 1983009808
          %v1598 = vunpack.c.0.s8 %v1597
          %v1599 = vperm.slane %v1595, %v1598
          %v1600 = vsel %vm1147, %v1533, %v1522
          %v1602 = vunpack.c.l.s4 1983009808
          %v1603 = vunpack.c.0.s8 %v1602
          %v1604 = vperm.slane %v1600, %v1603
          %v1605 = vrot.slane %v1534, 4
          %v1606 = vsel %vm1147, %v1605, %v1532
          %v1608 = vunpack.c.l.s4 1983009808
          %v1609 = vunpack.c.0.s8 %v1608
          %v1610 = vperm.slane %v1606, %v1609
          %v1611 = vrot.slane %v1599, 4
          %v1612 = vsel %vm1147, %v1611, %v1593
          %v1613 = vrot.slane %v1593, 4
          %v1614 = vsel %vm1147, %v1599, %v1613
          %v1616 = vunpack.c.l.s4 1934713408
          %v1617 = vunpack.c.0.s8 %v1616
          %v1618 = vperm.slane %v1612, %v1617
          %v1620 = vunpack.c.l.s4 1934713408
          %v1621 = vunpack.c.0.s8 %v1620
          %v1622 = vperm.slane %v1614, %v1621
          %v1623 = vrot.slane %v1610, 4
          %v1624 = vsel %vm1147, %v1623, %v1604
          %v1625 = vrot.slane %v1604, 4
          %v1626 = vsel %vm1147, %v1610, %v1625
          %v1628 = vunpack.c.l.s4 1934713408
          %v1629 = vunpack.c.0.s8 %v1628
          %v1630 = vperm.slane %v1624, %v1629
          %v1632 = vunpack.c.l.s4 1934713408
          %v1633 = vunpack.c.0.s8 %v1632
          %v1634 = vperm.slane %v1626, %v1633
          %v1635 = vrot.slane %v1630, 4
          %v1636 = vsel %vm1147, %v1635, %v1618
          %v1637 = vrot.slane %v1618, 4
          %v1638 = vsel %vm1147, %v1630, %v1637
          %v1639 = vrot.slane %v1634, 4
          %v1640 = vsel %vm1147, %v1639, %v1622
          %v1641 = vrot.slane %v1622, 4
          %v1642 = vsel %vm1147, %v1634, %v1641
          %1643 = vst.msk [vmem:[#allocation4] sm:$0xff] %vm1367, %v1582
          %1644 = vst.msk [vmem:[#allocation4 + $0x8] sm:$0xff] %vm1367, %v1584
          %1645 = vst.msk [vmem:[#allocation4 + $0x10] sm:$0xff] %vm1367, %v1586
          %1646 = vst.msk [vmem:[#allocation4 + $0x18] sm:$0xff] %vm1367, %v1588
          %1647 = vst.msk [vmem:[#allocation4 + $0x20] sm:$0xff] %vm1367, %v1636
          %1648 = vst.msk [vmem:[#allocation4 + $0x28] sm:$0xff] %vm1367, %v1638
          %1649 = vst.msk [vmem:[#allocation4 + $0x30] sm:$0xff] %vm1367, %v1640
          %1650 = vst.msk [vmem:[#allocation4 + $0x38] sm:$0xff] %vm1367, %v1642
        $region132: #{tpu_custom_call.1} parent=103 // pred_fallthru
          _
        %v1651 = vld [vmem:[#allocation2] sm:$0xff]
        %v1652 = vld [vmem:[#allocation2 + $0x8] sm:$0xff]
        %v1653 = vld [vmem:[%s851] sm:$0xff]
        %v1654 = vld [vmem:[%s851 + $0x8] sm:$0xff]
        %v1655 = vld [vmem:[%s1036] sm:$0xff]
        %v1656 = vld [vmem:[%s1036 + $0x8] sm:$0xff]
        %v1657 = vld [vmem:[%s1036 + $0x10] sm:$0xff]
        %v1658 = vld [vmem:[%s1036 + $0x18] sm:$0xff]
        %v1659 = vld [vmem:[%s1039] sm:$0x1]
        %v1661 = vperm.slane %v1659, 0
        %vm1663 = vcmask 261120
        %v1665 = vsel %vm1663, %v1651, 0
        %v1668 = vsel %vm1663, %v1652, 0
        %1670 = vmatpush.msra.mxu0 0.0
        %1671 = vmatpush.msra.mxu0 0.0
        %1672 = vmatpush.msra.mxu0 0.0
        %1673 = vmatpush.msra.mxu0 0.0
        %1674 = vmatpush.msra.mxu0 0.0
        %1675 = vmatpush.msra.mxu0 0.0
        %1676 = vmatpush.msra.mxu0 0.0
        %1677 = vmatpush.msra.mxu0 0.0
        %1678 = vmatpush.msra.mxu0 0.0
        %1679 = vmatpush.msra.mxu0 0.0
        %1680 = vmatpush.msra.mxu0 0.0
        %1681 = vmatpush.msra.mxu0 0.0
        %1682 = vmatpush.msra.mxu0 %v1658
        %1683 = vmatpush.msra.mxu0 %v1657
        %1684 = vmatpush.msra.mxu0 %v1656
        %1685 = vmatpush.msra.mxu0 %v1655
        %1686 = vmatmul.f32.gmra.mxu0 %v1665
        %v1687 = vpop.f32.mrf.mxu0
        %v1688 = vadd.f32 %v1661, %v1687
        %1689 = vmatmul.f32.gmra.mxu0 %v1668
        %v1690 = vpop.f32.mrf.mxu0
        %v1691 = vadd.f32 %v1661, %v1690
        %1692 = vdwg.mxu0
        %1695 = vrot.lane.b32.xlu0 %v1688, 120
        %v1696 = vpop.permute.xlu0 %1695
        %1697 = vrot.lane.b32.xlu0 %v1691, 120
        %v1698 = vpop.permute.xlu0 %1697
        %1701 = vrot.lane.b32.xlu0 %v1688, 112
        %v1702 = vpop.permute.xlu0 %1701
        %1703 = vrot.lane.b32.xlu0 %v1691, 112
        %v1704 = vpop.permute.xlu0 %1703
        %1707 = vrot.lane.b32.xlu0 %v1688, 104
        %v1708 = vpop.permute.xlu0 %1707
        %1709 = vrot.lane.b32.xlu0 %v1691, 104
        %v1710 = vpop.permute.xlu0 %1709
        %v1713 = vrot.slane %v1702, 4
        %vm1714 = vcmask 1047556
        %v1715 = vsel %vm1714, %v1713, %v1688
        %v1716 = vrot.slane %v1688, 4
        %v1717 = vsel %vm1714, %v1702, %v1716
        %v1719 = vunpack.c.l.s4 1983009808
        %v1720 = vunpack.c.0.s8 %v1719
        %v1721 = vperm.slane %v1715, %v1720
        %v1723 = vunpack.c.l.s4 1983009808
        %v1724 = vunpack.c.0.s8 %v1723
        %v1725 = vperm.slane %v1717, %v1724
        %v1726 = vrot.slane %v1708, 4
        %v1727 = vsel %vm1714, %v1726, %v1696
        %v1728 = vrot.slane %v1696, 4
        %v1729 = vsel %vm1714, %v1708, %v1728
        %v1731 = vunpack.c.l.s4 1983009808
        %v1732 = vunpack.c.0.s8 %v1731
        %v1733 = vperm.slane %v1727, %v1732
        %v1735 = vunpack.c.l.s4 1983009808
        %v1736 = vunpack.c.0.s8 %v1735
        %v1737 = vperm.slane %v1729, %v1736
        %v1738 = vrot.slane %v1733, 4
        %v1739 = vsel %vm1714, %v1738, %v1721
        %v1740 = vrot.slane %v1721, 4
        %v1741 = vsel %vm1714, %v1733, %v1740
        %v1743 = vunpack.c.l.s4 1934713408
        %v1744 = vunpack.c.0.s8 %v1743
        %v1745 = vperm.slane %v1739, %v1744
        %v1747 = vunpack.c.l.s4 1934713408
        %v1748 = vunpack.c.0.s8 %v1747
        %v1749 = vperm.slane %v1741, %v1748
        %v1750 = vrot.slane %v1737, 4
        %v1751 = vsel %vm1714, %v1750, %v1725
        %v1752 = vrot.slane %v1725, 4
        %v1753 = vsel %vm1714, %v1737, %v1752
        %v1755 = vunpack.c.l.s4 1934713408
        %v1756 = vunpack.c.0.s8 %v1755
        %v1757 = vperm.slane %v1751, %v1756
        %v1759 = vunpack.c.l.s4 1934713408
        %v1760 = vunpack.c.0.s8 %v1759
        %v1761 = vperm.slane %v1753, %v1760
        %v1762 = vrot.slane %v1745, 4
        %v1763 = vsel %vm1714, 0.0, %v1762
        %v1764 = vrot.slane %v1749, 4
        %v1765 = vsel %vm1714, 0.0, %v1764
        %v1766 = vrot.slane %v1757, 4
        %v1767 = vsel %vm1714, 0.0, %v1766
        %v1768 = vrot.slane %v1761, 4
        %v1769 = vsel %vm1714, 0.0, %v1768
        %v1770 = vrot.slane %v1704, 4
        %v1771 = vsel %vm1714, %v1770, %v1691
        %v1772 = vrot.slane %v1691, 4
        %v1773 = vsel %vm1714, %v1704, %v1772
        %v1775 = vunpack.c.l.s4 1983009808
        %v1776 = vunpack.c.0.s8 %v1775
        %v1777 = vperm.slane %v1771, %v1776
        %v1779 = vunpack.c.l.s4 1983009808
        %v1780 = vunpack.c.0.s8 %v1779
        %v1781 = vperm.slane %v1773, %v1780
        %v1782 = vrot.slane %v1710, 4
        %v1783 = vsel %vm1714, %v1782, %v1698
        %v1784 = vrot.slane %v1698, 4
        %v1785 = vsel %vm1714, %v1710, %v1784
        %v1787 = vunpack.c.l.s4 1983009808
        %v1788 = vunpack.c.0.s8 %v1787
        %v1789 = vperm.slane %v1783, %v1788
        %v1791 = vunpack.c.l.s4 1983009808
        %v1792 = vunpack.c.0.s8 %v1791
        %v1793 = vperm.slane %v1785, %v1792
        %v1794 = vrot.slane %v1789, 4
        %v1795 = vsel %vm1714, %v1794, %v1777
        %v1796 = vrot.slane %v1777, 4
        %v1797 = vsel %vm1714, %v1789, %v1796
        %v1799 = vunpack.c.l.s4 1934713408
        %v1800 = vunpack.c.0.s8 %v1799
        %v1801 = vperm.slane %v1795, %v1800
        %v1803 = vunpack.c.l.s4 1934713408
        %v1804 = vunpack.c.0.s8 %v1803
        %v1805 = vperm.slane %v1797, %v1804
        %v1806 = vrot.slane %v1793, 4
        %v1807 = vsel %vm1714, %v1806, %v1781
        %v1808 = vrot.slane %v1781, 4
        %v1809 = vsel %vm1714, %v1793, %v1808
        %v1811 = vunpack.c.l.s4 1934713408
        %v1812 = vunpack.c.0.s8 %v1811
        %v1813 = vperm.slane %v1807, %v1812
        %v1815 = vunpack.c.l.s4 1934713408
        %v1816 = vunpack.c.0.s8 %v1815
        %v1817 = vperm.slane %v1809, %v1816
        %v1818 = vrot.slane %v1801, 4
        %v1819 = vsel %vm1714, 0.0, %v1818
        %v1820 = vrot.slane %v1805, 4
        %v1821 = vsel %vm1714, 0.0, %v1820
        %v1822 = vrot.slane %v1813, 4
        %v1823 = vsel %vm1714, 0.0, %v1822
        %v1824 = vrot.slane %v1817, 4
        %v1825 = vsel %vm1714, 0.0, %v1824
        %v1826 = vsel %vm1714, %v1764, %v1745
        %v1828 = vunpack.c.l.s4 1983009808
        %v1829 = vunpack.c.0.s8 %v1828
        %v1830 = vperm.slane %v1826, %v1829
        %v1831 = vrot.slane %v1765, 4
        %v1832 = vsel %vm1714, %v1831, %v1763
        %v1834 = vunpack.c.l.s4 1983009808
        %v1835 = vunpack.c.0.s8 %v1834
        %v1836 = vperm.slane %v1832, %v1835
        %v1837 = vsel %vm1714, %v1768, %v1757
        %v1839 = vunpack.c.l.s4 1983009808
        %v1840 = vunpack.c.0.s8 %v1839
        %v1841 = vperm.slane %v1837, %v1840
        %v1842 = vrot.slane %v1769, 4
        %v1843 = vsel %vm1714, %v1842, %v1767
        %v1845 = vunpack.c.l.s4 1983009808
        %v1846 = vunpack.c.0.s8 %v1845
        %v1847 = vperm.slane %v1843, %v1846
        %v1848 = vrot.slane %v1836, 4
        %v1849 = vsel %vm1714, %v1848, %v1830
        %v1850 = vrot.slane %v1830, 4
        %v1851 = vsel %vm1714, %v1836, %v1850
        %v1853 = vunpack.c.l.s4 1934713408
        %v1854 = vunpack.c.0.s8 %v1853
        %v1855 = vperm.slane %v1849, %v1854
        %v1857 = vunpack.c.l.s4 1934713408
        %v1858 = vunpack.c.0.s8 %v1857
        %v1859 = vperm.slane %v1851, %v1858
        %v1860 = vrot.slane %v1847, 4
        %v1861 = vsel %vm1714, %v1860, %v1841
        %v1862 = vrot.slane %v1841, 4
        %v1863 = vsel %vm1714, %v1847, %v1862
        %v1865 = vunpack.c.l.s4 1934713408
        %v1866 = vunpack.c.0.s8 %v1865
        %v1867 = vperm.slane %v1861, %v1866
        %v1869 = vunpack.c.l.s4 1934713408
        %v1870 = vunpack.c.0.s8 %v1869
        %v1871 = vperm.slane %v1863, %v1870
        %v1872 = vrot.slane %v1867, 4
        %v1873 = vsel %vm1714, %v1872, %v1855
        %v1874 = vrot.slane %v1855, 4
        %v1875 = vsel %vm1714, %v1867, %v1874
        %v1876 = vrot.slane %v1871, 4
        %v1877 = vsel %vm1714, %v1876, %v1859
        %v1878 = vrot.slane %v1859, 4
        %v1879 = vsel %vm1714, %v1871, %v1878
        %v1880 = vsel %vm1714, %v1820, %v1801
        %v1882 = vunpack.c.l.s4 1983009808
        %v1883 = vunpack.c.0.s8 %v1882
        %v1884 = vperm.slane %v1880, %v1883
        %v1885 = vrot.slane %v1821, 4
        %v1886 = vsel %vm1714, %v1885, %v1819
        %v1888 = vunpack.c.l.s4 1983009808
        %v1889 = vunpack.c.0.s8 %v1888
        %v1890 = vperm.slane %v1886, %v1889
        %v1891 = vsel %vm1714, %v1824, %v1813
        %v1893 = vunpack.c.l.s4 1983009808
        %v1894 = vunpack.c.0.s8 %v1893
        %v1895 = vperm.slane %v1891, %v1894
        %v1896 = vrot.slane %v1825, 4
        %v1897 = vsel %vm1714, %v1896, %v1823
        %v1899 = vunpack.c.l.s4 1983009808
        %v1900 = vunpack.c.0.s8 %v1899
        %v1901 = vperm.slane %v1897, %v1900
        %v1902 = vrot.slane %v1890, 4
        %v1903 = vsel %vm1714, %v1902, %v1884
        %v1904 = vrot.slane %v1884, 4
        %v1905 = vsel %vm1714, %v1890, %v1904
        %v1907 = vunpack.c.l.s4 1934713408
        %v1908 = vunpack.c.0.s8 %v1907
        %v1909 = vperm.slane %v1903, %v1908
        %v1911 = vunpack.c.l.s4 1934713408
        %v1912 = vunpack.c.0.s8 %v1911
        %v1913 = vperm.slane %v1905, %v1912
        %v1914 = vrot.slane %v1901, 4
        %v1915 = vsel %vm1714, %v1914, %v1895
        %v1916 = vrot.slane %v1895, 4
        %v1917 = vsel %vm1714, %v1901, %v1916
        %v1919 = vunpack.c.l.s4 1934713408
        %v1920 = vunpack.c.0.s8 %v1919
        %v1921 = vperm.slane %v1915, %v1920
        %v1923 = vunpack.c.l.s4 1934713408
        %v1924 = vunpack.c.0.s8 %v1923
        %v1925 = vperm.slane %v1917, %v1924
        %v1926 = vrot.slane %v1921, 4
        %v1927 = vsel %vm1714, %v1926, %v1909
        %v1928 = vrot.slane %v1909, 4
        %v1929 = vsel %vm1714, %v1921, %v1928
        %v1930 = vrot.slane %v1925, 4
        %v1931 = vsel %vm1714, %v1930, %v1913
        %v1932 = vrot.slane %v1913, 4
        %v1933 = vsel %vm1714, %v1925, %v1932
        %1934 = vrot.lane.b32.xlu0 %v1688, 96
        %v1935 = vpop.permute.xlu0 %1934
        %1936 = vrot.lane.b32.xlu0 %v1691, 96
        %v1937 = vpop.permute.xlu0 %1936
        %1938 = vrot.lane.b32.xlu0 %v1696, 96
        %v1939 = vpop.permute.xlu0 %1938
        %1940 = vrot.lane.b32.xlu0 %v1698, 96
        %v1941 = vpop.permute.xlu0 %1940
        %1942 = vrot.lane.b32.xlu0 %v1702, 96
        %v1943 = vpop.permute.xlu0 %1942
        %1944 = vrot.lane.b32.xlu0 %v1704, 96
        %v1945 = vpop.permute.xlu0 %1944
        %1946 = vrot.lane.b32.xlu0 %v1708, 96
        %v1947 = vpop.permute.xlu0 %1946
        %1948 = vrot.lane.b32.xlu0 %v1710, 96
        %v1949 = vpop.permute.xlu0 %1948
        %v1958 = vrot.slane %v1943, 4
        %v1959 = vsel %vm1714, %v1958, %v1935
        %v1960 = vrot.slane %v1935, 4
        %v1961 = vsel %vm1714, %v1943, %v1960
        %v1963 = vunpack.c.l.s4 1983009808
        %v1964 = vunpack.c.0.s8 %v1963
        %v1965 = vperm.slane %v1959, %v1964
        %v1967 = vunpack.c.l.s4 1983009808
        %v1968 = vunpack.c.0.s8 %v1967
        %v1969 = vperm.slane %v1961, %v1968
        %v1970 = vrot.slane %v1947, 4
        %v1971 = vsel %vm1714, %v1970, %v1939
        %v1972 = vrot.slane %v1939, 4
        %v1973 = vsel %vm1714, %v1947, %v1972
        %v1975 = vunpack.c.l.s4 1983009808
        %v1976 = vunpack.c.0.s8 %v1975
        %v1977 = vperm.slane %v1971, %v1976
        %v1979 = vunpack.c.l.s4 1983009808
        %v1980 = vunpack.c.0.s8 %v1979
        %v1981 = vperm.slane %v1973, %v1980
        %v1982 = vrot.slane %v1977, 4
        %v1983 = vsel %vm1714, %v1982, %v1965
        %v1984 = vrot.slane %v1965, 4
        %v1985 = vsel %vm1714, %v1977, %v1984
        %v1987 = vunpack.c.l.s4 1934713408
        %v1988 = vunpack.c.0.s8 %v1987
        %v1989 = vperm.slane %v1983, %v1988
        %v1991 = vunpack.c.l.s4 1934713408
        %v1992 = vunpack.c.0.s8 %v1991
        %v1993 = vperm.slane %v1985, %v1992
        %v1994 = vrot.slane %v1981, 4
        %v1995 = vsel %vm1714, %v1994, %v1969
        %v1996 = vrot.slane %v1969, 4
        %v1997 = vsel %vm1714, %v1981, %v1996
        %v1999 = vunpack.c.l.s4 1934713408
        %v2000 = vunpack.c.0.s8 %v1999
        %v2001 = vperm.slane %v1995, %v2000
        %v2003 = vunpack.c.l.s4 1934713408
        %v2004 = vunpack.c.0.s8 %v2003
        %v2005 = vperm.slane %v1997, %v2004
        %v2006 = vrot.slane %v1989, 4
        %v2007 = vsel %vm1714, 0.0, %v2006
        %v2008 = vrot.slane %v1993, 4
        %v2009 = vsel %vm1714, 0.0, %v2008
        %v2010 = vrot.slane %v2001, 4
        %v2011 = vsel %vm1714, 0.0, %v2010
        %v2012 = vrot.slane %v2005, 4
        %v2013 = vsel %vm1714, 0.0, %v2012
        %v2014 = vrot.slane %v1945, 4
        %v2015 = vsel %vm1714, %v2014, %v1937
        %v2016 = vrot.slane %v1937, 4
        %v2017 = vsel %vm1714, %v1945, %v2016
        %v2019 = vunpack.c.l.s4 1983009808
        %v2020 = vunpack.c.0.s8 %v2019
        %v2021 = vperm.slane %v2015, %v2020
        %v2023 = vunpack.c.l.s4 1983009808
        %v2024 = vunpack.c.0.s8 %v2023
        %v2025 = vperm.slane %v2017, %v2024
        %v2026 = vrot.slane %v1949, 4
        %v2027 = vsel %vm1714, %v2026, %v1941
        %v2028 = vrot.slane %v1941, 4
        %v2029 = vsel %vm1714, %v1949, %v2028
        %v2031 = vunpack.c.l.s4 1983009808
        %v2032 = vunpack.c.0.s8 %v2031
        %v2033 = vperm.slane %v2027, %v2032
        %v2035 = vunpack.c.l.s4 1983009808
        %v2036 = vunpack.c.0.s8 %v2035
        %v2037 = vperm.slane %v2029, %v2036
        %v2038 = vrot.slane %v2033, 4
        %v2039 = vsel %vm1714, %v2038, %v2021
        %v2040 = vrot.slane %v2021, 4
        %v2041 = vsel %vm1714, %v2033, %v2040
        %v2043 = vunpack.c.l.s4 1934713408
        %v2044 = vunpack.c.0.s8 %v2043
        %v2045 = vperm.slane %v2039, %v2044
        %v2047 = vunpack.c.l.s4 1934713408
        %v2048 = vunpack.c.0.s8 %v2047
        %v2049 = vperm.slane %v2041, %v2048
        %v2050 = vrot.slane %v2037, 4
        %v2051 = vsel %vm1714, %v2050, %v2025
        %v2052 = vrot.slane %v2025, 4
        %v2053 = vsel %vm1714, %v2037, %v2052
        %v2055 = vunpack.c.l.s4 1934713408
        %v2056 = vunpack.c.0.s8 %v2055
        %v2057 = vperm.slane %v2051, %v2056
        %v2059 = vunpack.c.l.s4 1934713408
        %v2060 = vunpack.c.0.s8 %v2059
        %v2061 = vperm.slane %v2053, %v2060
        %v2062 = vrot.slane %v2045, 4
        %v2063 = vsel %vm1714, 0.0, %v2062
        %v2064 = vrot.slane %v2049, 4
        %v2065 = vsel %vm1714, 0.0, %v2064
        %v2066 = vrot.slane %v2057, 4
        %v2067 = vsel %vm1714, 0.0, %v2066
        %v2068 = vrot.slane %v2061, 4
        %v2069 = vsel %vm1714, 0.0, %v2068
        %v2070 = vsel %vm1714, %v2008, %v1989
        %v2072 = vunpack.c.l.s4 1983009808
        %v2073 = vunpack.c.0.s8 %v2072
        %v2074 = vperm.slane %v2070, %v2073
        %v2075 = vrot.slane %v2009, 4
        %v2076 = vsel %vm1714, %v2075, %v2007
        %v2078 = vunpack.c.l.s4 1983009808
        %v2079 = vunpack.c.0.s8 %v2078
        %v2080 = vperm.slane %v2076, %v2079
        %v2081 = vsel %vm1714, %v2012, %v2001
        %v2083 = vunpack.c.l.s4 1983009808
        %v2084 = vunpack.c.0.s8 %v2083
        %v2085 = vperm.slane %v2081, %v2084
        %v2086 = vrot.slane %v2013, 4
        %v2087 = vsel %vm1714, %v2086, %v2011
        %v2089 = vunpack.c.l.s4 1983009808
        %v2090 = vunpack.c.0.s8 %v2089
        %v2091 = vperm.slane %v2087, %v2090
        %v2092 = vrot.slane %v2080, 4
        %v2093 = vsel %vm1714, %v2092, %v2074
        %v2094 = vrot.slane %v2074, 4
        %v2095 = vsel %vm1714, %v2080, %v2094
        %v2097 = vunpack.c.l.s4 1934713408
        %v2098 = vunpack.c.0.s8 %v2097
        %v2099 = vperm.slane %v2093, %v2098
        %v2101 = vunpack.c.l.s4 1934713408
        %v2102 = vunpack.c.0.s8 %v2101
        %v2103 = vperm.slane %v2095, %v2102
        %v2104 = vrot.slane %v2091, 4
        %v2105 = vsel %vm1714, %v2104, %v2085
        %v2106 = vrot.slane %v2085, 4
        %v2107 = vsel %vm1714, %v2091, %v2106
        %v2109 = vunpack.c.l.s4 1934713408
        %v2110 = vunpack.c.0.s8 %v2109
        %v2111 = vperm.slane %v2105, %v2110
        %v2113 = vunpack.c.l.s4 1934713408
        %v2114 = vunpack.c.0.s8 %v2113
        %v2115 = vperm.slane %v2107, %v2114
        %v2116 = vrot.slane %v2111, 4
        %v2117 = vsel %vm1714, %v2116, %v2099
        %v2118 = vrot.slane %v2099, 4
        %v2119 = vsel %vm1714, %v2111, %v2118
        %v2120 = vrot.slane %v2115, 4
        %v2121 = vsel %vm1714, %v2120, %v2103
        %v2122 = vrot.slane %v2103, 4
        %v2123 = vsel %vm1714, %v2115, %v2122
        %v2124 = vsel %vm1714, %v2064, %v2045
        %v2126 = vunpack.c.l.s4 1983009808
        %v2127 = vunpack.c.0.s8 %v2126
        %v2128 = vperm.slane %v2124, %v2127
        %v2129 = vrot.slane %v2065, 4
        %v2130 = vsel %vm1714, %v2129, %v2063
        %v2132 = vunpack.c.l.s4 1983009808
        %v2133 = vunpack.c.0.s8 %v2132
        %v2134 = vperm.slane %v2130, %v2133
        %v2135 = vsel %vm1714, %v2068, %v2057
        %v2137 = vunpack.c.l.s4 1983009808
        %v2138 = vunpack.c.0.s8 %v2137
        %v2139 = vperm.slane %v2135, %v2138
        %v2140 = vrot.slane %v2069, 4
        %v2141 = vsel %vm1714, %v2140, %v2067
        %v2143 = vunpack.c.l.s4 1983009808
        %v2144 = vunpack.c.0.s8 %v2143
        %v2145 = vperm.slane %v2141, %v2144
        %v2146 = vrot.slane %v2134, 4
        %v2147 = vsel %vm1714, %v2146, %v2128
        %v2148 = vrot.slane %v2128, 4
        %v2149 = vsel %vm1714, %v2134, %v2148
        %v2151 = vunpack.c.l.s4 1934713408
        %v2152 = vunpack.c.0.s8 %v2151
        %v2153 = vperm.slane %v2147, %v2152
        %v2155 = vunpack.c.l.s4 1934713408
        %v2156 = vunpack.c.0.s8 %v2155
        %v2157 = vperm.slane %v2149, %v2156
        %v2158 = vrot.slane %v2145, 4
        %v2159 = vsel %vm1714, %v2158, %v2139
        %v2160 = vrot.slane %v2139, 4
        %v2161 = vsel %vm1714, %v2145, %v2160
        %v2163 = vunpack.c.l.s4 1934713408
        %v2164 = vunpack.c.0.s8 %v2163
        %v2165 = vperm.slane %v2159, %v2164
        %v2167 = vunpack.c.l.s4 1934713408
        %v2168 = vunpack.c.0.s8 %v2167
        %v2169 = vperm.slane %v2161, %v2168
        %v2170 = vrot.slane %v2165, 4
        %v2171 = vsel %vm1714, %v2170, %v2153
        %v2172 = vrot.slane %v2153, 4
        %v2173 = vsel %vm1714, %v2165, %v2172
        %v2174 = vrot.slane %v2169, 4
        %v2175 = vsel %vm1714, %v2174, %v2157
        %v2176 = vrot.slane %v2157, 4
        %v2177 = vsel %vm1714, %v2169, %v2176
        %2178 = vrot.lane.b32.xlu0 %v1688, 64
        %v2179 = vpop.permute.xlu0 %2178
        %2180 = vrot.lane.b32.xlu0 %v1691, 64
        %v2181 = vpop.permute.xlu0 %2180
        %2182 = vrot.lane.b32.xlu0 %v1696, 64
        %v2183 = vpop.permute.xlu0 %2182
        %2184 = vrot.lane.b32.xlu0 %v1698, 64
        %v2185 = vpop.permute.xlu0 %2184
        %2186 = vrot.lane.b32.xlu0 %v1702, 64
        %v2187 = vpop.permute.xlu0 %2186
        %2188 = vrot.lane.b32.xlu0 %v1704, 64
        %v2189 = vpop.permute.xlu0 %2188
        %2190 = vrot.lane.b32.xlu0 %v1708, 64
        %v2191 = vpop.permute.xlu0 %2190
        %2192 = vrot.lane.b32.xlu0 %v1710, 64
        %v2193 = vpop.permute.xlu0 %2192
        %v2202 = vrot.slane %v2187, 4
        %v2203 = vsel %vm1714, %v2202, %v2179
        %v2204 = vrot.slane %v2179, 4
        %v2205 = vsel %vm1714, %v2187, %v2204
        %v2207 = vunpack.c.l.s4 1983009808
        %v2208 = vunpack.c.0.s8 %v2207
        %v2209 = vperm.slane %v2203, %v2208
        %v2211 = vunpack.c.l.s4 1983009808
        %v2212 = vunpack.c.0.s8 %v2211
        %v2213 = vperm.slane %v2205, %v2212
        %v2214 = vrot.slane %v2191, 4
        %v2215 = vsel %vm1714, %v2214, %v2183
        %v2216 = vrot.slane %v2183, 4
        %v2217 = vsel %vm1714, %v2191, %v2216
        %v2219 = vunpack.c.l.s4 1983009808
        %v2220 = vunpack.c.0.s8 %v2219
        %v2221 = vperm.slane %v2215, %v2220
        %v2223 = vunpack.c.l.s4 1983009808
        %v2224 = vunpack.c.0.s8 %v2223
        %v2225 = vperm.slane %v2217, %v2224
        %v2226 = vrot.slane %v2221, 4
        %v2227 = vsel %vm1714, %v2226, %v2209
        %v2228 = vrot.slane %v2209, 4
        %v2229 = vsel %vm1714, %v2221, %v2228
        %v2231 = vunpack.c.l.s4 1934713408
        %v2232 = vunpack.c.0.s8 %v2231
        %v2233 = vperm.slane %v2227, %v2232
        %v2235 = vunpack.c.l.s4 1934713408
        %v2236 = vunpack.c.0.s8 %v2235
        %v2237 = vperm.slane %v2229, %v2236
        %v2238 = vrot.slane %v2225, 4
        %v2239 = vsel %vm1714, %v2238, %v2213
        %v2240 = vrot.slane %v2213, 4
        %v2241 = vsel %vm1714, %v2225, %v2240
        %v2243 = vunpack.c.l.s4 1934713408
        %v2244 = vunpack.c.0.s8 %v2243
        %v2245 = vperm.slane %v2239, %v2244
        %v2247 = vunpack.c.l.s4 1934713408
        %v2248 = vunpack.c.0.s8 %v2247
        %v2249 = vperm.slane %v2241, %v2248
        %v2250 = vrot.slane %v2233, 4
        %v2251 = vsel %vm1714, 0.0, %v2250
        %v2252 = vrot.slane %v2237, 4
        %v2253 = vsel %vm1714, 0.0, %v2252
        %v2254 = vrot.slane %v2245, 4
        %v2255 = vsel %vm1714, 0.0, %v2254
        %v2256 = vrot.slane %v2249, 4
        %v2257 = vsel %vm1714, 0.0, %v2256
        %v2258 = vrot.slane %v2189, 4
        %v2259 = vsel %vm1714, %v2258, %v2181
        %v2260 = vrot.slane %v2181, 4
        %v2261 = vsel %vm1714, %v2189, %v2260
        %v2263 = vunpack.c.l.s4 1983009808
        %v2264 = vunpack.c.0.s8 %v2263
        %v2265 = vperm.slane %v2259, %v2264
        %v2267 = vunpack.c.l.s4 1983009808
        %v2268 = vunpack.c.0.s8 %v2267
        %v2269 = vperm.slane %v2261, %v2268
        %v2270 = vrot.slane %v2193, 4
        %v2271 = vsel %vm1714, %v2270, %v2185
        %v2272 = vrot.slane %v2185, 4
        %v2273 = vsel %vm1714, %v2193, %v2272
        %v2275 = vunpack.c.l.s4 1983009808
        %v2276 = vunpack.c.0.s8 %v2275
        %v2277 = vperm.slane %v2271, %v2276
        %v2279 = vunpack.c.l.s4 1983009808
        %v2280 = vunpack.c.0.s8 %v2279
        %v2281 = vperm.slane %v2273, %v2280
        %v2282 = vrot.slane %v2277, 4
        %v2283 = vsel %vm1714, %v2282, %v2265
        %v2284 = vrot.slane %v2265, 4
        %v2285 = vsel %vm1714, %v2277, %v2284
        %v2287 = vunpack.c.l.s4 1934713408
        %v2288 = vunpack.c.0.s8 %v2287
        %v2289 = vperm.slane %v2283, %v2288
        %v2291 = vunpack.c.l.s4 1934713408
        %v2292 = vunpack.c.0.s8 %v2291
        %v2293 = vperm.slane %v2285, %v2292
        %v2294 = vrot.slane %v2281, 4
        %v2295 = vsel %vm1714, %v2294, %v2269
        %v2296 = vrot.slane %v2269, 4
        %v2297 = vsel %vm1714, %v2281, %v2296
        %v2299 = vunpack.c.l.s4 1934713408
        %v2300 = vunpack.c.0.s8 %v2299
        %v2301 = vperm.slane %v2295, %v2300
        %v2303 = vunpack.c.l.s4 1934713408
        %v2304 = vunpack.c.0.s8 %v2303
        %v2305 = vperm.slane %v2297, %v2304
        %v2306 = vrot.slane %v2289, 4
        %v2307 = vsel %vm1714, 0.0, %v2306
        %v2308 = vrot.slane %v2293, 4
        %v2309 = vsel %vm1714, 0.0, %v2308
        %v2310 = vrot.slane %v2301, 4
        %v2311 = vsel %vm1714, 0.0, %v2310
        %v2312 = vrot.slane %v2305, 4
        %v2313 = vsel %vm1714, 0.0, %v2312
        %v2314 = vsel %vm1714, %v2252, %v2233
        %v2316 = vunpack.c.l.s4 1983009808
        %v2317 = vunpack.c.0.s8 %v2316
        %v2318 = vperm.slane %v2314, %v2317
        %v2319 = vrot.slane %v2253, 4
        %v2320 = vsel %vm1714, %v2319, %v2251
        %v2322 = vunpack.c.l.s4 1983009808
        %v2323 = vunpack.c.0.s8 %v2322
        %v2324 = vperm.slane %v2320, %v2323
        %v2325 = vsel %vm1714, %v2256, %v2245
        %v2327 = vunpack.c.l.s4 1983009808
        %v2328 = vunpack.c.0.s8 %v2327
        %v2329 = vperm.slane %v2325, %v2328
        %v2330 = vrot.slane %v2257, 4
        %v2331 = vsel %vm1714, %v2330, %v2255
        %v2333 = vunpack.c.l.s4 1983009808
        %v2334 = vunpack.c.0.s8 %v2333
        %v2335 = vperm.slane %v2331, %v2334
        %v2336 = vrot.slane %v2324, 4
        %v2337 = vsel %vm1714, %v2336, %v2318
        %v2338 = vrot.slane %v2318, 4
        %v2339 = vsel %vm1714, %v2324, %v2338
        %v2341 = vunpack.c.l.s4 1934713408
        %v2342 = vunpack.c.0.s8 %v2341
        %v2343 = vperm.slane %v2337, %v2342
        %v2345 = vunpack.c.l.s4 1934713408
        %v2346 = vunpack.c.0.s8 %v2345
        %v2347 = vperm.slane %v2339, %v2346
        %v2348 = vrot.slane %v2335, 4
        %v2349 = vsel %vm1714, %v2348, %v2329
        %v2350 = vrot.slane %v2329, 4
        %v2351 = vsel %vm1714, %v2335, %v2350
        %v2353 = vunpack.c.l.s4 1934713408
        %v2354 = vunpack.c.0.s8 %v2353
        %v2355 = vperm.slane %v2349, %v2354
        %v2357 = vunpack.c.l.s4 1934713408
        %v2358 = vunpack.c.0.s8 %v2357
        %v2359 = vperm.slane %v2351, %v2358
        %v2360 = vrot.slane %v2355, 4
        %v2361 = vsel %vm1714, %v2360, %v2343
        %v2362 = vrot.slane %v2343, 4
        %v2363 = vsel %vm1714, %v2355, %v2362
        %v2364 = vrot.slane %v2359, 4
        %v2365 = vsel %vm1714, %v2364, %v2347
        %v2366 = vrot.slane %v2347, 4
        %v2367 = vsel %vm1714, %v2359, %v2366
        %v2368 = vsel %vm1714, %v2308, %v2289
        %v2370 = vunpack.c.l.s4 1983009808
        %v2371 = vunpack.c.0.s8 %v2370
        %v2372 = vperm.slane %v2368, %v2371
        %v2373 = vrot.slane %v2309, 4
        %v2374 = vsel %vm1714, %v2373, %v2307
        %v2376 = vunpack.c.l.s4 1983009808
        %v2377 = vunpack.c.0.s8 %v2376
        %v2378 = vperm.slane %v2374, %v2377
        %v2379 = vsel %vm1714, %v2312, %v2301
        %v2381 = vunpack.c.l.s4 1983009808
        %v2382 = vunpack.c.0.s8 %v2381
        %v2383 = vperm.slane %v2379, %v2382
        %v2384 = vrot.slane %v2313, 4
        %v2385 = vsel %vm1714, %v2384, %v2311
        %v2387 = vunpack.c.l.s4 1983009808
        %v2388 = vunpack.c.0.s8 %v2387
        %v2389 = vperm.slane %v2385, %v2388
        %v2390 = vrot.slane %v2378, 4
        %v2391 = vsel %vm1714, %v2390, %v2372
        %v2392 = vrot.slane %v2372, 4
        %v2393 = vsel %vm1714, %v2378, %v2392
        %v2395 = vunpack.c.l.s4 1934713408
        %v2396 = vunpack.c.0.s8 %v2395
        %v2397 = vperm.slane %v2391, %v2396
        %v2399 = vunpack.c.l.s4 1934713408
        %v2400 = vunpack.c.0.s8 %v2399
        %v2401 = vperm.slane %v2393, %v2400
        %v2402 = vrot.slane %v2389, 4
        %v2403 = vsel %vm1714, %v2402, %v2383
        %v2404 = vrot.slane %v2383, 4
        %v2405 = vsel %vm1714, %v2389, %v2404
        %v2407 = vunpack.c.l.s4 1934713408
        %v2408 = vunpack.c.0.s8 %v2407
        %v2409 = vperm.slane %v2403, %v2408
        %v2411 = vunpack.c.l.s4 1934713408
        %v2412 = vunpack.c.0.s8 %v2411
        %v2413 = vperm.slane %v2405, %v2412
        %v2414 = vrot.slane %v2409, 4
        %v2415 = vsel %vm1714, %v2414, %v2397
        %v2416 = vrot.slane %v2397, 4
        %v2417 = vsel %vm1714, %v2409, %v2416
        %v2418 = vrot.slane %v2413, 4
        %v2419 = vsel %vm1714, %v2418, %v2401
        %v2420 = vrot.slane %v2401, 4
        %v2421 = vsel %vm1714, %v2413, %v2420
        %vm2422 = vcmask 64512
        %v2424 = vsel %vm2422, %v1873, 0
        %v2427 = vsel %vm2422, %v2117, 0
        %2429 = vmatpush.xpose.msra.mxu0 0.0
        %2430 = vmatpush.xpose.msra.mxu0 0.0
        %2431 = vmatpush.xpose.msra.mxu0 0.0
        %2432 = vmatpush.xpose.msra.mxu0 0.0
        %2433 = vmatpush.xpose.msra.mxu0 0.0
        %2434 = vmatpush.xpose.msra.mxu0 0.0
        %2435 = vmatpush.xpose.msra.mxu0 0.0
        %2436 = vmatpush.xpose.msra.mxu0 0.0
        %2437 = vmatpush.xpose.msra.mxu0 0.0
        %2438 = vmatpush.xpose.msra.mxu0 0.0
        %2439 = vmatpush.xpose.msra.mxu0 0.0
        %2440 = vmatpush.xpose.msra.mxu0 0.0
        %2441 = vmatpush.xpose.msra.mxu0 0.0
        %2442 = vmatpush.xpose.msra.mxu0 0.0
        %2443 = vmatpush.xpose.msra.mxu0 0.0
        %2444 = vmatpush.xpose.msra.mxu0 %v2427
        %2445 = vmatmul.f32.gmra.mxu0 %v2424
        %v2446 = vpop.f32.mrf.mxu0
        %v2447 = vadd.f32 %v1653, %v2446
        %2448 = vdwg.mxu0
        %v2450 = vsel %vm2422, %v1875, 0
        %v2453 = vsel %vm2422, %v2119, 0
        %2455 = vmatpush.xpose.msra.mxu0 0.0
        %2456 = vmatpush.xpose.msra.mxu0 0.0
        %2457 = vmatpush.xpose.msra.mxu0 0.0
        %2458 = vmatpush.xpose.msra.mxu0 0.0
        %2459 = vmatpush.xpose.msra.mxu0 0.0
        %2460 = vmatpush.xpose.msra.mxu0 0.0
        %2461 = vmatpush.xpose.msra.mxu0 0.0
        %2462 = vmatpush.xpose.msra.mxu0 0.0
        %2463 = vmatpush.xpose.msra.mxu0 0.0
        %2464 = vmatpush.xpose.msra.mxu0 0.0
        %2465 = vmatpush.xpose.msra.mxu0 0.0
        %2466 = vmatpush.xpose.msra.mxu0 0.0
        %2467 = vmatpush.xpose.msra.mxu0 0.0
        %2468 = vmatpush.xpose.msra.mxu0 0.0
        %2469 = vmatpush.xpose.msra.mxu0 0.0
        %2470 = vmatpush.xpose.msra.mxu0 %v2453
        %2471 = vmatmul.f32.gmra.mxu0 %v2450
        %v2472 = vpop.f32.mrf.mxu0
        %v2473 = vadd.f32 %v1653, %v2472
        %2474 = vdwg.mxu0
        %v2476 = vsel %vm2422, %v1877, 0
        %v2479 = vsel %vm2422, %v2121, 0
        %2481 = vmatpush.xpose.msra.mxu0 0.0
        %2482 = vmatpush.xpose.msra.mxu0 0.0
        %2483 = vmatpush.xpose.msra.mxu0 0.0
        %2484 = vmatpush.xpose.msra.mxu0 0.0
        %2485 = vmatpush.xpose.msra.mxu0 0.0
        %2486 = vmatpush.xpose.msra.mxu0 0.0
        %2487 = vmatpush.xpose.msra.mxu0 0.0
        %2488 = vmatpush.xpose.msra.mxu0 0.0
        %2489 = vmatpush.xpose.msra.mxu0 0.0
        %2490 = vmatpush.xpose.msra.mxu0 0.0
        %2491 = vmatpush.xpose.msra.mxu0 0.0
        %2492 = vmatpush.xpose.msra.mxu0 0.0
        %2493 = vmatpush.xpose.msra.mxu0 0.0
        %2494 = vmatpush.xpose.msra.mxu0 0.0
        %2495 = vmatpush.xpose.msra.mxu0 0.0
        %2496 = vmatpush.xpose.msra.mxu0 %v2479
        %2497 = vmatmul.f32.gmra.mxu0 %v2476
        %v2498 = vpop.f32.mrf.mxu0
        %v2499 = vadd.f32 %v1653, %v2498
        %2500 = vdwg.mxu0
        %v2502 = vsel %vm2422, %v1879, 0
        %v2505 = vsel %vm2422, %v2123, 0
        %2507 = vmatpush.xpose.msra.mxu0 0.0
        %2508 = vmatpush.xpose.msra.mxu0 0.0
        %2509 = vmatpush.xpose.msra.mxu0 0.0
        %2510 = vmatpush.xpose.msra.mxu0 0.0
        %2511 = vmatpush.xpose.msra.mxu0 0.0
        %2512 = vmatpush.xpose.msra.mxu0 0.0
        %2513 = vmatpush.xpose.msra.mxu0 0.0
        %2514 = vmatpush.xpose.msra.mxu0 0.0
        %2515 = vmatpush.xpose.msra.mxu0 0.0
        %2516 = vmatpush.xpose.msra.mxu0 0.0
        %2517 = vmatpush.xpose.msra.mxu0 0.0
        %2518 = vmatpush.xpose.msra.mxu0 0.0
        %2519 = vmatpush.xpose.msra.mxu0 0.0
        %2520 = vmatpush.xpose.msra.mxu0 0.0
        %2521 = vmatpush.xpose.msra.mxu0 0.0
        %2522 = vmatpush.xpose.msra.mxu0 %v2505
        %2523 = vmatmul.f32.gmra.mxu0 %v2502
        %v2524 = vpop.f32.mrf.mxu0
        %v2525 = vadd.f32 %v1653, %v2524
        %2526 = vdwg.mxu0
        %v2528 = vsel %vm2422, %v1927, 0
        %v2531 = vsel %vm2422, %v2171, 0
        %2533 = vmatpush.xpose.msra.mxu0 0.0
        %2534 = vmatpush.xpose.msra.mxu0 0.0
        %2535 = vmatpush.xpose.msra.mxu0 0.0
        %2536 = vmatpush.xpose.msra.mxu0 0.0
        %2537 = vmatpush.xpose.msra.mxu0 0.0
        %2538 = vmatpush.xpose.msra.mxu0 0.0
        %2539 = vmatpush.xpose.msra.mxu0 0.0
        %2540 = vmatpush.xpose.msra.mxu0 0.0
        %2541 = vmatpush.xpose.msra.mxu0 0.0
        %2542 = vmatpush.xpose.msra.mxu0 0.0
        %2543 = vmatpush.xpose.msra.mxu0 0.0
        %2544 = vmatpush.xpose.msra.mxu0 0.0
        %2545 = vmatpush.xpose.msra.mxu0 0.0
        %2546 = vmatpush.xpose.msra.mxu0 0.0
        %2547 = vmatpush.xpose.msra.mxu0 0.0
        %2548 = vmatpush.xpose.msra.mxu0 %v2531
        %2549 = vmatmul.f32.gmra.mxu0 %v2528
        %v2550 = vpop.f32.mrf.mxu0
        %v2551 = vadd.f32 %v1654, %v2550
        %2552 = vdwg.mxu0
        %v2554 = vsel %vm2422, %v1929, 0
        %v2557 = vsel %vm2422, %v2173, 0
        %2559 = vmatpush.xpose.msra.mxu0 0.0
        %2560 = vmatpush.xpose.msra.mxu0 0.0
        %2561 = vmatpush.xpose.msra.mxu0 0.0
        %2562 = vmatpush.xpose.msra.mxu0 0.0
        %2563 = vmatpush.xpose.msra.mxu0 0.0
        %2564 = vmatpush.xpose.msra.mxu0 0.0
        %2565 = vmatpush.xpose.msra.mxu0 0.0
        %2566 = vmatpush.xpose.msra.mxu0 0.0
        %2567 = vmatpush.xpose.msra.mxu0 0.0
        %2568 = vmatpush.xpose.msra.mxu0 0.0
        %2569 = vmatpush.xpose.msra.mxu0 0.0
        %2570 = vmatpush.xpose.msra.mxu0 0.0
        %2571 = vmatpush.xpose.msra.mxu0 0.0
        %2572 = vmatpush.xpose.msra.mxu0 0.0
        %2573 = vmatpush.xpose.msra.mxu0 0.0
        %2574 = vmatpush.xpose.msra.mxu0 %v2557
        %2575 = vmatmul.f32.gmra.mxu0 %v2554
        %v2576 = vpop.f32.mrf.mxu0
        %v2577 = vadd.f32 %v1654, %v2576
        %2578 = vdwg.mxu0
        %v2580 = vsel %vm2422, %v1931, 0
        %v2583 = vsel %vm2422, %v2175, 0
        %2585 = vmatpush.xpose.msra.mxu0 0.0
        %2586 = vmatpush.xpose.msra.mxu0 0.0
        %2587 = vmatpush.xpose.msra.mxu0 0.0
        %2588 = vmatpush.xpose.msra.mxu0 0.0
        %2589 = vmatpush.xpose.msra.mxu0 0.0
        %2590 = vmatpush.xpose.msra.mxu0 0.0
        %2591 = vmatpush.xpose.msra.mxu0 0.0
        %2592 = vmatpush.xpose.msra.mxu0 0.0
        %2593 = vmatpush.xpose.msra.mxu0 0.0
        %2594 = vmatpush.xpose.msra.mxu0 0.0
        %2595 = vmatpush.xpose.msra.mxu0 0.0
        %2596 = vmatpush.xpose.msra.mxu0 0.0
        %2597 = vmatpush.xpose.msra.mxu0 0.0
        %2598 = vmatpush.xpose.msra.mxu0 0.0
        %2599 = vmatpush.xpose.msra.mxu0 0.0
        %2600 = vmatpush.xpose.msra.mxu0 %v2583
        %2601 = vmatmul.f32.gmra.mxu0 %v2580
        %v2602 = vpop.f32.mrf.mxu0
        %v2603 = vadd.f32 %v1654, %v2602
        %2604 = vdwg.mxu0
        %v2606 = vsel %vm2422, %v1933, 0
        %v2609 = vsel %vm2422, %v2177, 0
        %2611 = vmatpush.xpose.msra.mxu0 0.0
        %2612 = vmatpush.xpose.msra.mxu0 0.0
        %2613 = vmatpush.xpose.msra.mxu0 0.0
        %2614 = vmatpush.xpose.msra.mxu0 0.0
        %2615 = vmatpush.xpose.msra.mxu0 0.0
        %2616 = vmatpush.xpose.msra.mxu0 0.0
        %2617 = vmatpush.xpose.msra.mxu0 0.0
        %2618 = vmatpush.xpose.msra.mxu0 0.0
        %2619 = vmatpush.xpose.msra.mxu0 0.0
        %2620 = vmatpush.xpose.msra.mxu0 0.0
        %2621 = vmatpush.xpose.msra.mxu0 0.0
        %2622 = vmatpush.xpose.msra.mxu0 0.0
        %2623 = vmatpush.xpose.msra.mxu0 0.0
        %2624 = vmatpush.xpose.msra.mxu0 0.0
        %2625 = vmatpush.xpose.msra.mxu0 0.0
        %2626 = vmatpush.xpose.msra.mxu0 %v2609
        %2627 = vmatmul.f32.gmra.mxu0 %v2606
        %v2628 = vpop.f32.mrf.mxu0
        %v2629 = vadd.f32 %v1654, %v2628
        %2630 = vdwg.mxu0
        %v2631 = vsel %vm2422, %v2447, -inf
        %2632 = vmax.xlane.f32.xlu0 %v2631
        %v2633 = vpop.xlane.xlu0 %2632
        %v2634 = vsel %vm2422, %v2473, -inf
        %2635 = vmax.xlane.f32.xlu0 %v2634
        %v2636 = vpop.xlane.xlu0 %2635
        %v2637 = vsel %vm2422, %v2499, -inf
        %2638 = vmax.xlane.f32.xlu0 %v2637
        %v2639 = vpop.xlane.xlu0 %2638
        %v2640 = vsel %vm2422, %v2525, -inf
        %2641 = vmax.xlane.f32.xlu0 %v2640
        %v2642 = vpop.xlane.xlu0 %2641
        %v2643 = vsel %vm2422, %v2551, -inf
        %2644 = vmax.xlane.f32.xlu0 %v2643
        %v2645 = vpop.xlane.xlu0 %2644
        %v2646 = vsel %vm2422, %v2577, -inf
        %2647 = vmax.xlane.f32.xlu0 %v2646
        %v2648 = vpop.xlane.xlu0 %2647
        %v2649 = vsel %vm2422, %v2603, -inf
        %2650 = vmax.xlane.f32.xlu0 %v2649
        %v2651 = vpop.xlane.xlu0 %2650
        %v2652 = vsel %vm2422, %v2629, -inf
        %2653 = vmax.xlane.f32.xlu0 %v2652
        %v2654 = vpop.xlane.xlu0 %2653
        %v2655 = vsub.f32 %v2447, %v2633
        %v2656 = vsub.f32 %v2473, %v2636
        %v2657 = vsub.f32 %v2499, %v2639
        %v2658 = vsub.f32 %v2525, %v2642
        %v2659 = vsub.f32 %v2551, %v2645
        %v2660 = vsub.f32 %v2577, %v2648
        %v2661 = vsub.f32 %v2603, %v2651
        %v2662 = vsub.f32 %v2629, %v2654
        %v2663 = vmul.f32 %v2655, 1.442695
        %v2664 = vpow.pop %v2663
        %v2665 = vmul.f32 %v2656, 1.442695
        %v2666 = vpow.pop %v2665
        %v2667 = vmul.f32 %v2657, 1.442695
        %v2668 = vpow.pop %v2667
        %v2669 = vmul.f32 %v2658, 1.442695
        %v2670 = vpow.pop %v2669
        %v2671 = vmul.f32 %v2659, 1.442695
        %v2672 = vpow.pop %v2671
        %v2673 = vmul.f32 %v2660, 1.442695
        %v2674 = vpow.pop %v2673
        %v2675 = vmul.f32 %v2661, 1.442695
        %v2676 = vpow.pop %v2675
        %v2677 = vmul.f32 %v2662, 1.442695
        %v2678 = vpow.pop %v2677
        %v2679 = vsel %vm2422, %v2664, 0.0
        %2680 = vadd.xlane.f32.xlu0 %v2679
        %v2681 = vpop.xlane.xlu0 %2680
        %v2682 = vsel %vm2422, %v2666, 0.0
        %2683 = vadd.xlane.f32.xlu0 %v2682
        %v2684 = vpop.xlane.xlu0 %2683
        %v2685 = vsel %vm2422, %v2668, 0.0
        %2686 = vadd.xlane.f32.xlu0 %v2685
        %v2687 = vpop.xlane.xlu0 %2686
        %v2688 = vsel %vm2422, %v2670, 0.0
        %2689 = vadd.xlane.f32.xlu0 %v2688
        %v2690 = vpop.xlane.xlu0 %2689
        %v2691 = vsel %vm2422, %v2672, 0.0
        %2692 = vadd.xlane.f32.xlu0 %v2691
        %v2693 = vpop.xlane.xlu0 %2692
        %v2694 = vsel %vm2422, %v2674, 0.0
        %2695 = vadd.xlane.f32.xlu0 %v2694
        %v2696 = vpop.xlane.xlu0 %2695
        %v2697 = vsel %vm2422, %v2676, 0.0
        %2698 = vadd.xlane.f32.xlu0 %v2697
        %v2699 = vpop.xlane.xlu0 %2698
        %v2700 = vsel %vm2422, %v2678, 0.0
        %2701 = vadd.xlane.f32.xlu0 %v2700
        %v2702 = vpop.xlane.xlu0 %2701
        %v2703 = vrcp.pop %v2681
        %v2704 = vmul.f32 %v2681, %v2703
        %v2705 = vsub.f32 1.0, %v2704
        %v2706 = vmul.f32 %v2703, %v2705
        %v2707 = vadd.f32 %v2703, %v2706
        %vm2708 = vweird.f32 %v2681
        %vm2709 = vweird.f32 %v2703
        %vm2710 = vmor %vm2708, %vm2709
        %v2711 = vsel %vm2710, %v2703, %v2707
        %v2712 = vand.u32 2147483647, %v2681
        %vm2713 = vcmp.eq.f32.partialorder %v2712, 8.507059e+37
        %v2714 = vand.u32 %v2681, 2147483648
        %v2715 = vor.u32 1.1754944e-38, %v2714
        %v2716 = vsel %vm2713, %v2715, %v2711
        %v2717 = vrcp.pop %v2684
        %v2718 = vmul.f32 %v2684, %v2717
        %v2719 = vsub.f32 1.0, %v2718
        %v2720 = vmul.f32 %v2717, %v2719
        %v2721 = vadd.f32 %v2717, %v2720
        %vm2722 = vweird.f32 %v2684
        %vm2723 = vweird.f32 %v2717
        %vm2724 = vmor %vm2722, %vm2723
        %v2725 = vsel %vm2724, %v2717, %v2721
        %v2726 = vand.u32 2147483647, %v2684
        %vm2727 = vcmp.eq.f32.partialorder %v2726, 8.507059e+37
        %v2728 = vand.u32 %v2684, 2147483648
        %v2729 = vor.u32 1.1754944e-38, %v2728
        %v2730 = vsel %vm2727, %v2729, %v2725
        %v2731 = vrcp.pop %v2687
        %v2732 = vmul.f32 %v2687, %v2731
        %v2733 = vsub.f32 1.0, %v2732
        %v2734 = vmul.f32 %v2731, %v2733
        %v2735 = vadd.f32 %v2731, %v2734
        %vm2736 = vweird.f32 %v2687
        %vm2737 = vweird.f32 %v2731
        %vm2738 = vmor %vm2736, %vm2737
        %v2739 = vsel %vm2738, %v2731, %v2735
        %v2740 = vand.u32 2147483647, %v2687
        %vm2741 = vcmp.eq.f32.partialorder %v2740, 8.507059e+37
        %v2742 = vand.u32 %v2687, 2147483648
        %v2743 = vor.u32 1.1754944e-38, %v2742
        %v2744 = vsel %vm2741, %v2743, %v2739
        %v2745 = vrcp.pop %v2690
        %v2746 = vmul.f32 %v2690, %v2745
        %v2747 = vsub.f32 1.0, %v2746
        %v2748 = vmul.f32 %v2745, %v2747
        %v2749 = vadd.f32 %v2745, %v2748
        %vm2750 = vweird.f32 %v2690
        %vm2751 = vweird.f32 %v2745
        %vm2752 = vmor %vm2750, %vm2751
        %v2753 = vsel %vm2752, %v2745, %v2749
        %v2754 = vand.u32 2147483647, %v2690
        %vm2755 = vcmp.eq.f32.partialorder %v2754, 8.507059e+37
        %v2756 = vand.u32 %v2690, 2147483648
        %v2757 = vor.u32 1.1754944e-38, %v2756
        %v2758 = vsel %vm2755, %v2757, %v2753
        %v2759 = vrcp.pop %v2693
        %v2760 = vmul.f32 %v2693, %v2759
        %v2761 = vsub.f32 1.0, %v2760
        %v2762 = vmul.f32 %v2759, %v2761
        %v2763 = vadd.f32 %v2759, %v2762
        %vm2764 = vweird.f32 %v2693
        %vm2765 = vweird.f32 %v2759
        %vm2766 = vmor %vm2764, %vm2765
        %v2767 = vsel %vm2766, %v2759, %v2763
        %v2768 = vand.u32 2147483647, %v2693
        %vm2769 = vcmp.eq.f32.partialorder %v2768, 8.507059e+37
        %v2770 = vand.u32 %v2693, 2147483648
        %v2771 = vor.u32 1.1754944e-38, %v2770
        %v2772 = vsel %vm2769, %v2771, %v2767
        %v2773 = vrcp.pop %v2696
        %v2774 = vmul.f32 %v2696, %v2773
        %v2775 = vsub.f32 1.0, %v2774
        %v2776 = vmul.f32 %v2773, %v2775
        %v2777 = vadd.f32 %v2773, %v2776
        %vm2778 = vweird.f32 %v2696
        %vm2779 = vweird.f32 %v2773
        %vm2780 = vmor %vm2778, %vm2779
        %v2781 = vsel %vm2780, %v2773, %v2777
        %v2782 = vand.u32 2147483647, %v2696
        %vm2783 = vcmp.eq.f32.partialorder %v2782, 8.507059e+37
        %v2784 = vand.u32 %v2696, 2147483648
        %v2785 = vor.u32 1.1754944e-38, %v2784
        %v2786 = vsel %vm2783, %v2785, %v2781
        %v2787 = vrcp.pop %v2699
        %v2788 = vmul.f32 %v2699, %v2787
        %v2789 = vsub.f32 1.0, %v2788
        %v2790 = vmul.f32 %v2787, %v2789
        %v2791 = vadd.f32 %v2787, %v2790
        %vm2792 = vweird.f32 %v2699
        %vm2793 = vweird.f32 %v2787
        %vm2794 = vmor %vm2792, %vm2793
        %v2795 = vsel %vm2794, %v2787, %v2791
        %v2796 = vand.u32 2147483647, %v2699
        %vm2797 = vcmp.eq.f32.partialorder %v2796, 8.507059e+37
        %v2798 = vand.u32 %v2699, 2147483648
        %v2799 = vor.u32 1.1754944e-38, %v2798
        %v2800 = vsel %vm2797, %v2799, %v2795
        %v2801 = vrcp.pop %v2702
        %v2802 = vmul.f32 %v2702, %v2801
        %v2803 = vsub.f32 1.0, %v2802
        %v2804 = vmul.f32 %v2801, %v2803
        %v2805 = vadd.f32 %v2801, %v2804
        %vm2806 = vweird.f32 %v2702
        %vm2807 = vweird.f32 %v2801
        %vm2808 = vmor %vm2806, %vm2807
        %v2809 = vsel %vm2808, %v2801, %v2805
        %v2810 = vand.u32 2147483647, %v2702
        %vm2811 = vcmp.eq.f32.partialorder %v2810, 8.507059e+37
        %v2812 = vand.u32 %v2702, 2147483648
        %v2813 = vor.u32 1.1754944e-38, %v2812
        %v2814 = vsel %vm2811, %v2813, %v2809
        %v2815 = vmul.f32 %v2664, %v2716
        %v2816 = vmul.f32 %v2666, %v2730
        %v2817 = vmul.f32 %v2668, %v2744
        %v2818 = vmul.f32 %v2670, %v2758
        %v2819 = vmul.f32 %v2672, %v2772
        %v2820 = vmul.f32 %v2674, %v2786
        %v2821 = vmul.f32 %v2676, %v2800
        %v2822 = vmul.f32 %v2678, %v2814
        %v2824 = vsel %vm2422, %v2815, 0
        %2826 = vmatpush.msra.mxu0 0.0
        %2827 = vmatpush.msra.mxu0 0.0
        %2828 = vmatpush.msra.mxu0 0.0
        %2829 = vmatpush.msra.mxu0 0.0
        %2830 = vmatpush.msra.mxu0 0.0
        %2831 = vmatpush.msra.mxu0 0.0
        %2832 = vmatpush.msra.mxu0 0.0
        %2833 = vmatpush.msra.mxu0 0.0
        %2834 = vmatpush.msra.mxu0 0.0
        %2835 = vmatpush.msra.mxu0 0.0
        %2836 = vmatpush.msra.mxu0 0.0
        %2837 = vmatpush.msra.mxu0 0.0
        %2838 = vmatpush.msra.mxu0 0.0
        %2839 = vmatpush.msra.mxu0 0.0
        %2840 = vmatpush.msra.mxu0 0.0
        %2841 = vmatpush.msra.mxu0 %v2361
        %2842 = vmatmul.f32.gmra.mxu0 %v2824
        %v2843 = vpop.f32.mrf.mxu0
        %v2844 = vadd.f32 0.0, %v2843
        %2845 = vdwg.mxu0
        %v2847 = vsel %vm2422, %v2816, 0
        %2849 = vmatpush.msra.mxu0 0.0
        %2850 = vmatpush.msra.mxu0 0.0
        %2851 = vmatpush.msra.mxu0 0.0
        %2852 = vmatpush.msra.mxu0 0.0
        %2853 = vmatpush.msra.mxu0 0.0
        %2854 = vmatpush.msra.mxu0 0.0
        %2855 = vmatpush.msra.mxu0 0.0
        %2856 = vmatpush.msra.mxu0 0.0
        %2857 = vmatpush.msra.mxu0 0.0
        %2858 = vmatpush.msra.mxu0 0.0
        %2859 = vmatpush.msra.mxu0 0.0
        %2860 = vmatpush.msra.mxu0 0.0
        %2861 = vmatpush.msra.mxu0 0.0
        %2862 = vmatpush.msra.mxu0 0.0
        %2863 = vmatpush.msra.mxu0 0.0
        %2864 = vmatpush.msra.mxu0 %v2363
        %2865 = vmatmul.f32.gmra.mxu0 %v2847
        %v2866 = vpop.f32.mrf.mxu0
        %v2867 = vadd.f32 0.0, %v2866
        %2868 = vdwg.mxu0
        %v2870 = vsel %vm2422, %v2817, 0
        %2872 = vmatpush.msra.mxu0 0.0
        %2873 = vmatpush.msra.mxu0 0.0
        %2874 = vmatpush.msra.mxu0 0.0
        %2875 = vmatpush.msra.mxu0 0.0
        %2876 = vmatpush.msra.mxu0 0.0
        %2877 = vmatpush.msra.mxu0 0.0
        %2878 = vmatpush.msra.mxu0 0.0
        %2879 = vmatpush.msra.mxu0 0.0
        %2880 = vmatpush.msra.mxu0 0.0
        %2881 = vmatpush.msra.mxu0 0.0
        %2882 = vmatpush.msra.mxu0 0.0
        %2883 = vmatpush.msra.mxu0 0.0
        %2884 = vmatpush.msra.mxu0 0.0
        %2885 = vmatpush.msra.mxu0 0.0
        %2886 = vmatpush.msra.mxu0 0.0
        %2887 = vmatpush.msra.mxu0 %v2365
        %2888 = vmatmul.f32.gmra.mxu0 %v2870
        %v2889 = vpop.f32.mrf.mxu0
        %v2890 = vadd.f32 0.0, %v2889
        %2891 = vdwg.mxu0
        %v2893 = vsel %vm2422, %v2818, 0
        %2895 = vmatpush.msra.mxu0 0.0
        %2896 = vmatpush.msra.mxu0 0.0
        %2897 = vmatpush.msra.mxu0 0.0
        %2898 = vmatpush.msra.mxu0 0.0
        %2899 = vmatpush.msra.mxu0 0.0
        %2900 = vmatpush.msra.mxu0 0.0
        %2901 = vmatpush.msra.mxu0 0.0
        %2902 = vmatpush.msra.mxu0 0.0
        %2903 = vmatpush.msra.mxu0 0.0
        %2904 = vmatpush.msra.mxu0 0.0
        %2905 = vmatpush.msra.mxu0 0.0
        %2906 = vmatpush.msra.mxu0 0.0
        %2907 = vmatpush.msra.mxu0 0.0
        %2908 = vmatpush.msra.mxu0 0.0
        %2909 = vmatpush.msra.mxu0 0.0
        %2910 = vmatpush.msra.mxu0 %v2367
        %2911 = vmatmul.f32.gmra.mxu0 %v2893
        %v2912 = vpop.f32.mrf.mxu0
        %v2913 = vadd.f32 0.0, %v2912
        %2914 = vdwg.mxu0
        %v2916 = vsel %vm2422, %v2819, 0
        %2918 = vmatpush.msra.mxu0 0.0
        %2919 = vmatpush.msra.mxu0 0.0
        %2920 = vmatpush.msra.mxu0 0.0
        %2921 = vmatpush.msra.mxu0 0.0
        %2922 = vmatpush.msra.mxu0 0.0
        %2923 = vmatpush.msra.mxu0 0.0
        %2924 = vmatpush.msra.mxu0 0.0
        %2925 = vmatpush.msra.mxu0 0.0
        %2926 = vmatpush.msra.mxu0 0.0
        %2927 = vmatpush.msra.mxu0 0.0
        %2928 = vmatpush.msra.mxu0 0.0
        %2929 = vmatpush.msra.mxu0 0.0
        %2930 = vmatpush.msra.mxu0 0.0
        %2931 = vmatpush.msra.mxu0 0.0
        %2932 = vmatpush.msra.mxu0 0.0
        %2933 = vmatpush.msra.mxu0 %v2415
        %2934 = vmatmul.f32.gmra.mxu0 %v2916
        %v2935 = vpop.f32.mrf.mxu0
        %v2936 = vadd.f32 0.0, %v2935
        %2937 = vdwg.mxu0
        %v2939 = vsel %vm2422, %v2820, 0
        %2941 = vmatpush.msra.mxu0 0.0
        %2942 = vmatpush.msra.mxu0 0.0
        %2943 = vmatpush.msra.mxu0 0.0
        %2944 = vmatpush.msra.mxu0 0.0
        %2945 = vmatpush.msra.mxu0 0.0
        %2946 = vmatpush.msra.mxu0 0.0
        %2947 = vmatpush.msra.mxu0 0.0
        %2948 = vmatpush.msra.mxu0 0.0
        %2949 = vmatpush.msra.mxu0 0.0
        %2950 = vmatpush.msra.mxu0 0.0
        %2951 = vmatpush.msra.mxu0 0.0
        %2952 = vmatpush.msra.mxu0 0.0
        %2953 = vmatpush.msra.mxu0 0.0
        %2954 = vmatpush.msra.mxu0 0.0
        %2955 = vmatpush.msra.mxu0 0.0
        %2956 = vmatpush.msra.mxu0 %v2417
        %2957 = vmatmul.f32.gmra.mxu0 %v2939
        %v2958 = vpop.f32.mrf.mxu0
        %v2959 = vadd.f32 0.0, %v2958
        %2960 = vdwg.mxu0
        %v2962 = vsel %vm2422, %v2821, 0
        %2964 = vmatpush.msra.mxu0 0.0
        %2965 = vmatpush.msra.mxu0 0.0
        %2966 = vmatpush.msra.mxu0 0.0
        %2967 = vmatpush.msra.mxu0 0.0
        %2968 = vmatpush.msra.mxu0 0.0
        %2969 = vmatpush.msra.mxu0 0.0
        %2970 = vmatpush.msra.mxu0 0.0
        %2971 = vmatpush.msra.mxu0 0.0
        %2972 = vmatpush.msra.mxu0 0.0
        %2973 = vmatpush.msra.mxu0 0.0
        %2974 = vmatpush.msra.mxu0 0.0
        %2975 = vmatpush.msra.mxu0 0.0
        %2976 = vmatpush.msra.mxu0 0.0
        %2977 = vmatpush.msra.mxu0 0.0
        %2978 = vmatpush.msra.mxu0 0.0
        %2979 = vmatpush.msra.mxu0 %v2419
        %2980 = vmatmul.f32.gmra.mxu0 %v2962
        %v2981 = vpop.f32.mrf.mxu0
        %v2982 = vadd.f32 0.0, %v2981
        %2983 = vdwg.mxu0
        %v2985 = vsel %vm2422, %v2822, 0
        %2987 = vmatpush.msra.mxu0 0.0
        %2988 = vmatpush.msra.mxu0 0.0
        %2989 = vmatpush.msra.mxu0 0.0
        %2990 = vmatpush.msra.mxu0 0.0
        %2991 = vmatpush.msra.mxu0 0.0
        %2992 = vmatpush.msra.mxu0 0.0
        %2993 = vmatpush.msra.mxu0 0.0
        %2994 = vmatpush.msra.mxu0 0.0
        %2995 = vmatpush.msra.mxu0 0.0
        %2996 = vmatpush.msra.mxu0 0.0
        %2997 = vmatpush.msra.mxu0 0.0
        %2998 = vmatpush.msra.mxu0 0.0
        %2999 = vmatpush.msra.mxu0 0.0
        %3000 = vmatpush.msra.mxu0 0.0
        %3001 = vmatpush.msra.mxu0 0.0
        %3002 = vmatpush.msra.mxu0 %v2421
        %3003 = vmatmul.f32.gmra.mxu0 %v2985
        %v3004 = vpop.f32.mrf.mxu0
        %v3005 = vadd.f32 0.0, %v3004
        %3006 = vdwg.mxu0
        %v3007 = vrot.slane %v2890, 4
        %v3008 = vsel %vm1714, %v3007, %v2844
        %v3009 = vrot.slane %v2844, 4
        %v3010 = vsel %vm1714, %v2890, %v3009
        %v3012 = vunpack.c.l.s4 1983009808
        %v3013 = vunpack.c.0.s8 %v3012
        %v3014 = vperm.slane %v3008, %v3013
        %v3016 = vunpack.c.l.s4 1983009808
        %v3017 = vunpack.c.0.s8 %v3016
        %v3018 = vperm.slane %v3010, %v3017
        %v3019 = vrot.slane %v2913, 4
        %v3020 = vsel %vm1714, %v3019, %v2867
        %v3021 = vrot.slane %v2867, 4
        %v3022 = vsel %vm1714, %v2913, %v3021
        %v3024 = vunpack.c.l.s4 1983009808
        %v3025 = vunpack.c.0.s8 %v3024
        %v3026 = vperm.slane %v3020, %v3025
        %v3028 = vunpack.c.l.s4 1983009808
        %v3029 = vunpack.c.0.s8 %v3028
        %v3030 = vperm.slane %v3022, %v3029
        %v3031 = vrot.slane %v3026, 4
        %v3032 = vsel %vm1714, %v3031, %v3014
        %v3033 = vrot.slane %v3014, 4
        %v3034 = vsel %vm1714, %v3026, %v3033
        %v3036 = vunpack.c.l.s4 1934713408
        %v3037 = vunpack.c.0.s8 %v3036
        %v3038 = vperm.slane %v3032, %v3037
        %v3040 = vunpack.c.l.s4 1934713408
        %v3041 = vunpack.c.0.s8 %v3040
        %v3042 = vperm.slane %v3034, %v3041
        %v3043 = vrot.slane %v3030, 4
        %v3044 = vsel %vm1714, %v3043, %v3018
        %v3045 = vrot.slane %v3018, 4
        %v3046 = vsel %vm1714, %v3030, %v3045
        %v3048 = vunpack.c.l.s4 1934713408
        %v3049 = vunpack.c.0.s8 %v3048
        %v3050 = vperm.slane %v3044, %v3049
        %v3052 = vunpack.c.l.s4 1934713408
        %v3053 = vunpack.c.0.s8 %v3052
        %v3054 = vperm.slane %v3046, %v3053
        %v3055 = vrot.slane %v3038, 4
        %v3056 = vsel %vm1714, 0.0, %v3055
        %v3057 = vrot.slane %v3042, 4
        %v3058 = vsel %vm1714, 0.0, %v3057
        %v3059 = vrot.slane %v3050, 4
        %v3060 = vsel %vm1714, 0.0, %v3059
        %v3061 = vrot.slane %v3054, 4
        %v3062 = vsel %vm1714, 0.0, %v3061
        %v3063 = vrot.slane %v2982, 4
        %v3064 = vsel %vm1714, %v3063, %v2936
        %v3065 = vrot.slane %v2936, 4
        %v3066 = vsel %vm1714, %v2982, %v3065
        %v3068 = vunpack.c.l.s4 1983009808
        %v3069 = vunpack.c.0.s8 %v3068
        %v3070 = vperm.slane %v3064, %v3069
        %v3072 = vunpack.c.l.s4 1983009808
        %v3073 = vunpack.c.0.s8 %v3072
        %v3074 = vperm.slane %v3066, %v3073
        %v3075 = vrot.slane %v3005, 4
        %v3076 = vsel %vm1714, %v3075, %v2959
        %v3077 = vrot.slane %v2959, 4
        %v3078 = vsel %vm1714, %v3005, %v3077
        %v3080 = vunpack.c.l.s4 1983009808
        %v3081 = vunpack.c.0.s8 %v3080
        %v3082 = vperm.slane %v3076, %v3081
        %v3084 = vunpack.c.l.s4 1983009808
        %v3085 = vunpack.c.0.s8 %v3084
        %v3086 = vperm.slane %v3078, %v3085
        %v3087 = vrot.slane %v3082, 4
        %v3088 = vsel %vm1714, %v3087, %v3070
        %v3089 = vrot.slane %v3070, 4
        %v3090 = vsel %vm1714, %v3082, %v3089
        %v3092 = vunpack.c.l.s4 1934713408
        %v3093 = vunpack.c.0.s8 %v3092
        %v3094 = vperm.slane %v3088, %v3093
        %v3096 = vunpack.c.l.s4 1934713408
        %v3097 = vunpack.c.0.s8 %v3096
        %v3098 = vperm.slane %v3090, %v3097
        %v3099 = vrot.slane %v3086, 4
        %v3100 = vsel %vm1714, %v3099, %v3074
        %v3101 = vrot.slane %v3074, 4
        %v3102 = vsel %vm1714, %v3086, %v3101
        %v3104 = vunpack.c.l.s4 1934713408
        %v3105 = vunpack.c.0.s8 %v3104
        %v3106 = vperm.slane %v3100, %v3105
        %v3108 = vunpack.c.l.s4 1934713408
        %v3109 = vunpack.c.0.s8 %v3108
        %v3110 = vperm.slane %v3102, %v3109
        %v3111 = vrot.slane %v3094, 4
        %v3112 = vsel %vm1714, 0.0, %v3111
        %v3113 = vrot.slane %v3098, 4
        %v3114 = vsel %vm1714, 0.0, %v3113
        %v3115 = vrot.slane %v3106, 4
        %v3116 = vsel %vm1714, 0.0, %v3115
        %v3117 = vrot.slane %v3110, 4
        %v3118 = vsel %vm1714, 0.0, %v3117
        %v3119 = vsel %vm1714, %v3057, %v3038
        %v3121 = vunpack.c.l.s4 1983009808
        %v3122 = vunpack.c.0.s8 %v3121
        %v3123 = vperm.slane %v3119, %v3122
        %v3124 = vrot.slane %v3058, 4
        %v3125 = vsel %vm1714, %v3124, %v3056
        %v3127 = vunpack.c.l.s4 1983009808
        %v3128 = vunpack.c.0.s8 %v3127
        %v3129 = vperm.slane %v3125, %v3128
        %v3130 = vsel %vm1714, %v3061, %v3050
        %v3132 = vunpack.c.l.s4 1983009808
        %v3133 = vunpack.c.0.s8 %v3132
        %v3134 = vperm.slane %v3130, %v3133
        %v3135 = vrot.slane %v3062, 4
        %v3136 = vsel %vm1714, %v3135, %v3060
        %v3138 = vunpack.c.l.s4 1983009808
        %v3139 = vunpack.c.0.s8 %v3138
        %v3140 = vperm.slane %v3136, %v3139
        %v3141 = vrot.slane %v3129, 4
        %v3142 = vsel %vm1714, %v3141, %v3123
        %v3143 = vrot.slane %v3123, 4
        %v3144 = vsel %vm1714, %v3129, %v3143
        %v3146 = vunpack.c.l.s4 1934713408
        %v3147 = vunpack.c.0.s8 %v3146
        %v3148 = vperm.slane %v3142, %v3147
        %v3150 = vunpack.c.l.s4 1934713408
        %v3151 = vunpack.c.0.s8 %v3150
        %v3152 = vperm.slane %v3144, %v3151
        %v3153 = vrot.slane %v3140, 4
        %v3154 = vsel %vm1714, %v3153, %v3134
        %v3155 = vrot.slane %v3134, 4
        %v3156 = vsel %vm1714, %v3140, %v3155
        %v3158 = vunpack.c.l.s4 1934713408
        %v3159 = vunpack.c.0.s8 %v3158
        %v3160 = vperm.slane %v3154, %v3159
        %v3162 = vunpack.c.l.s4 1934713408
        %v3163 = vunpack.c.0.s8 %v3162
        %v3164 = vperm.slane %v3156, %v3163
        %v3165 = vrot.slane %v3160, 4
        %v3166 = vsel %vm1714, %v3165, %v3148
        %v3167 = vrot.slane %v3148, 4
        %v3168 = vsel %vm1714, %v3160, %v3167
        %v3169 = vrot.slane %v3164, 4
        %v3170 = vsel %vm1714, %v3169, %v3152
        %v3171 = vrot.slane %v3152, 4
        %v3172 = vsel %vm1714, %v3164, %v3171
        %v3173 = vsel %vm1714, %v3113, %v3094
        %v3175 = vunpack.c.l.s4 1983009808
        %v3176 = vunpack.c.0.s8 %v3175
        %v3177 = vperm.slane %v3173, %v3176
        %v3178 = vrot.slane %v3114, 4
        %v3179 = vsel %vm1714, %v3178, %v3112
        %v3181 = vunpack.c.l.s4 1983009808
        %v3182 = vunpack.c.0.s8 %v3181
        %v3183 = vperm.slane %v3179, %v3182
        %v3184 = vsel %vm1714, %v3117, %v3106
        %v3186 = vunpack.c.l.s4 1983009808
        %v3187 = vunpack.c.0.s8 %v3186
        %v3188 = vperm.slane %v3184, %v3187
        %v3189 = vrot.slane %v3118, 4
        %v3190 = vsel %vm1714, %v3189, %v3116
        %v3192 = vunpack.c.l.s4 1983009808
        %v3193 = vunpack.c.0.s8 %v3192
        %v3194 = vperm.slane %v3190, %v3193
        %v3195 = vrot.slane %v3183, 4
        %v3196 = vsel %vm1714, %v3195, %v3177
        %v3197 = vrot.slane %v3177, 4
        %v3198 = vsel %vm1714, %v3183, %v3197
        %v3200 = vunpack.c.l.s4 1934713408
        %v3201 = vunpack.c.0.s8 %v3200
        %v3202 = vperm.slane %v3196, %v3201
        %v3204 = vunpack.c.l.s4 1934713408
        %v3205 = vunpack.c.0.s8 %v3204
        %v3206 = vperm.slane %v3198, %v3205
        %v3207 = vrot.slane %v3194, 4
        %v3208 = vsel %vm1714, %v3207, %v3188
        %v3209 = vrot.slane %v3188, 4
        %v3210 = vsel %vm1714, %v3194, %v3209
        %v3212 = vunpack.c.l.s4 1934713408
        %v3213 = vunpack.c.0.s8 %v3212
        %v3214 = vperm.slane %v3208, %v3213
        %v3216 = vunpack.c.l.s4 1934713408
        %v3217 = vunpack.c.0.s8 %v3216
        %v3218 = vperm.slane %v3210, %v3217
        %v3219 = vrot.slane %v3214, 4
        %v3220 = vsel %vm1714, %v3219, %v3202
        %v3221 = vrot.slane %v3202, 4
        %v3222 = vsel %vm1714, %v3214, %v3221
        %v3223 = vrot.slane %v3218, 4
        %v3224 = vsel %vm1714, %v3223, %v3206
        %v3225 = vrot.slane %v3206, 4
        %v3226 = vsel %vm1714, %v3218, %v3225
        %3229 = vrot.lane.b32.xlu0 %v3168, 8
        %v3230 = vpop.permute.xlu0 %3229
        %3231 = vrot.lane.b32.xlu0 %v3222, 8
        %v3232 = vpop.permute.xlu0 %3231
        %3237 = vrot.lane.b32.xlu0 %v3170, 16
        %v3238 = vpop.permute.xlu0 %3237
        %3239 = vrot.lane.b32.xlu0 %v3224, 16
        %v3240 = vpop.permute.xlu0 %3239
        %3245 = vrot.lane.b32.xlu0 %v3172, 24
        %v3246 = vpop.permute.xlu0 %3245
        %3247 = vrot.lane.b32.xlu0 %v3226, 24
        %v3248 = vpop.permute.xlu0 %3247
        %v3251 = vsel %vm2422, %v3166, %v3230
        %v3252 = vsel %vm2422, %v3220, %v3232
        %vm3253 = vcmask 130048
        %v3254 = vsel %vm3253, %v3251, %v3238
        %v3255 = vsel %vm3253, %v3252, %v3240
        %vm3256 = vcmask 195584
        %v3257 = vsel %vm3256, %v3254, %v3246
        %v3258 = vsel %vm3256, %v3255, %v3248
        %v3259 = vld [vmem:[%s1044] sm:$0xff]
        %v3260 = vld [vmem:[%s1044 + $0x8] sm:$0xff]
        %v3261 = vld [vmem:[%s1044 + $0x10] sm:$0xff]
        %v3262 = vld [vmem:[%s1044 + $0x18] sm:$0xff]
        %v3263 = vld [vmem:[%s1047] sm:$0x1]
        %v3265 = vperm.slane %v3263, 0
        %v3268 = vsel %vm1663, %v3257, 0
        %v3271 = vsel %vm1663, %v3258, 0
        %3273 = vmatpush.msra.mxu0 0.0
        %3274 = vmatpush.msra.mxu0 0.0
        %3275 = vmatpush.msra.mxu0 0.0
        %3276 = vmatpush.msra.mxu0 0.0
        %3277 = vmatpush.msra.mxu0 0.0
        %3278 = vmatpush.msra.mxu0 0.0
        %3279 = vmatpush.msra.mxu0 0.0
        %3280 = vmatpush.msra.mxu0 0.0
        %3281 = vmatpush.msra.mxu0 0.0
        %3282 = vmatpush.msra.mxu0 0.0
        %3283 = vmatpush.msra.mxu0 0.0
        %3284 = vmatpush.msra.mxu0 0.0
        %3285 = vmatpush.msra.mxu0 %v3262
        %3286 = vmatpush.msra.mxu0 %v3261
        %3287 = vmatpush.msra.mxu0 %v3260
        %3288 = vmatpush.msra.mxu0 %v3259
        %3289 = vmatmul.f32.gmra.mxu0 %v3268
        %v3290 = vpop.f32.mrf.mxu0
        %v3291 = vadd.f32 %v3265, %v3290
        %3292 = vmatmul.f32.gmra.mxu0 %v3271
        %v3293 = vpop.f32.mrf.mxu0
        %v3294 = vadd.f32 %v3265, %v3293
        %3295 = vdwg.mxu0
        %v3296 = vmax.f32 %v3291, 0.0
        %v3297 = vmax.f32 %v3294, 0.0
        %v3298 = vadd.f32 %v1651, %v3296
        %v3299 = vadd.f32 %v1652, %v3297
        %v3300 = vmax.f32 %v3298, 0.0
        %v3301 = vmax.f32 %v3299, 0.0
        %v3302 = vld [vmem:[%s1050] sm:$0x1]
        %v3303 = vld [vmem:[%s870] sm:$0x1]
        %v3304 = vsel %vm1663, %v3300, 0.0
        %3305 = vadd.xlane.f32.xlu0 %v3304
        %v3306 = vpop.xlane.xlu0 %3305
        %v3307 = vsel %vm1663, %v3301, 0.0
        %3308 = vadd.xlane.f32.xlu0 %v3307
        %v3309 = vpop.xlane.xlu0 %3308
        %v3310 = vrcp.pop 32.0
        %v3311 = vmul.f32 32.0, %v3310
        %v3312 = vsub.f32 1.0, %v3311
        %v3313 = vmul.f32 %v3310, %v3312
        %v3314 = vadd.f32 %v3310, %v3313
        %vm3315 = vweird.f32 %v3310
        %v3316 = vsel %vm3315, %v3310, %v3314
        %v3317 = vmul.f32 %v3306, %v3316
        %v3318 = vmul.f32 %v3309, %v3316
        %v3319 = vsub.f32 %v3300, %v3317
        %v3320 = vsub.f32 %v3301, %v3318
        %v3321 = vmul.f32 %v3319, %v3319
        %v3322 = vmul.f32 %v3320, %v3320
        %v3323 = vsel %vm1663, %v3321, 0.0
        %3324 = vadd.xlane.f32.xlu0 %v3323
        %v3325 = vpop.xlane.xlu0 %3324
        %v3326 = vsel %vm1663, %v3322, 0.0
        %3327 = vadd.xlane.f32.xlu0 %v3326
        %v3328 = vpop.xlane.xlu0 %3327
        %v3329 = vmul.f32 %v3325, %v3316
        %v3330 = vmul.f32 %v3328, %v3316
        %v3331 = vadd.f32 %v3329, 1e-05
        %v3332 = vadd.f32 %v3330, 1e-05
        %v3333 = vrsqrt.pop %v3331
        %v3334 = vmul.f32 %v3333, %v3331
        %v3335 = vmul.f32 %v3334, %v3333
        %v3336 = vmul.f32 0.5, %v3335
        %v3337 = vsub.f32 1.5, %v3336
        %v3338 = vmul.f32 %v3333, %v3337
        %vm3339 = vweird.f32 %v3331
        %vm3340 = vweird.f32 %v3333
        %vm3341 = vmor %vm3339, %vm3340
        %v3342 = vsel %vm3341, %v3333, %v3338
        %v3343 = vrsqrt.pop %v3332
        %v3344 = vmul.f32 %v3343, %v3332
        %v3345 = vmul.f32 %v3344, %v3343
        %v3346 = vmul.f32 0.5, %v3345
        %v3347 = vsub.f32 1.5, %v3346
        %v3348 = vmul.f32 %v3343, %v3347
        %vm3349 = vweird.f32 %v3332
        %vm3350 = vweird.f32 %v3343
        %vm3351 = vmor %vm3349, %vm3350
        %v3352 = vsel %vm3351, %v3343, %v3348
        %v3353 = vmul.f32 %v3319, %v3342
        %v3354 = vmul.f32 %v3320, %v3352
        %v3356 = vperm.slane %v3302, 0
        %v3358 = vmul.f32 %v3353, %v3356
        %v3359 = vmul.f32 %v3354, %v3356
        %v3361 = vperm.slane %v3303, 0
        %v3363 = vadd.f32 %v3358, %v3361
        %v3364 = vadd.f32 %v3359, %v3361
        %3367 = vrot.lane.b32.xlu0 %v3363, 120
        %v3368 = vpop.permute.xlu0 %3367
        %3369 = vrot.lane.b32.xlu0 %v3364, 120
        %v3370 = vpop.permute.xlu0 %3369
        %3373 = vrot.lane.b32.xlu0 %v3363, 112
        %v3374 = vpop.permute.xlu0 %3373
        %3375 = vrot.lane.b32.xlu0 %v3364, 112
        %v3376 = vpop.permute.xlu0 %3375
        %3379 = vrot.lane.b32.xlu0 %v3363, 104
        %v3380 = vpop.permute.xlu0 %3379
        %3381 = vrot.lane.b32.xlu0 %v3364, 104
        %v3382 = vpop.permute.xlu0 %3381
        %v3385 = vrot.slane %v3374, 4
        %v3386 = vsel %vm1714, %v3385, %v3363
        %v3387 = vrot.slane %v3363, 4
        %v3388 = vsel %vm1714, %v3374, %v3387
        %v3390 = vunpack.c.l.s4 1983009808
        %v3391 = vunpack.c.0.s8 %v3390
        %v3392 = vperm.slane %v3386, %v3391
        %v3394 = vunpack.c.l.s4 1983009808
        %v3395 = vunpack.c.0.s8 %v3394
        %v3396 = vperm.slane %v3388, %v3395
        %v3397 = vrot.slane %v3380, 4
        %v3398 = vsel %vm1714, %v3397, %v3368
        %v3399 = vrot.slane %v3368, 4
        %v3400 = vsel %vm1714, %v3380, %v3399
        %v3402 = vunpack.c.l.s4 1983009808
        %v3403 = vunpack.c.0.s8 %v3402
        %v3404 = vperm.slane %v3398, %v3403
        %v3406 = vunpack.c.l.s4 1983009808
        %v3407 = vunpack.c.0.s8 %v3406
        %v3408 = vperm.slane %v3400, %v3407
        %v3409 = vrot.slane %v3404, 4
        %v3410 = vsel %vm1714, %v3409, %v3392
        %v3411 = vrot.slane %v3392, 4
        %v3412 = vsel %vm1714, %v3404, %v3411
        %v3414 = vunpack.c.l.s4 1934713408
        %v3415 = vunpack.c.0.s8 %v3414
        %v3416 = vperm.slane %v3410, %v3415
        %v3418 = vunpack.c.l.s4 1934713408
        %v3419 = vunpack.c.0.s8 %v3418
        %v3420 = vperm.slane %v3412, %v3419
        %v3421 = vrot.slane %v3408, 4
        %v3422 = vsel %vm1714, %v3421, %v3396
        %v3423 = vrot.slane %v3396, 4
        %v3424 = vsel %vm1714, %v3408, %v3423
        %v3426 = vunpack.c.l.s4 1934713408
        %v3427 = vunpack.c.0.s8 %v3426
        %v3428 = vperm.slane %v3422, %v3427
        %v3430 = vunpack.c.l.s4 1934713408
        %v3431 = vunpack.c.0.s8 %v3430
        %v3432 = vperm.slane %v3424, %v3431
        %v3433 = vrot.slane %v3416, 4
        %v3434 = vsel %vm1714, 0.0, %v3433
        %v3435 = vrot.slane %v3420, 4
        %v3436 = vsel %vm1714, 0.0, %v3435
        %v3437 = vrot.slane %v3428, 4
        %v3438 = vsel %vm1714, 0.0, %v3437
        %v3439 = vrot.slane %v3432, 4
        %v3440 = vsel %vm1714, 0.0, %v3439
        %v3441 = vrot.slane %v3376, 4
        %v3442 = vsel %vm1714, %v3441, %v3364
        %v3443 = vrot.slane %v3364, 4
        %v3444 = vsel %vm1714, %v3376, %v3443
        %v3446 = vunpack.c.l.s4 1983009808
        %v3447 = vunpack.c.0.s8 %v3446
        %v3448 = vperm.slane %v3442, %v3447
        %v3450 = vunpack.c.l.s4 1983009808
        %v3451 = vunpack.c.0.s8 %v3450
        %v3452 = vperm.slane %v3444, %v3451
        %v3453 = vrot.slane %v3382, 4
        %v3454 = vsel %vm1714, %v3453, %v3370
        %v3455 = vrot.slane %v3370, 4
        %v3456 = vsel %vm1714, %v3382, %v3455
        %v3458 = vunpack.c.l.s4 1983009808
        %v3459 = vunpack.c.0.s8 %v3458
        %v3460 = vperm.slane %v3454, %v3459
        %v3462 = vunpack.c.l.s4 1983009808
        %v3463 = vunpack.c.0.s8 %v3462
        %v3464 = vperm.slane %v3456, %v3463
        %v3465 = vrot.slane %v3460, 4
        %v3466 = vsel %vm1714, %v3465, %v3448
        %v3467 = vrot.slane %v3448, 4
        %v3468 = vsel %vm1714, %v3460, %v3467
        %v3470 = vunpack.c.l.s4 1934713408
        %v3471 = vunpack.c.0.s8 %v3470
        %v3472 = vperm.slane %v3466, %v3471
        %v3474 = vunpack.c.l.s4 1934713408
        %v3475 = vunpack.c.0.s8 %v3474
        %v3476 = vperm.slane %v3468, %v3475
        %v3477 = vrot.slane %v3464, 4
        %v3478 = vsel %vm1714, %v3477, %v3452
        %v3479 = vrot.slane %v3452, 4
        %v3480 = vsel %vm1714, %v3464, %v3479
        %v3482 = vunpack.c.l.s4 1934713408
        %v3483 = vunpack.c.0.s8 %v3482
        %v3484 = vperm.slane %v3478, %v3483
        %v3486 = vunpack.c.l.s4 1934713408
        %v3487 = vunpack.c.0.s8 %v3486
        %v3488 = vperm.slane %v3480, %v3487
        %v3489 = vrot.slane %v3472, 4
        %v3490 = vsel %vm1714, 0.0, %v3489
        %v3491 = vrot.slane %v3476, 4
        %v3492 = vsel %vm1714, 0.0, %v3491
        %v3493 = vrot.slane %v3484, 4
        %v3494 = vsel %vm1714, 0.0, %v3493
        %v3495 = vrot.slane %v3488, 4
        %v3496 = vsel %vm1714, 0.0, %v3495
        %v3497 = vsel %vm1714, %v3435, %v3416
        %v3499 = vunpack.c.l.s4 1983009808
        %v3500 = vunpack.c.0.s8 %v3499
        %v3501 = vperm.slane %v3497, %v3500
        %v3502 = vrot.slane %v3436, 4
        %v3503 = vsel %vm1714, %v3502, %v3434
        %v3505 = vunpack.c.l.s4 1983009808
        %v3506 = vunpack.c.0.s8 %v3505
        %v3507 = vperm.slane %v3503, %v3506
        %v3508 = vsel %vm1714, %v3439, %v3428
        %v3510 = vunpack.c.l.s4 1983009808
        %v3511 = vunpack.c.0.s8 %v3510
        %v3512 = vperm.slane %v3508, %v3511
        %v3513 = vrot.slane %v3440, 4
        %v3514 = vsel %vm1714, %v3513, %v3438
        %v3516 = vunpack.c.l.s4 1983009808
        %v3517 = vunpack.c.0.s8 %v3516
        %v3518 = vperm.slane %v3514, %v3517
        %v3519 = vrot.slane %v3507, 4
        %v3520 = vsel %vm1714, %v3519, %v3501
        %v3521 = vrot.slane %v3501, 4
        %v3522 = vsel %vm1714, %v3507, %v3521
        %v3524 = vunpack.c.l.s4 1934713408
        %v3525 = vunpack.c.0.s8 %v3524
        %v3526 = vperm.slane %v3520, %v3525
        %v3528 = vunpack.c.l.s4 1934713408
        %v3529 = vunpack.c.0.s8 %v3528
        %v3530 = vperm.slane %v3522, %v3529
        %v3531 = vrot.slane %v3518, 4
        %v3532 = vsel %vm1714, %v3531, %v3512
        %v3533 = vrot.slane %v3512, 4
        %v3534 = vsel %vm1714, %v3518, %v3533
        %v3536 = vunpack.c.l.s4 1934713408
        %v3537 = vunpack.c.0.s8 %v3536
        %v3538 = vperm.slane %v3532, %v3537
        %v3540 = vunpack.c.l.s4 1934713408
        %v3541 = vunpack.c.0.s8 %v3540
        %v3542 = vperm.slane %v3534, %v3541
        %v3543 = vrot.slane %v3538, 4
        %v3544 = vsel %vm1714, %v3543, %v3526
        %v3545 = vrot.slane %v3526, 4
        %v3546 = vsel %vm1714, %v3538, %v3545
        %v3547 = vrot.slane %v3542, 4
        %v3548 = vsel %vm1714, %v3547, %v3530
        %v3549 = vrot.slane %v3530, 4
        %v3550 = vsel %vm1714, %v3542, %v3549
        %v3551 = vsel %vm1714, %v3491, %v3472
        %v3553 = vunpack.c.l.s4 1983009808
        %v3554 = vunpack.c.0.s8 %v3553
        %v3555 = vperm.slane %v3551, %v3554
        %v3556 = vrot.slane %v3492, 4
        %v3557 = vsel %vm1714, %v3556, %v3490
        %v3559 = vunpack.c.l.s4 1983009808
        %v3560 = vunpack.c.0.s8 %v3559
        %v3561 = vperm.slane %v3557, %v3560
        %v3562 = vsel %vm1714, %v3495, %v3484
        %v3564 = vunpack.c.l.s4 1983009808
        %v3565 = vunpack.c.0.s8 %v3564
        %v3566 = vperm.slane %v3562, %v3565
        %v3567 = vrot.slane %v3496, 4
        %v3568 = vsel %vm1714, %v3567, %v3494
        %v3570 = vunpack.c.l.s4 1983009808
        %v3571 = vunpack.c.0.s8 %v3570
        %v3572 = vperm.slane %v3568, %v3571
        %v3573 = vrot.slane %v3561, 4
        %v3574 = vsel %vm1714, %v3573, %v3555
        %v3575 = vrot.slane %v3555, 4
        %v3576 = vsel %vm1714, %v3561, %v3575
        %v3578 = vunpack.c.l.s4 1934713408
        %v3579 = vunpack.c.0.s8 %v3578
        %v3580 = vperm.slane %v3574, %v3579
        %v3582 = vunpack.c.l.s4 1934713408
        %v3583 = vunpack.c.0.s8 %v3582
        %v3584 = vperm.slane %v3576, %v3583
        %v3585 = vrot.slane %v3572, 4
        %v3586 = vsel %vm1714, %v3585, %v3566
        %v3587 = vrot.slane %v3566, 4
        %v3588 = vsel %vm1714, %v3572, %v3587
        %v3590 = vunpack.c.l.s4 1934713408
        %v3591 = vunpack.c.0.s8 %v3590
        %v3592 = vperm.slane %v3586, %v3591
        %v3594 = vunpack.c.l.s4 1934713408
        %v3595 = vunpack.c.0.s8 %v3594
        %v3596 = vperm.slane %v3588, %v3595
        %v3597 = vrot.slane %v3592, 4
        %v3598 = vsel %vm1714, %v3597, %v3580
        %v3599 = vrot.slane %v3580, 4
        %v3600 = vsel %vm1714, %v3592, %v3599
        %v3601 = vrot.slane %v3596, 4
        %v3602 = vsel %vm1714, %v3601, %v3584
        %v3603 = vrot.slane %v3584, 4
        %v3604 = vsel %vm1714, %v3596, %v3603
        %v3605 = vld [vmem:[#allocation3] sm:$0xff]
        %v3606 = vld [vmem:[#allocation3 + $0x8] sm:$0xff]
        %v3607 = vld [vmem:[#allocation3 + $0x10] sm:$0xff]
        %v3608 = vld [vmem:[#allocation3 + $0x18] sm:$0xff]
        %v3609 = vld [vmem:[#allocation3 + $0x20] sm:$0xff]
        %v3610 = vld [vmem:[#allocation3 + $0x28] sm:$0xff]
        %v3611 = vld [vmem:[#allocation3 + $0x30] sm:$0xff]
        %v3612 = vld [vmem:[#allocation3 + $0x38] sm:$0xff]
        %v3613 = vld [vmem:[#allocation4] sm:$0xff]
        %v3614 = vld [vmem:[#allocation4 + $0x8] sm:$0xff]
        %v3615 = vld [vmem:[#allocation4 + $0x10] sm:$0xff]
        %v3616 = vld [vmem:[#allocation4 + $0x18] sm:$0xff]
        %v3617 = vld [vmem:[#allocation4 + $0x20] sm:$0xff]
        %v3618 = vld [vmem:[#allocation4 + $0x28] sm:$0xff]
        %v3619 = vld [vmem:[#allocation4 + $0x30] sm:$0xff]
        %v3620 = vld [vmem:[#allocation4 + $0x38] sm:$0xff]
        %v3622 = vsel %vm2422, %v3544, 0
        %v3625 = vsel %vm2422, %v3605, 0
        %3627 = vmatpush.xpose.msra.mxu0 0.0
        %3628 = vmatpush.xpose.msra.mxu0 0.0
        %3629 = vmatpush.xpose.msra.mxu0 0.0
        %3630 = vmatpush.xpose.msra.mxu0 0.0
        %3631 = vmatpush.xpose.msra.mxu0 0.0
        %3632 = vmatpush.xpose.msra.mxu0 0.0
        %3633 = vmatpush.xpose.msra.mxu0 0.0
        %3634 = vmatpush.xpose.msra.mxu0 0.0
        %3635 = vmatpush.xpose.msra.mxu0 0.0
        %3636 = vmatpush.xpose.msra.mxu0 0.0
        %3637 = vmatpush.xpose.msra.mxu0 0.0
        %3638 = vmatpush.xpose.msra.mxu0 0.0
        %3639 = vmatpush.xpose.msra.mxu0 0.0
        %3640 = vmatpush.xpose.msra.mxu0 0.0
        %3641 = vmatpush.xpose.msra.mxu0 0.0
        %3642 = vmatpush.xpose.msra.mxu0 %v3625
        %3643 = vmatmul.f32.gmra.mxu0 %v3622
        %v3644 = vpop.f32.mrf.mxu0
        %v3645 = vadd.f32 0.0, %v3644
        %3646 = vdwg.mxu0
        %v3648 = vsel %vm2422, %v3546, 0
        %v3651 = vsel %vm2422, %v3606, 0
        %3653 = vmatpush.xpose.msra.mxu0 0.0
        %3654 = vmatpush.xpose.msra.mxu0 0.0
        %3655 = vmatpush.xpose.msra.mxu0 0.0
        %3656 = vmatpush.xpose.msra.mxu0 0.0
        %3657 = vmatpush.xpose.msra.mxu0 0.0
        %3658 = vmatpush.xpose.msra.mxu0 0.0
        %3659 = vmatpush.xpose.msra.mxu0 0.0
        %3660 = vmatpush.xpose.msra.mxu0 0.0
        %3661 = vmatpush.xpose.msra.mxu0 0.0
        %3662 = vmatpush.xpose.msra.mxu0 0.0
        %3663 = vmatpush.xpose.msra.mxu0 0.0
        %3664 = vmatpush.xpose.msra.mxu0 0.0
        %3665 = vmatpush.xpose.msra.mxu0 0.0
        %3666 = vmatpush.xpose.msra.mxu0 0.0
        %3667 = vmatpush.xpose.msra.mxu0 0.0
        %3668 = vmatpush.xpose.msra.mxu0 %v3651
        %3669 = vmatmul.f32.gmra.mxu0 %v3648
        %v3670 = vpop.f32.mrf.mxu0
        %v3671 = vadd.f32 0.0, %v3670
        %3672 = vdwg.mxu0
        %v3674 = vsel %vm2422, %v3548, 0
        %v3677 = vsel %vm2422, %v3607, 0
        %3679 = vmatpush.xpose.msra.mxu0 0.0
        %3680 = vmatpush.xpose.msra.mxu0 0.0
        %3681 = vmatpush.xpose.msra.mxu0 0.0
        %3682 = vmatpush.xpose.msra.mxu0 0.0
        %3683 = vmatpush.xpose.msra.mxu0 0.0
        %3684 = vmatpush.xpose.msra.mxu0 0.0
        %3685 = vmatpush.xpose.msra.mxu0 0.0
        %3686 = vmatpush.xpose.msra.mxu0 0.0
        %3687 = vmatpush.xpose.msra.mxu0 0.0
        %3688 = vmatpush.xpose.msra.mxu0 0.0
        %3689 = vmatpush.xpose.msra.mxu0 0.0
        %3690 = vmatpush.xpose.msra.mxu0 0.0
        %3691 = vmatpush.xpose.msra.mxu0 0.0
        %3692 = vmatpush.xpose.msra.mxu0 0.0
        %3693 = vmatpush.xpose.msra.mxu0 0.0
        %3694 = vmatpush.xpose.msra.mxu0 %v3677
        %3695 = vmatmul.f32.gmra.mxu0 %v3674
        %v3696 = vpop.f32.mrf.mxu0
        %v3697 = vadd.f32 0.0, %v3696
        %3698 = vdwg.mxu0
        %v3700 = vsel %vm2422, %v3550, 0
        %v3703 = vsel %vm2422, %v3608, 0
        %3705 = vmatpush.xpose.msra.mxu0 0.0
        %3706 = vmatpush.xpose.msra.mxu0 0.0
        %3707 = vmatpush.xpose.msra.mxu0 0.0
        %3708 = vmatpush.xpose.msra.mxu0 0.0
        %3709 = vmatpush.xpose.msra.mxu0 0.0
        %3710 = vmatpush.xpose.msra.mxu0 0.0
        %3711 = vmatpush.xpose.msra.mxu0 0.0
        %3712 = vmatpush.xpose.msra.mxu0 0.0
        %3713 = vmatpush.xpose.msra.mxu0 0.0
        %3714 = vmatpush.xpose.msra.mxu0 0.0
        %3715 = vmatpush.xpose.msra.mxu0 0.0
        %3716 = vmatpush.xpose.msra.mxu0 0.0
        %3717 = vmatpush.xpose.msra.mxu0 0.0
        %3718 = vmatpush.xpose.msra.mxu0 0.0
        %3719 = vmatpush.xpose.msra.mxu0 0.0
        %3720 = vmatpush.xpose.msra.mxu0 %v3703
        %3721 = vmatmul.f32.gmra.mxu0 %v3700
        %v3722 = vpop.f32.mrf.mxu0
        %v3723 = vadd.f32 0.0, %v3722
        %3724 = vdwg.mxu0
        %v3726 = vsel %vm2422, %v3598, 0
        %v3729 = vsel %vm2422, %v3609, 0
        %3731 = vmatpush.xpose.msra.mxu0 0.0
        %3732 = vmatpush.xpose.msra.mxu0 0.0
        %3733 = vmatpush.xpose.msra.mxu0 0.0
        %3734 = vmatpush.xpose.msra.mxu0 0.0
        %3735 = vmatpush.xpose.msra.mxu0 0.0
        %3736 = vmatpush.xpose.msra.mxu0 0.0
        %3737 = vmatpush.xpose.msra.mxu0 0.0
        %3738 = vmatpush.xpose.msra.mxu0 0.0
        %3739 = vmatpush.xpose.msra.mxu0 0.0
        %3740 = vmatpush.xpose.msra.mxu0 0.0
        %3741 = vmatpush.xpose.msra.mxu0 0.0
        %3742 = vmatpush.xpose.msra.mxu0 0.0
        %3743 = vmatpush.xpose.msra.mxu0 0.0
        %3744 = vmatpush.xpose.msra.mxu0 0.0
        %3745 = vmatpush.xpose.msra.mxu0 0.0
        %3746 = vmatpush.xpose.msra.mxu0 %v3729
        %3747 = vmatmul.f32.gmra.mxu0 %v3726
        %v3748 = vpop.f32.mrf.mxu0
        %v3749 = vadd.f32 0.0, %v3748
        %3750 = vdwg.mxu0
        %v3752 = vsel %vm2422, %v3600, 0
        %v3755 = vsel %vm2422, %v3610, 0
        %3757 = vmatpush.xpose.msra.mxu0 0.0
        %3758 = vmatpush.xpose.msra.mxu0 0.0
        %3759 = vmatpush.xpose.msra.mxu0 0.0
        %3760 = vmatpush.xpose.msra.mxu0 0.0
        %3761 = vmatpush.xpose.msra.mxu0 0.0
        %3762 = vmatpush.xpose.msra.mxu0 0.0
        %3763 = vmatpush.xpose.msra.mxu0 0.0
        %3764 = vmatpush.xpose.msra.mxu0 0.0
        %3765 = vmatpush.xpose.msra.mxu0 0.0
        %3766 = vmatpush.xpose.msra.mxu0 0.0
        %3767 = vmatpush.xpose.msra.mxu0 0.0
        %3768 = vmatpush.xpose.msra.mxu0 0.0
        %3769 = vmatpush.xpose.msra.mxu0 0.0
        %3770 = vmatpush.xpose.msra.mxu0 0.0
        %3771 = vmatpush.xpose.msra.mxu0 0.0
        %3772 = vmatpush.xpose.msra.mxu0 %v3755
        %3773 = vmatmul.f32.gmra.mxu0 %v3752
        %v3774 = vpop.f32.mrf.mxu0
        %v3775 = vadd.f32 0.0, %v3774
        %3776 = vdwg.mxu0
        %v3778 = vsel %vm2422, %v3602, 0
        %v3781 = vsel %vm2422, %v3611, 0
        %3783 = vmatpush.xpose.msra.mxu0 0.0
        %3784 = vmatpush.xpose.msra.mxu0 0.0
        %3785 = vmatpush.xpose.msra.mxu0 0.0
        %3786 = vmatpush.xpose.msra.mxu0 0.0
        %3787 = vmatpush.xpose.msra.mxu0 0.0
        %3788 = vmatpush.xpose.msra.mxu0 0.0
        %3789 = vmatpush.xpose.msra.mxu0 0.0
        %3790 = vmatpush.xpose.msra.mxu0 0.0
        %3791 = vmatpush.xpose.msra.mxu0 0.0
        %3792 = vmatpush.xpose.msra.mxu0 0.0
        %3793 = vmatpush.xpose.msra.mxu0 0.0
        %3794 = vmatpush.xpose.msra.mxu0 0.0
        %3795 = vmatpush.xpose.msra.mxu0 0.0
        %3796 = vmatpush.xpose.msra.mxu0 0.0
        %3797 = vmatpush.xpose.msra.mxu0 0.0
        %3798 = vmatpush.xpose.msra.mxu0 %v3781
        %3799 = vmatmul.f32.gmra.mxu0 %v3778
        %v3800 = vpop.f32.mrf.mxu0
        %v3801 = vadd.f32 0.0, %v3800
        %3802 = vdwg.mxu0
        %v3804 = vsel %vm2422, %v3604, 0
        %v3807 = vsel %vm2422, %v3612, 0
        %3809 = vmatpush.xpose.msra.mxu0 0.0
        %3810 = vmatpush.xpose.msra.mxu0 0.0
        %3811 = vmatpush.xpose.msra.mxu0 0.0
        %3812 = vmatpush.xpose.msra.mxu0 0.0
        %3813 = vmatpush.xpose.msra.mxu0 0.0
        %3814 = vmatpush.xpose.msra.mxu0 0.0
        %3815 = vmatpush.xpose.msra.mxu0 0.0
        %3816 = vmatpush.xpose.msra.mxu0 0.0
        %3817 = vmatpush.xpose.msra.mxu0 0.0
        %3818 = vmatpush.xpose.msra.mxu0 0.0
        %3819 = vmatpush.xpose.msra.mxu0 0.0
        %3820 = vmatpush.xpose.msra.mxu0 0.0
        %3821 = vmatpush.xpose.msra.mxu0 0.0
        %3822 = vmatpush.xpose.msra.mxu0 0.0
        %3823 = vmatpush.xpose.msra.mxu0 0.0
        %3824 = vmatpush.xpose.msra.mxu0 %v3807
        %3825 = vmatmul.f32.gmra.mxu0 %v3804
        %v3826 = vpop.f32.mrf.mxu0
        %v3827 = vadd.f32 0.0, %v3826
        %3828 = vdwg.mxu0
        %v3829 = vsel %vm2422, %v3645, -inf
        %3830 = vmax.xlane.f32.xlu0 %v3829
        %v3831 = vpop.xlane.xlu0 %3830
        %v3832 = vsel %vm2422, %v3671, -inf
        %3833 = vmax.xlane.f32.xlu0 %v3832
        %v3834 = vpop.xlane.xlu0 %3833
        %v3835 = vsel %vm2422, %v3697, -inf
        %3836 = vmax.xlane.f32.xlu0 %v3835
        %v3837 = vpop.xlane.xlu0 %3836
        %v3838 = vsel %vm2422, %v3723, -inf
        %3839 = vmax.xlane.f32.xlu0 %v3838
        %v3840 = vpop.xlane.xlu0 %3839
        %v3841 = vsel %vm2422, %v3749, -inf
        %3842 = vmax.xlane.f32.xlu0 %v3841
        %v3843 = vpop.xlane.xlu0 %3842
        %v3844 = vsel %vm2422, %v3775, -inf
        %3845 = vmax.xlane.f32.xlu0 %v3844
        %v3846 = vpop.xlane.xlu0 %3845
        %v3847 = vsel %vm2422, %v3801, -inf
        %3848 = vmax.xlane.f32.xlu0 %v3847
        %v3849 = vpop.xlane.xlu0 %3848
        %v3850 = vsel %vm2422, %v3827, -inf
        %3851 = vmax.xlane.f32.xlu0 %v3850
        %v3852 = vpop.xlane.xlu0 %3851
        %v3853 = vsub.f32 %v3645, %v3831
        %v3854 = vsub.f32 %v3671, %v3834
        %v3855 = vsub.f32 %v3697, %v3837
        %v3856 = vsub.f32 %v3723, %v3840
        %v3857 = vsub.f32 %v3749, %v3843
        %v3858 = vsub.f32 %v3775, %v3846
        %v3859 = vsub.f32 %v3801, %v3849
        %v3860 = vsub.f32 %v3827, %v3852
        %v3861 = vmul.f32 %v3853, 1.442695
        %v3862 = vpow.pop %v3861
        %v3863 = vmul.f32 %v3854, 1.442695
        %v3864 = vpow.pop %v3863
        %v3865 = vmul.f32 %v3855, 1.442695
        %v3866 = vpow.pop %v3865
        %v3867 = vmul.f32 %v3856, 1.442695
        %v3868 = vpow.pop %v3867
        %v3869 = vmul.f32 %v3857, 1.442695
        %v3870 = vpow.pop %v3869
        %v3871 = vmul.f32 %v3858, 1.442695
        %v3872 = vpow.pop %v3871
        %v3873 = vmul.f32 %v3859, 1.442695
        %v3874 = vpow.pop %v3873
        %v3875 = vmul.f32 %v3860, 1.442695
        %v3876 = vpow.pop %v3875
        %v3877 = vsel %vm2422, %v3862, 0.0
        %3878 = vadd.xlane.f32.xlu0 %v3877
        %v3879 = vpop.xlane.xlu0 %3878
        %v3880 = vsel %vm2422, %v3864, 0.0
        %3881 = vadd.xlane.f32.xlu0 %v3880
        %v3882 = vpop.xlane.xlu0 %3881
        %v3883 = vsel %vm2422, %v3866, 0.0
        %3884 = vadd.xlane.f32.xlu0 %v3883
        %v3885 = vpop.xlane.xlu0 %3884
        %v3886 = vsel %vm2422, %v3868, 0.0
        %3887 = vadd.xlane.f32.xlu0 %v3886
        %v3888 = vpop.xlane.xlu0 %3887
        %v3889 = vsel %vm2422, %v3870, 0.0
        %3890 = vadd.xlane.f32.xlu0 %v3889
        %v3891 = vpop.xlane.xlu0 %3890
        %v3892 = vsel %vm2422, %v3872, 0.0
        %3893 = vadd.xlane.f32.xlu0 %v3892
        %v3894 = vpop.xlane.xlu0 %3893
        %v3895 = vsel %vm2422, %v3874, 0.0
        %3896 = vadd.xlane.f32.xlu0 %v3895
        %v3897 = vpop.xlane.xlu0 %3896
        %v3898 = vsel %vm2422, %v3876, 0.0
        %3899 = vadd.xlane.f32.xlu0 %v3898
        %v3900 = vpop.xlane.xlu0 %3899
        %v3901 = vrcp.pop %v3879
        %v3902 = vmul.f32 %v3879, %v3901
        %v3903 = vsub.f32 1.0, %v3902
        %v3904 = vmul.f32 %v3901, %v3903
        %v3905 = vadd.f32 %v3901, %v3904
        %vm3906 = vweird.f32 %v3879
        %vm3907 = vweird.f32 %v3901
        %vm3908 = vmor %vm3906, %vm3907
        %v3909 = vsel %vm3908, %v3901, %v3905
        %v3910 = vand.u32 2147483647, %v3879
        %vm3911 = vcmp.eq.f32.partialorder %v3910, 8.507059e+37
        %v3912 = vand.u32 %v3879, 2147483648
        %v3913 = vor.u32 1.1754944e-38, %v3912
        %v3914 = vsel %vm3911, %v3913, %v3909
        %v3915 = vrcp.pop %v3882
        %v3916 = vmul.f32 %v3882, %v3915
        %v3917 = vsub.f32 1.0, %v3916
        %v3918 = vmul.f32 %v3915, %v3917
        %v3919 = vadd.f32 %v3915, %v3918
        %vm3920 = vweird.f32 %v3882
        %vm3921 = vweird.f32 %v3915
        %vm3922 = vmor %vm3920, %vm3921
        %v3923 = vsel %vm3922, %v3915, %v3919
        %v3924 = vand.u32 2147483647, %v3882
        %vm3925 = vcmp.eq.f32.partialorder %v3924, 8.507059e+37
        %v3926 = vand.u32 %v3882, 2147483648
        %v3927 = vor.u32 1.1754944e-38, %v3926
        %v3928 = vsel %vm3925, %v3927, %v3923
        %v3929 = vrcp.pop %v3885
        %v3930 = vmul.f32 %v3885, %v3929
        %v3931 = vsub.f32 1.0, %v3930
        %v3932 = vmul.f32 %v3929, %v3931
        %v3933 = vadd.f32 %v3929, %v3932
        %vm3934 = vweird.f32 %v3885
        %vm3935 = vweird.f32 %v3929
        %vm3936 = vmor %vm3934, %vm3935
        %v3937 = vsel %vm3936, %v3929, %v3933
        %v3938 = vand.u32 2147483647, %v3885
        %vm3939 = vcmp.eq.f32.partialorder %v3938, 8.507059e+37
        %v3940 = vand.u32 %v3885, 2147483648
        %v3941 = vor.u32 1.1754944e-38, %v3940
        %v3942 = vsel %vm3939, %v3941, %v3937
        %v3943 = vrcp.pop %v3888
        %v3944 = vmul.f32 %v3888, %v3943
        %v3945 = vsub.f32 1.0, %v3944
        %v3946 = vmul.f32 %v3943, %v3945
        %v3947 = vadd.f32 %v3943, %v3946
        %vm3948 = vweird.f32 %v3888
        %vm3949 = vweird.f32 %v3943
        %vm3950 = vmor %vm3948, %vm3949
        %v3951 = vsel %vm3950, %v3943, %v3947
        %v3952 = vand.u32 2147483647, %v3888
        %vm3953 = vcmp.eq.f32.partialorder %v3952, 8.507059e+37
        %v3954 = vand.u32 %v3888, 2147483648
        %v3955 = vor.u32 1.1754944e-38, %v3954
        %v3956 = vsel %vm3953, %v3955, %v3951
        %v3957 = vrcp.pop %v3891
        %v3958 = vmul.f32 %v3891, %v3957
        %v3959 = vsub.f32 1.0, %v3958
        %v3960 = vmul.f32 %v3957, %v3959
        %v3961 = vadd.f32 %v3957, %v3960
        %vm3962 = vweird.f32 %v3891
        %vm3963 = vweird.f32 %v3957
        %vm3964 = vmor %vm3962, %vm3963
        %v3965 = vsel %vm3964, %v3957, %v3961
        %v3966 = vand.u32 2147483647, %v3891
        %vm3967 = vcmp.eq.f32.partialorder %v3966, 8.507059e+37
        %v3968 = vand.u32 %v3891, 2147483648
        %v3969 = vor.u32 1.1754944e-38, %v3968
        %v3970 = vsel %vm3967, %v3969, %v3965
        %v3971 = vrcp.pop %v3894
        %v3972 = vmul.f32 %v3894, %v3971
        %v3973 = vsub.f32 1.0, %v3972
        %v3974 = vmul.f32 %v3971, %v3973
        %v3975 = vadd.f32 %v3971, %v3974
        %vm3976 = vweird.f32 %v3894
        %vm3977 = vweird.f32 %v3971
        %vm3978 = vmor %vm3976, %vm3977
        %v3979 = vsel %vm3978, %v3971, %v3975
        %v3980 = vand.u32 2147483647, %v3894
        %vm3981 = vcmp.eq.f32.partialorder %v3980, 8.507059e+37
        %v3982 = vand.u32 %v3894, 2147483648
        %v3983 = vor.u32 1.1754944e-38, %v3982
        %v3984 = vsel %vm3981, %v3983, %v3979
        %v3985 = vrcp.pop %v3897
        %v3986 = vmul.f32 %v3897, %v3985
        %v3987 = vsub.f32 1.0, %v3986
        %v3988 = vmul.f32 %v3985, %v3987
        %v3989 = vadd.f32 %v3985, %v3988
        %vm3990 = vweird.f32 %v3897
        %vm3991 = vweird.f32 %v3985
        %vm3992 = vmor %vm3990, %vm3991
        %v3993 = vsel %vm3992, %v3985, %v3989
        %v3994 = vand.u32 2147483647, %v3897
        %vm3995 = vcmp.eq.f32.partialorder %v3994, 8.507059e+37
        %v3996 = vand.u32 %v3897, 2147483648
        %v3997 = vor.u32 1.1754944e-38, %v3996
        %v3998 = vsel %vm3995, %v3997, %v3993
        %v3999 = vrcp.pop %v3900
        %v4000 = vmul.f32 %v3900, %v3999
        %v4001 = vsub.f32 1.0, %v4000
        %v4002 = vmul.f32 %v3999, %v4001
        %v4003 = vadd.f32 %v3999, %v4002
        %vm4004 = vweird.f32 %v3900
        %vm4005 = vweird.f32 %v3999
        %vm4006 = vmor %vm4004, %vm4005
        %v4007 = vsel %vm4006, %v3999, %v4003
        %v4008 = vand.u32 2147483647, %v3900
        %vm4009 = vcmp.eq.f32.partialorder %v4008, 8.507059e+37
        %v4010 = vand.u32 %v3900, 2147483648
        %v4011 = vor.u32 1.1754944e-38, %v4010
        %v4012 = vsel %vm4009, %v4011, %v4007
        %v4013 = vmul.f32 %v3862, %v3914
        %v4014 = vmul.f32 %v3864, %v3928
        %v4015 = vmul.f32 %v3866, %v3942
        %v4016 = vmul.f32 %v3868, %v3956
        %v4017 = vmul.f32 %v3870, %v3970
        %v4018 = vmul.f32 %v3872, %v3984
        %v4019 = vmul.f32 %v3874, %v3998
        %v4020 = vmul.f32 %v3876, %v4012
        %v4022 = vsel %vm2422, %v4013, 0
        %4024 = vmatpush.msra.mxu0 0.0
        %4025 = vmatpush.msra.mxu0 0.0
        %4026 = vmatpush.msra.mxu0 0.0
        %4027 = vmatpush.msra.mxu0 0.0
        %4028 = vmatpush.msra.mxu0 0.0
        %4029 = vmatpush.msra.mxu0 0.0
        %4030 = vmatpush.msra.mxu0 0.0
        %4031 = vmatpush.msra.mxu0 0.0
        %4032 = vmatpush.msra.mxu0 0.0
        %4033 = vmatpush.msra.mxu0 0.0
        %4034 = vmatpush.msra.mxu0 0.0
        %4035 = vmatpush.msra.mxu0 0.0
        %4036 = vmatpush.msra.mxu0 0.0
        %4037 = vmatpush.msra.mxu0 0.0
        %4038 = vmatpush.msra.mxu0 0.0
        %4039 = vmatpush.msra.mxu0 %v3613
        %4040 = vmatmul.f32.gmra.mxu0 %v4022
        %v4041 = vpop.f32.mrf.mxu0
        %v4042 = vadd.f32 0.0, %v4041
        %4043 = vdwg.mxu0
        %v4045 = vsel %vm2422, %v4014, 0
        %4047 = vmatpush.msra.mxu0 0.0
        %4048 = vmatpush.msra.mxu0 0.0
        %4049 = vmatpush.msra.mxu0 0.0
        %4050 = vmatpush.msra.mxu0 0.0
        %4051 = vmatpush.msra.mxu0 0.0
        %4052 = vmatpush.msra.mxu0 0.0
        %4053 = vmatpush.msra.mxu0 0.0
        %4054 = vmatpush.msra.mxu0 0.0
        %4055 = vmatpush.msra.mxu0 0.0
        %4056 = vmatpush.msra.mxu0 0.0
        %4057 = vmatpush.msra.mxu0 0.0
        %4058 = vmatpush.msra.mxu0 0.0
        %4059 = vmatpush.msra.mxu0 0.0
        %4060 = vmatpush.msra.mxu0 0.0
        %4061 = vmatpush.msra.mxu0 0.0
        %4062 = vmatpush.msra.mxu0 %v3614
        %4063 = vmatmul.f32.gmra.mxu0 %v4045
        %v4064 = vpop.f32.mrf.mxu0
        %v4065 = vadd.f32 0.0, %v4064
        %4066 = vdwg.mxu0
        %v4068 = vsel %vm2422, %v4015, 0
        %4070 = vmatpush.msra.mxu0 0.0
        %4071 = vmatpush.msra.mxu0 0.0
        %4072 = vmatpush.msra.mxu0 0.0
        %4073 = vmatpush.msra.mxu0 0.0
        %4074 = vmatpush.msra.mxu0 0.0
        %4075 = vmatpush.msra.mxu0 0.0
        %4076 = vmatpush.msra.mxu0 0.0
        %4077 = vmatpush.msra.mxu0 0.0
        %4078 = vmatpush.msra.mxu0 0.0
        %4079 = vmatpush.msra.mxu0 0.0
        %4080 = vmatpush.msra.mxu0 0.0
        %4081 = vmatpush.msra.mxu0 0.0
        %4082 = vmatpush.msra.mxu0 0.0
        %4083 = vmatpush.msra.mxu0 0.0
        %4084 = vmatpush.msra.mxu0 0.0
        %4085 = vmatpush.msra.mxu0 %v3615
        %4086 = vmatmul.f32.gmra.mxu0 %v4068
        %v4087 = vpop.f32.mrf.mxu0
        %v4088 = vadd.f32 0.0, %v4087
        %4089 = vdwg.mxu0
        %v4091 = vsel %vm2422, %v4016, 0
        %4093 = vmatpush.msra.mxu0 0.0
        %4094 = vmatpush.msra.mxu0 0.0
        %4095 = vmatpush.msra.mxu0 0.0
        %4096 = vmatpush.msra.mxu0 0.0
        %4097 = vmatpush.msra.mxu0 0.0
        %4098 = vmatpush.msra.mxu0 0.0
        %4099 = vmatpush.msra.mxu0 0.0
        %4100 = vmatpush.msra.mxu0 0.0
        %4101 = vmatpush.msra.mxu0 0.0
        %4102 = vmatpush.msra.mxu0 0.0
        %4103 = vmatpush.msra.mxu0 0.0
        %4104 = vmatpush.msra.mxu0 0.0
        %4105 = vmatpush.msra.mxu0 0.0
        %4106 = vmatpush.msra.mxu0 0.0
        %4107 = vmatpush.msra.mxu0 0.0
        %4108 = vmatpush.msra.mxu0 %v3616
        %4109 = vmatmul.f32.gmra.mxu0 %v4091
        %v4110 = vpop.f32.mrf.mxu0
        %v4111 = vadd.f32 0.0, %v4110
        %4112 = vdwg.mxu0
        %v4114 = vsel %vm2422, %v4017, 0
        %4116 = vmatpush.msra.mxu0 0.0
        %4117 = vmatpush.msra.mxu0 0.0
        %4118 = vmatpush.msra.mxu0 0.0
        %4119 = vmatpush.msra.mxu0 0.0
        %4120 = vmatpush.msra.mxu0 0.0
        %4121 = vmatpush.msra.mxu0 0.0
        %4122 = vmatpush.msra.mxu0 0.0
        %4123 = vmatpush.msra.mxu0 0.0
        %4124 = vmatpush.msra.mxu0 0.0
        %4125 = vmatpush.msra.mxu0 0.0
        %4126 = vmatpush.msra.mxu0 0.0
        %4127 = vmatpush.msra.mxu0 0.0
        %4128 = vmatpush.msra.mxu0 0.0
        %4129 = vmatpush.msra.mxu0 0.0
        %4130 = vmatpush.msra.mxu0 0.0
        %4131 = vmatpush.msra.mxu0 %v3617
        %4132 = vmatmul.f32.gmra.mxu0 %v4114
        %v4133 = vpop.f32.mrf.mxu0
        %v4134 = vadd.f32 0.0, %v4133
        %4135 = vdwg.mxu0
        %v4137 = vsel %vm2422, %v4018, 0
        %4139 = vmatpush.msra.mxu0 0.0
        %4140 = vmatpush.msra.mxu0 0.0
        %4141 = vmatpush.msra.mxu0 0.0
        %4142 = vmatpush.msra.mxu0 0.0
        %4143 = vmatpush.msra.mxu0 0.0
        %4144 = vmatpush.msra.mxu0 0.0
        %4145 = vmatpush.msra.mxu0 0.0
        %4146 = vmatpush.msra.mxu0 0.0
        %4147 = vmatpush.msra.mxu0 0.0
        %4148 = vmatpush.msra.mxu0 0.0
        %4149 = vmatpush.msra.mxu0 0.0
        %4150 = vmatpush.msra.mxu0 0.0
        %4151 = vmatpush.msra.mxu0 0.0
        %4152 = vmatpush.msra.mxu0 0.0
        %4153 = vmatpush.msra.mxu0 0.0
        %4154 = vmatpush.msra.mxu0 %v3618
        %4155 = vmatmul.f32.gmra.mxu0 %v4137
        %v4156 = vpop.f32.mrf.mxu0
        %v4157 = vadd.f32 0.0, %v4156
        %4158 = vdwg.mxu0
        %v4160 = vsel %vm2422, %v4019, 0
        %4162 = vmatpush.msra.mxu0 0.0
        %4163 = vmatpush.msra.mxu0 0.0
        %4164 = vmatpush.msra.mxu0 0.0
        %4165 = vmatpush.msra.mxu0 0.0
        %4166 = vmatpush.msra.mxu0 0.0
        %4167 = vmatpush.msra.mxu0 0.0
        %4168 = vmatpush.msra.mxu0 0.0
        %4169 = vmatpush.msra.mxu0 0.0
        %4170 = vmatpush.msra.mxu0 0.0
        %4171 = vmatpush.msra.mxu0 0.0
        %4172 = vmatpush.msra.mxu0 0.0
        %4173 = vmatpush.msra.mxu0 0.0
        %4174 = vmatpush.msra.mxu0 0.0
        %4175 = vmatpush.msra.mxu0 0.0
        %4176 = vmatpush.msra.mxu0 0.0
        %4177 = vmatpush.msra.mxu0 %v3619
        %4178 = vmatmul.f32.gmra.mxu0 %v4160
        %v4179 = vpop.f32.mrf.mxu0
        %v4180 = vadd.f32 0.0, %v4179
        %4181 = vdwg.mxu0
        %v4183 = vsel %vm2422, %v4020, 0
        %4185 = vmatpush.msra.mxu0 0.0
        %4186 = vmatpush.msra.mxu0 0.0
        %4187 = vmatpush.msra.mxu0 0.0
        %4188 = vmatpush.msra.mxu0 0.0
        %4189 = vmatpush.msra.mxu0 0.0
        %4190 = vmatpush.msra.mxu0 0.0
        %4191 = vmatpush.msra.mxu0 0.0
        %4192 = vmatpush.msra.mxu0 0.0
        %4193 = vmatpush.msra.mxu0 0.0
        %4194 = vmatpush.msra.mxu0 0.0
        %4195 = vmatpush.msra.mxu0 0.0
        %4196 = vmatpush.msra.mxu0 0.0
        %4197 = vmatpush.msra.mxu0 0.0
        %4198 = vmatpush.msra.mxu0 0.0
        %4199 = vmatpush.msra.mxu0 0.0
        %4200 = vmatpush.msra.mxu0 %v3620
        %4201 = vmatmul.f32.gmra.mxu0 %v4183
        %v4202 = vpop.f32.mrf.mxu0
        %v4203 = vadd.f32 0.0, %v4202
        %4204 = vdwg.mxu0
        %v4205 = vrot.slane %v4088, 4
        %v4206 = vsel %vm1714, %v4205, %v4042
        %v4207 = vrot.slane %v4042, 4
        %v4208 = vsel %vm1714, %v4088, %v4207
        %v4210 = vunpack.c.l.s4 1983009808
        %v4211 = vunpack.c.0.s8 %v4210
        %v4212 = vperm.slane %v4206, %v4211
        %v4214 = vunpack.c.l.s4 1983009808
        %v4215 = vunpack.c.0.s8 %v4214
        %v4216 = vperm.slane %v4208, %v4215
        %v4217 = vrot.slane %v4111, 4
        %v4218 = vsel %vm1714, %v4217, %v4065
        %v4219 = vrot.slane %v4065, 4
        %v4220 = vsel %vm1714, %v4111, %v4219
        %v4222 = vunpack.c.l.s4 1983009808
        %v4223 = vunpack.c.0.s8 %v4222
        %v4224 = vperm.slane %v4218, %v4223
        %v4226 = vunpack.c.l.s4 1983009808
        %v4227 = vunpack.c.0.s8 %v4226
        %v4228 = vperm.slane %v4220, %v4227
        %v4229 = vrot.slane %v4224, 4
        %v4230 = vsel %vm1714, %v4229, %v4212
        %v4231 = vrot.slane %v4212, 4
        %v4232 = vsel %vm1714, %v4224, %v4231
        %v4234 = vunpack.c.l.s4 1934713408
        %v4235 = vunpack.c.0.s8 %v4234
        %v4236 = vperm.slane %v4230, %v4235
        %v4238 = vunpack.c.l.s4 1934713408
        %v4239 = vunpack.c.0.s8 %v4238
        %v4240 = vperm.slane %v4232, %v4239
        %v4241 = vrot.slane %v4228, 4
        %v4242 = vsel %vm1714, %v4241, %v4216
        %v4243 = vrot.slane %v4216, 4
        %v4244 = vsel %vm1714, %v4228, %v4243
        %v4246 = vunpack.c.l.s4 1934713408
        %v4247 = vunpack.c.0.s8 %v4246
        %v4248 = vperm.slane %v4242, %v4247
        %v4250 = vunpack.c.l.s4 1934713408
        %v4251 = vunpack.c.0.s8 %v4250
        %v4252 = vperm.slane %v4244, %v4251
        %v4253 = vrot.slane %v4236, 4
        %v4254 = vsel %vm1714, 0.0, %v4253
        %v4255 = vrot.slane %v4240, 4
        %v4256 = vsel %vm1714, 0.0, %v4255
        %v4257 = vrot.slane %v4248, 4
        %v4258 = vsel %vm1714, 0.0, %v4257
        %v4259 = vrot.slane %v4252, 4
        %v4260 = vsel %vm1714, 0.0, %v4259
        %v4261 = vrot.slane %v4180, 4
        %v4262 = vsel %vm1714, %v4261, %v4134
        %v4263 = vrot.slane %v4134, 4
        %v4264 = vsel %vm1714, %v4180, %v4263
        %v4266 = vunpack.c.l.s4 1983009808
        %v4267 = vunpack.c.0.s8 %v4266
        %v4268 = vperm.slane %v4262, %v4267
        %v4270 = vunpack.c.l.s4 1983009808
        %v4271 = vunpack.c.0.s8 %v4270
        %v4272 = vperm.slane %v4264, %v4271
        %v4273 = vrot.slane %v4203, 4
        %v4274 = vsel %vm1714, %v4273, %v4157
        %v4275 = vrot.slane %v4157, 4
        %v4276 = vsel %vm1714, %v4203, %v4275
        %v4278 = vunpack.c.l.s4 1983009808
        %v4279 = vunpack.c.0.s8 %v4278
        %v4280 = vperm.slane %v4274, %v4279
        %v4282 = vunpack.c.l.s4 1983009808
        %v4283 = vunpack.c.0.s8 %v4282
        %v4284 = vperm.slane %v4276, %v4283
        %v4285 = vrot.slane %v4280, 4
        %v4286 = vsel %vm1714, %v4285, %v4268
        %v4287 = vrot.slane %v4268, 4
        %v4288 = vsel %vm1714, %v4280, %v4287
        %v4290 = vunpack.c.l.s4 1934713408
        %v4291 = vunpack.c.0.s8 %v4290
        %v4292 = vperm.slane %v4286, %v4291
        %v4294 = vunpack.c.l.s4 1934713408
        %v4295 = vunpack.c.0.s8 %v4294
        %v4296 = vperm.slane %v4288, %v4295
        %v4297 = vrot.slane %v4284, 4
        %v4298 = vsel %vm1714, %v4297, %v4272
        %v4299 = vrot.slane %v4272, 4
        %v4300 = vsel %vm1714, %v4284, %v4299
        %v4302 = vunpack.c.l.s4 1934713408
        %v4303 = vunpack.c.0.s8 %v4302
        %v4304 = vperm.slane %v4298, %v4303
        %v4306 = vunpack.c.l.s4 1934713408
        %v4307 = vunpack.c.0.s8 %v4306
        %v4308 = vperm.slane %v4300, %v4307
        %v4309 = vrot.slane %v4292, 4
        %v4310 = vsel %vm1714, 0.0, %v4309
        %v4311 = vrot.slane %v4296, 4
        %v4312 = vsel %vm1714, 0.0, %v4311
        %v4313 = vrot.slane %v4304, 4
        %v4314 = vsel %vm1714, 0.0, %v4313
        %v4315 = vrot.slane %v4308, 4
        %v4316 = vsel %vm1714, 0.0, %v4315
        %v4317 = vsel %vm1714, %v4255, %v4236
        %v4319 = vunpack.c.l.s4 1983009808
        %v4320 = vunpack.c.0.s8 %v4319
        %v4321 = vperm.slane %v4317, %v4320
        %v4322 = vrot.slane %v4256, 4
        %v4323 = vsel %vm1714, %v4322, %v4254
        %v4325 = vunpack.c.l.s4 1983009808
        %v4326 = vunpack.c.0.s8 %v4325
        %v4327 = vperm.slane %v4323, %v4326
        %v4328 = vsel %vm1714, %v4259, %v4248
        %v4330 = vunpack.c.l.s4 1983009808
        %v4331 = vunpack.c.0.s8 %v4330
        %v4332 = vperm.slane %v4328, %v4331
        %v4333 = vrot.slane %v4260, 4
        %v4334 = vsel %vm1714, %v4333, %v4258
        %v4336 = vunpack.c.l.s4 1983009808
        %v4337 = vunpack.c.0.s8 %v4336
        %v4338 = vperm.slane %v4334, %v4337
        %v4339 = vrot.slane %v4327, 4
        %v4340 = vsel %vm1714, %v4339, %v4321
        %v4341 = vrot.slane %v4321, 4
        %v4342 = vsel %vm1714, %v4327, %v4341
        %v4344 = vunpack.c.l.s4 1934713408
        %v4345 = vunpack.c.0.s8 %v4344
        %v4346 = vperm.slane %v4340, %v4345
        %v4348 = vunpack.c.l.s4 1934713408
        %v4349 = vunpack.c.0.s8 %v4348
        %v4350 = vperm.slane %v4342, %v4349
        %v4351 = vrot.slane %v4338, 4
        %v4352 = vsel %vm1714, %v4351, %v4332
        %v4353 = vrot.slane %v4332, 4
        %v4354 = vsel %vm1714, %v4338, %v4353
        %v4356 = vunpack.c.l.s4 1934713408
        %v4357 = vunpack.c.0.s8 %v4356
        %v4358 = vperm.slane %v4352, %v4357
        %v4360 = vunpack.c.l.s4 1934713408
        %v4361 = vunpack.c.0.s8 %v4360
        %v4362 = vperm.slane %v4354, %v4361
        %v4363 = vrot.slane %v4358, 4
        %v4364 = vsel %vm1714, %v4363, %v4346
        %v4365 = vrot.slane %v4346, 4
        %v4366 = vsel %vm1714, %v4358, %v4365
        %v4367 = vrot.slane %v4362, 4
        %v4368 = vsel %vm1714, %v4367, %v4350
        %v4369 = vrot.slane %v4350, 4
        %v4370 = vsel %vm1714, %v4362, %v4369
        %v4371 = vsel %vm1714, %v4311, %v4292
        %v4373 = vunpack.c.l.s4 1983009808
        %v4374 = vunpack.c.0.s8 %v4373
        %v4375 = vperm.slane %v4371, %v4374
        %v4376 = vrot.slane %v4312, 4
        %v4377 = vsel %vm1714, %v4376, %v4310
        %v4379 = vunpack.c.l.s4 1983009808
        %v4380 = vunpack.c.0.s8 %v4379
        %v4381 = vperm.slane %v4377, %v4380
        %v4382 = vsel %vm1714, %v4315, %v4304
        %v4384 = vunpack.c.l.s4 1983009808
        %v4385 = vunpack.c.0.s8 %v4384
        %v4386 = vperm.slane %v4382, %v4385
        %v4387 = vrot.slane %v4316, 4
        %v4388 = vsel %vm1714, %v4387, %v4314
        %v4390 = vunpack.c.l.s4 1983009808
        %v4391 = vunpack.c.0.s8 %v4390
        %v4392 = vperm.slane %v4388, %v4391
        %v4393 = vrot.slane %v4381, 4
        %v4394 = vsel %vm1714, %v4393, %v4375
        %v4395 = vrot.slane %v4375, 4
        %v4396 = vsel %vm1714, %v4381, %v4395
        %v4398 = vunpack.c.l.s4 1934713408
        %v4399 = vunpack.c.0.s8 %v4398
        %v4400 = vperm.slane %v4394, %v4399
        %v4402 = vunpack.c.l.s4 1934713408
        %v4403 = vunpack.c.0.s8 %v4402
        %v4404 = vperm.slane %v4396, %v4403
        %v4405 = vrot.slane %v4392, 4
        %v4406 = vsel %vm1714, %v4405, %v4386
        %v4407 = vrot.slane %v4386, 4
        %v4408 = vsel %vm1714, %v4392, %v4407
        %v4410 = vunpack.c.l.s4 1934713408
        %v4411 = vunpack.c.0.s8 %v4410
        %v4412 = vperm.slane %v4406, %v4411
        %v4414 = vunpack.c.l.s4 1934713408
        %v4415 = vunpack.c.0.s8 %v4414
        %v4416 = vperm.slane %v4408, %v4415
        %v4417 = vrot.slane %v4412, 4
        %v4418 = vsel %vm1714, %v4417, %v4400
        %v4419 = vrot.slane %v4400, 4
        %v4420 = vsel %vm1714, %v4412, %v4419
        %v4421 = vrot.slane %v4416, 4
        %v4422 = vsel %vm1714, %v4421, %v4404
        %v4423 = vrot.slane %v4404, 4
        %v4424 = vsel %vm1714, %v4416, %v4423
        %4427 = vrot.lane.b32.xlu0 %v4366, 8
        %v4428 = vpop.permute.xlu0 %4427
        %4429 = vrot.lane.b32.xlu0 %v4420, 8
        %v4430 = vpop.permute.xlu0 %4429
        %4435 = vrot.lane.b32.xlu0 %v4368, 16
        %v4436 = vpop.permute.xlu0 %4435
        %4437 = vrot.lane.b32.xlu0 %v4422, 16
        %v4438 = vpop.permute.xlu0 %4437
        %4443 = vrot.lane.b32.xlu0 %v4370, 24
        %v4444 = vpop.permute.xlu0 %4443
        %4445 = vrot.lane.b32.xlu0 %v4424, 24
        %v4446 = vpop.permute.xlu0 %4445
        %v4449 = vsel %vm2422, %v4364, %v4428
        %v4450 = vsel %vm2422, %v4418, %v4430
        %v4451 = vsel %vm3253, %v4449, %v4436
        %v4452 = vsel %vm3253, %v4450, %v4438
        %v4453 = vsel %vm3256, %v4451, %v4444
        %v4454 = vsel %vm3256, %v4452, %v4446
        %v4455 = vld [vmem:[%s1055] sm:$0xff]
        %v4456 = vld [vmem:[%s1055 + $0x8] sm:$0xff]
        %v4457 = vld [vmem:[%s1055 + $0x10] sm:$0xff]
        %v4458 = vld [vmem:[%s1055 + $0x18] sm:$0xff]
        %v4459 = vld [vmem:[%s1058] sm:$0x1]
        %v4461 = vperm.slane %v4459, 0
        %v4464 = vsel %vm1663, %v4453, 0
        %v4467 = vsel %vm1663, %v4454, 0
        %4469 = vmatpush.msra.mxu0 0.0
        %4470 = vmatpush.msra.mxu0 0.0
        %4471 = vmatpush.msra.mxu0 0.0
        %4472 = vmatpush.msra.mxu0 0.0
        %4473 = vmatpush.msra.mxu0 0.0
        %4474 = vmatpush.msra.mxu0 0.0
        %4475 = vmatpush.msra.mxu0 0.0
        %4476 = vmatpush.msra.mxu0 0.0
        %4477 = vmatpush.msra.mxu0 0.0
        %4478 = vmatpush.msra.mxu0 0.0
        %4479 = vmatpush.msra.mxu0 0.0
        %4480 = vmatpush.msra.mxu0 0.0
        %4481 = vmatpush.msra.mxu0 %v4458
        %4482 = vmatpush.msra.mxu0 %v4457
        %4483 = vmatpush.msra.mxu0 %v4456
        %4484 = vmatpush.msra.mxu0 %v4455
        %4485 = vmatmul.f32.gmra.mxu0 %v4464
        %v4486 = vpop.f32.mrf.mxu0
        %v4487 = vadd.f32 %v4461, %v4486
        %4488 = vmatmul.f32.gmra.mxu0 %v4467
        %v4489 = vpop.f32.mrf.mxu0
        %v4490 = vadd.f32 %v4461, %v4489
        %4491 = vdwg.mxu0
        %v4492 = vmax.f32 %v4487, 0.0
        %v4493 = vmax.f32 %v4490, 0.0
        %v4494 = vadd.f32 %v3363, %v4492
        %v4495 = vadd.f32 %v3364, %v4493
        %v4496 = vmax.f32 %v4494, 0.0
        %v4497 = vmax.f32 %v4495, 0.0
        %v4498 = vld [vmem:[%s1061] sm:$0x1]
        %v4499 = vld [vmem:[%s879] sm:$0x1]
        %v4500 = vsel %vm1663, %v4496, 0.0
        %4501 = vadd.xlane.f32.xlu0 %v4500
        %v4502 = vpop.xlane.xlu0 %4501
        %v4503 = vsel %vm1663, %v4497, 0.0
        %4504 = vadd.xlane.f32.xlu0 %v4503
        %v4505 = vpop.xlane.xlu0 %4504
        %v4506 = vmul.f32 %v4502, %v3316
        %v4507 = vmul.f32 %v4505, %v3316
        %v4508 = vsub.f32 %v4496, %v4506
        %v4509 = vsub.f32 %v4497, %v4507
        %v4510 = vmul.f32 %v4508, %v4508
        %v4511 = vmul.f32 %v4509, %v4509
        %v4512 = vsel %vm1663, %v4510, 0.0
        %4513 = vadd.xlane.f32.xlu0 %v4512
        %v4514 = vpop.xlane.xlu0 %4513
        %v4515 = vsel %vm1663, %v4511, 0.0
        %4516 = vadd.xlane.f32.xlu0 %v4515
        %v4517 = vpop.xlane.xlu0 %4516
        %v4518 = vmul.f32 %v4514, %v3316
        %v4519 = vmul.f32 %v4517, %v3316
        %v4520 = vadd.f32 %v4518, 1e-05
        %v4521 = vadd.f32 %v4519, 1e-05
        %v4522 = vrsqrt.pop %v4520
        %v4523 = vmul.f32 %v4522, %v4520
        %v4524 = vmul.f32 %v4523, %v4522
        %v4525 = vmul.f32 0.5, %v4524
        %v4526 = vsub.f32 1.5, %v4525
        %v4527 = vmul.f32 %v4522, %v4526
        %vm4528 = vweird.f32 %v4520
        %vm4529 = vweird.f32 %v4522
        %vm4530 = vmor %vm4528, %vm4529
        %v4531 = vsel %vm4530, %v4522, %v4527
        %v4532 = vrsqrt.pop %v4521
        %v4533 = vmul.f32 %v4532, %v4521
        %v4534 = vmul.f32 %v4533, %v4532
        %v4535 = vmul.f32 0.5, %v4534
        %v4536 = vsub.f32 1.5, %v4535
        %v4537 = vmul.f32 %v4532, %v4536
        %vm4538 = vweird.f32 %v4521
        %vm4539 = vweird.f32 %v4532
        %vm4540 = vmor %vm4538, %vm4539
        %v4541 = vsel %vm4540, %v4532, %v4537
        %v4542 = vmul.f32 %v4508, %v4531
        %v4543 = vmul.f32 %v4509, %v4541
        %v4545 = vperm.slane %v4498, 0
        %v4547 = vmul.f32 %v4542, %v4545
        %v4548 = vmul.f32 %v4543, %v4545
        %v4550 = vperm.slane %v4499, 0
        %v4552 = vadd.f32 %v4547, %v4550
        %v4553 = vadd.f32 %v4548, %v4550
        %v4554 = vld [vmem:[%s1066] sm:$0xff]
        %v4555 = vld [vmem:[%s1066 + $0x8] sm:$0xff]
        %v4556 = vld [vmem:[%s1066 + $0x10] sm:$0xff]
        %v4557 = vld [vmem:[%s1066 + $0x18] sm:$0xff]
        %v4558 = vld [vmem:[%s1069] sm:$0x1]
        %v4560 = vperm.slane %v4558, 0
        %v4563 = vsel %vm1663, %v4552, 0
        %v4566 = vsel %vm1663, %v4553, 0
        %4568 = vmatpush.msra.mxu0 0.0
        %4569 = vmatpush.msra.mxu0 0.0
        %4570 = vmatpush.msra.mxu0 0.0
        %4571 = vmatpush.msra.mxu0 0.0
        %4572 = vmatpush.msra.mxu0 0.0
        %4573 = vmatpush.msra.mxu0 0.0
        %4574 = vmatpush.msra.mxu0 0.0
        %4575 = vmatpush.msra.mxu0 0.0
        %4576 = vmatpush.msra.mxu0 0.0
        %4577 = vmatpush.msra.mxu0 0.0
        %4578 = vmatpush.msra.mxu0 0.0
        %4579 = vmatpush.msra.mxu0 0.0
        %4580 = vmatpush.msra.mxu0 %v4557
        %4581 = vmatpush.msra.mxu0 %v4556
        %4582 = vmatpush.msra.mxu0 %v4555
        %4583 = vmatpush.msra.mxu0 %v4554
        %4584 = vmatmul.f32.gmra.mxu0 %v4563
        %v4585 = vpop.f32.mrf.mxu0
        %v4586 = vadd.f32 %v4560, %v4585
        %4587 = vmatmul.f32.gmra.mxu0 %v4566
        %v4588 = vpop.f32.mrf.mxu0
        %v4589 = vadd.f32 %v4560, %v4588
        %4590 = vdwg.mxu0
        %v4591 = vmax.f32 %v4586, 0.0
        %v4592 = vmax.f32 %v4589, 0.0
        %v4593 = vld [vmem:[%s1074] sm:$0xff]
        %v4594 = vld [vmem:[%s1074 + $0x8] sm:$0xff]
        %v4595 = vld [vmem:[%s1074 + $0x10] sm:$0xff]
        %v4596 = vld [vmem:[%s1074 + $0x18] sm:$0xff]
        %v4597 = vld [vmem:[%s1074 + $0x20] sm:$0xff]
        %v4598 = vld [vmem:[%s1074 + $0x28] sm:$0xff]
        %v4599 = vld [vmem:[%s1074 + $0x30] sm:$0xff]
        %v4600 = vld [vmem:[%s1074 + $0x38] sm:$0xff]
        %v4601 = vld [vmem:[%s1074 + $0x40] sm:$0xff]
        %v4602 = vld [vmem:[%s1074 + $0x48] sm:$0xff]
        %v4603 = vld [vmem:[%s1074 + $0x50] sm:$0xff]
        %v4604 = vld [vmem:[%s1074 + $0x58] sm:$0xff]
        %v4605 = vld [vmem:[%s1074 + $0x60] sm:$0xff]
        %v4606 = vld [vmem:[%s1074 + $0x68] sm:$0xff]
        %v4607 = vld [vmem:[%s1074 + $0x70] sm:$0xff]
        %v4608 = vld [vmem:[%s1074 + $0x78] sm:$0xff]
        %v4609 = vld [vmem:[%s1077] sm:$0x1]
        %v4611 = vperm.slane %v4609, 0
        %4613 = vmatpush.msra.mxu0 %v4608
        %4614 = vmatpush.msra.mxu0 %v4607
        %4615 = vmatpush.msra.mxu0 %v4606
        %4616 = vmatpush.msra.mxu0 %v4605
        %4617 = vmatpush.msra.mxu0 %v4604
        %4618 = vmatpush.msra.mxu0 %v4603
        %4619 = vmatpush.msra.mxu0 %v4602
        %4620 = vmatpush.msra.mxu0 %v4601
        %4621 = vmatpush.msra.mxu0 %v4600
        %4622 = vmatpush.msra.mxu0 %v4599
        %4623 = vmatpush.msra.mxu0 %v4598
        %4624 = vmatpush.msra.mxu0 %v4597
        %4625 = vmatpush.msra.mxu0 %v4596
        %4626 = vmatpush.msra.mxu0 %v4595
        %4627 = vmatpush.msra.mxu0 %v4594
        %4628 = vmatpush.msra.mxu0 %v4593
        %4629 = vmatmul.f32.gmra.mxu0 %v4591
        %v4630 = vpop.f32.mrf.mxu0
        %v4631 = vadd.f32 %v4611, %v4630
        %4632 = vmatmul.f32.gmra.mxu0 %v4592
        %v4633 = vpop.f32.mrf.mxu0
        %v4634 = vadd.f32 %v4611, %v4633
        %4635 = vdwg.mxu0
        %v4636 = vadd.f32 %v4552, %v4631
        %v4637 = vadd.f32 %v4553, %v4634
        %v4638 = vmax.f32 %v4636, 0.0
        %v4639 = vmax.f32 %v4637, 0.0
        %v4640 = vld [vmem:[%s888] sm:$0x1]
        %v4641 = vld [vmem:[%s1080] sm:$0x1]
        %v4642 = vsel %vm1663, %v4638, 0.0
        %4643 = vadd.xlane.f32.xlu0 %v4642
        %v4644 = vpop.xlane.xlu0 %4643
        %v4645 = vsel %vm1663, %v4639, 0.0
        %4646 = vadd.xlane.f32.xlu0 %v4645
        %v4647 = vpop.xlane.xlu0 %4646
        %v4648 = vmul.f32 %v4644, %v3316
        %v4649 = vmul.f32 %v4647, %v3316
        %v4650 = vsub.f32 %v4638, %v4648
        %v4651 = vsub.f32 %v4639, %v4649
        %v4652 = vmul.f32 %v4650, %v4650
        %v4653 = vmul.f32 %v4651, %v4651
        %v4654 = vsel %vm1663, %v4652, 0.0
        %4655 = vadd.xlane.f32.xlu0 %v4654
        %v4656 = vpop.xlane.xlu0 %4655
        %v4657 = vsel %vm1663, %v4653, 0.0
        %4658 = vadd.xlane.f32.xlu0 %v4657
        %v4659 = vpop.xlane.xlu0 %4658
        %v4660 = vmul.f32 %v4656, %v3316
        %v4661 = vmul.f32 %v4659, %v3316
        %v4662 = vadd.f32 %v4660, 1e-05
        %v4663 = vadd.f32 %v4661, 1e-05
        %v4664 = vrsqrt.pop %v4662
        %v4665 = vmul.f32 %v4664, %v4662
        %v4666 = vmul.f32 %v4665, %v4664
        %v4667 = vmul.f32 0.5, %v4666
        %v4668 = vsub.f32 1.5, %v4667
        %v4669 = vmul.f32 %v4664, %v4668
        %vm4670 = vweird.f32 %v4662
        %vm4671 = vweird.f32 %v4664
        %vm4672 = vmor %vm4670, %vm4671
        %v4673 = vsel %vm4672, %v4664, %v4669
        %v4674 = vrsqrt.pop %v4663
        %v4675 = vmul.f32 %v4674, %v4663
        %v4676 = vmul.f32 %v4675, %v4674
        %v4677 = vmul.f32 0.5, %v4676
        %v4678 = vsub.f32 1.5, %v4677
        %v4679 = vmul.f32 %v4674, %v4678
        %vm4680 = vweird.f32 %v4663
        %vm4681 = vweird.f32 %v4674
        %vm4682 = vmor %vm4680, %vm4681
        %v4683 = vsel %vm4682, %v4674, %v4679
        %v4684 = vmul.f32 %v4650, %v4673
        %v4685 = vmul.f32 %v4651, %v4683
        %v4687 = vperm.slane %v4640, 0
        %v4689 = vmul.f32 %v4684, %v4687
        %v4690 = vmul.f32 %v4685, %v4687
        %v4692 = vperm.slane %v4641, 0
        %v4694 = vadd.f32 %v4689, %v4692
        %v4695 = vadd.f32 %v4690, %v4692
        %4696 = vst.msk [vmem:[#allocation2] sm:$0xff] %vm1663, %v4694
        %4697 = vst.msk [vmem:[#allocation2 + $0x8] sm:$0xff] %vm1663, %v4695
        %p4698 = scmp.eq.s32.totalorder %s50, 1
        // Predicated region
        $region133: #{tpu_custom_call.1} parent=103 // pred_check
          %p4699 = pneg %p4698
        $region134: #{tpu_custom_call.1} parent=103 // pred_check_branch
          %4701 = sbr.rel (%p4699) target = $region136
        $region135: #{tpu_custom_call.1} parent=103 // pred_region
          %4702 = vst.msk [vmem:[%s1018] sm:$0xff] %vm1663, %v4694
          %4703 = vst.msk [vmem:[%s1018 + $0x8] sm:$0xff] %vm1663, %v4695
        $region136: #{tpu_custom_call.1} parent=103 // pred_fallthru
          _
        %s4704 = sand.u32 %s601, 1
        %s4705 = scalar_lea.sflag [#allocation7], %s4704
        %s4706 = sand.u32 %s601, 1
        %s4707 = smul.addr %s4706, 16
        %s4708 = scalar_lea.vmem [#allocation16], %s4707
        // Predicated region
        $region137: #{tpu_custom_call.1} parent=103 // pred_check
          %p4709 = pneg %p611
        $region138: #{tpu_custom_call.1} parent=103 // pred_check_branch
          %4711 = sbr.rel (%p4709) target = $region140
        $region139: #{tpu_custom_call.1} parent=103 // pred_region
          %s4712 = smul.u32 2, %s49
          %4714 = vsyncadd %s4705, 0
          %s4715 = smul.addr %s4712, 8
          %s4716 = scalar_lea.hbm %s21, %s4715
          %s4717 = sshll.u32 %s4708, 4
          %s4718 = int_to_ptr.vmem [resolvable:$true] %s4717
          %s4719 = sshll.u32 %s4716, 4
          %s4720 = int_to_ptr.hbm [resolvable:$true] %s4719
          %4725 = dma.vmem_to_hbm [thread:$0]  %s4718, 256, %s4720, %s4705, 128, 128, 8
        $region140: #{tpu_custom_call.1} parent=103 // pred_fallthru
          _
      $region104: #{tpu_custom_call.1} parent=5 // pred_fallthru
        _
      %p4726 = scmp.le.s32.totalorder 2, %s40
      // Predicated region
      $region141: #{tpu_custom_call.1} parent=5 // pred_check
        %p4727 = pneg %p4726
      $region142: #{tpu_custom_call.1} parent=5 // pred_check_branch
        %4729 = sbr.rel (%p4727) target = $region144
      $region143: #{tpu_custom_call.1} parent=5 // pred_region
        %s4730 = ssub.s32 %s40, 2
        // Predicated region
        $region145: #{tpu_custom_call.1} parent=143 // pred_check
          %p4731 = pneg %p617
        $region146: #{tpu_custom_call.1} parent=143 // pred_check_branch
          %4733 = sbr.rel (%p4731) target = $region148
        $region147: #{tpu_custom_call.1} parent=143 // pred_region
          %s4734 = sand.u32 %s602, 1
          %s4735 = scalar_lea.sflag [#allocation7], %s4734
          %s4736 = sand.u32 %s602, 1
          %s4737 = smul.addr %s4736, 16
          %s4738 = scalar_lea.vmem [#allocation16], %s4737
          %4740 = dma.done %s4735, 256
        $region148: #{tpu_custom_call.1} parent=143 // pred_fallthru
          _
      $region144: #{tpu_custom_call.1} parent=5 // pred_fallthru
        _
    $region6: #{tpu_custom_call.1} parent=1 // loop_footer
      %s44 = sadd.s32 1, %s40
    $region7: #{tpu_custom_call.1} parent=1 // loop_footer_branch
      %39 = sbr.rel target = $region3
    $region8: #{tpu_custom_call.1} parent=1 // loop_exit
      _
    %4741 = vsyncpa [#allocation6], 1
    %s4742 = scalar_lea.sflag [#allocation6], 1
    %4743 = vsyncpa %s4742, 1
    %4744 = vsyncpa [#allocation9], 1
    %4745 = vsyncpa [#allocation12], 1
    %s4746 = scalar_lea.sflag [#allocation12], 1
    %4747 = vsyncpa %s4746, 1
    %4748 = vsyncpa [#allocation15], 1
    %s4749 = scalar_lea.sflag [#allocation15], 1
    %4750 = vsyncpa %s4749, 1
    %4751 = vsyncpa [#allocation7], 1
    %s4752 = scalar_lea.sflag [#allocation7], 1
    %4753 = vsyncpa %s4752, 1

</llo_original>
